<compile_context>
chip_gen: v7x
topology: tpu7x:2x2x1
jax: 0.10.0
libtpu: 0.0.40
codegen_flags: <defaults>
</compile_context>

<pallas_src>
import functools

import jax
import jax.numpy as jnp
from jax import lax
from jax.experimental import pallas as pl
from jax.experimental.pallas import tpu as pltpu

# Safe on v5e/v6e (128 MiB physical) and v7x (64 MiB per TensorCore).
_VMEM_LIMIT = 48 * 1024 * 1024


# ------------------------------ Pallas kernel ------------------------------- #

def _basic_block_kernel(*refs, stride, ho, wo, has_downsample):
    """One image: relu(bn2(conv2(relu(bn1(conv1(x))))) [+ bn_d(conv_d(x))]).

    Both 3x3 convs are 9 shifted sub-matmuls (fused im2col) with f32 MXU
    accumulation; the intermediate activation stays in VMEM scratch.
    """
    if has_downsample:
        x_ref, w1_ref, b1_ref, w2_ref, b2_ref, wd_ref, o_ref, y_ref = refs
    else:
        x_ref, w1_ref, b1_ref, w2_ref, b2_ref, o_ref, y_ref = refs
        wd_ref = None
    s = stride
    cin = x_ref.shape[-1]
    p = w1_ref.shape[-1]

    # ---- conv1 + folded BN1 + ReLU ------------------------------------------
    acc1 = jnp.zeros((ho * wo, p), jnp.float32)
    for kh in range(3):
        for kw in range(3):
            ph, pw = kh % s, kw % s            # stride phase (wrapper pre-split)
            r0, c0 = kh // s, kw // s          # contiguous offset inside phase
            lhs = x_ref[ph * s + pw, r0:r0 + ho, c0:c0 + wo, :].reshape(ho * wo, cin)
            acc1 += jnp.dot(lhs, w1_ref[kh * 3 + kw],
                            preferred_element_type=jnp.float32)
    y = jnp.maximum(acc1 + b1_ref[...], 0.0).astype(jnp.bfloat16)

    # Stage y in VMEM with a zero halo for conv2; it never touches HBM.
    y_ref[...] = jnp.zeros_like(y_ref)
    y_ref[1:ho + 1, 1:wo + 1, :] = y.reshape(ho, wo, p)

    # ---- conv2 + folded BN2 (+ downsample 1x1 conv) + ReLU -------------------
    acc2 = jnp.zeros((ho * wo, p), jnp.float32)
    for kh in range(3):
        for kw in range(3):
            lhs = y_ref[kh:kh + ho, kw:kw + wo, :].reshape(ho * wo, p)
            acc2 += jnp.dot(lhs, w2_ref[kh * 3 + kw],
                            preferred_element_type=jnp.float32)

    if has_downsample:
        ph = 1 % s
        r0 = 1 // s
        xd = x_ref[ph * s + ph, r0:r0 + ho, r0:r0 + wo, :].reshape(ho * wo, cin)
        acc2 += jnp.dot(xd, wd_ref[...], preferred_element_type=jnp.float32)

    out = jnp.maximum(acc2 + b2_ref[...], 0.0)
    o_ref[0] = out.reshape(ho, wo, p).astype(o_ref.dtype)


# -------------------------------- JAX glue ---------------------------------- #

def _phase_split(x, stride, ho, wo):
    """(N,H,W,C) -> (N*s*s, hph, wph, C).

    Spatially pads by 1 and splits into stride phases (space-to-batch) so that
    every 3x3 tap becomes a contiguous static slice inside the kernel.  Total
    bytes are unchanged (unlike im2col's 9x inflation).  For stride=1 this is
    just the padded image.
    """
    n, h, w, c = x.shape
    s = stride
    hp, wp = h + 2, w + 2
    hph = max(-(-hp // s), 2 // s + ho)
    wph = max(-(-wp // s), 2 // s + wo)
    xp = jnp.pad(x, ((0, 0), (1, s * hph - hp + 1), (1, s * wph - wp + 1), (0, 0)))
    xp = xp.reshape(n, hph, s, wph, s, c)
    xp = jnp.transpose(xp, (0, 2, 4, 1, 3, 5))      # (N, ph, pw, hph, wph, C)
    return xp.reshape(n * s * s, hph, wph, c), hph, wph


def _fold_bn(gamma, beta, mean, var, eps=1e-5):
    scale = gamma / jnp.sqrt(var + eps)
    return scale, beta - mean * scale


def basic_block_forward(x_nchw, params, stride):
    n, cin, h, w = x_nchw.shape
    s = stride
    w1 = params["conv1_w"]                         # (planes, cin, 3, 3) OIHW
    planes = w1.shape[0]
    ho = (h + 2 - 3) // s + 1
    wo = (w + 2 - 3) // s + 1
    has_downsample = (s != 1) or (cin != planes)

    # bf16 NHWC activations; stride-phase split for contiguous in-kernel taps.
    x = jnp.transpose(x_nchw, (0, 2, 3, 1)).astype(jnp.bfloat16)
    x_ph, hph, wph = _phase_split(x, s, ho, wo)

    # Fold BN scales into the conv weights (fold in f32, then cast to bf16).
    s1, b1 = _fold_bn(params["bn1_gamma"], params["bn1_beta"],
                      params["bn1_mean"], params["bn1_var"])
    s2, b2 = _fold_bn(params["bn2_gamma"], params["bn2_beta"],
                      params["bn2_mean"], params["bn2_var"])
    w1m = (jnp.transpose(w1, (2, 3, 1, 0)) * s1).reshape(9, cin, planes)
    w2m = (jnp.transpose(params["conv2_w"], (2, 3, 1, 0)) * s2).reshape(
        9, planes, planes)
    w1m = w1m.astype(jnp.bfloat16)
    w2m = w2m.astype(jnp.bfloat16)
    b1m = b1.reshape(1, planes).astype(jnp.float32)

    wdm = None
    if has_downsample:
        sd, bd = _fold_bn(params["down_bn_gamma"], params["down_bn_beta"],
                          params["down_bn_mean"], params["down_bn_var"])
        wdm = (jnp.transpose(params["down_conv_w"], (2, 3, 1, 0)) * sd)
        wdm = wdm.reshape(cin, planes).astype(jnp.bfloat16)
        b2m = (b2 + bd).reshape(1, planes).astype(jnp.float32)   # bias added once
    else:
        b2m = b2.reshape(1, planes).astype(jnp.float32)

    inputs = [x_ph, w1m, b1m, w2m, b2m]
    in_specs = [
        pl.BlockSpec((s * s, hph, wph, cin), lambda i: (i, 0, 0, 0)),  # per image
        pl.BlockSpec((9, cin, planes), lambda i: (0, 0, 0)),           # resident
        pl.BlockSpec((1, planes), lambda i: (0, 0)),                   # resident
        pl.BlockSpec((9, planes, planes), lambda i: (0, 0, 0)),        # resident
        pl.BlockSpec((1, planes), lambda i: (0, 0)),                   # resident
    ]
    if has_downsample:
        inputs.append(wdm)
        in_specs.append(pl.BlockSpec((cin, planes), lambda i: (0, 0)))  # resident

    flops = 2 * n * ho * wo * (9 * cin * planes + 9 * planes * planes
                               + (cin * planes if has_downsample else 0))
    bytes_accessed = (x_ph.size * 2 + w1m.size * 2 + w2m.size * 2
                      + (wdm.size * 2 if has_downsample else 0)
                      + (b1m.size + b2m.size) * 4
                      + n * ho * wo * planes * 4)
    cost = pl.CostEstimate(flops=flops, transcendentals=0,
                           bytes_accessed=bytes_accessed)

    kernel = functools.partial(_basic_block_kernel, stride=s, ho=ho, wo=wo,
                               has_downsample=has_downsample)
    out = pl.pallas_call(
        kernel,
        out_shape=jax.ShapeDtypeStruct((n, ho, wo, planes), jnp.float32),
        grid_spec=pltpu.PrefetchScalarGridSpec(
            num_scalar_prefetch=0,
            grid=(n,),
            in_specs=in_specs,
            out_specs=pl.BlockSpec((1, ho, wo, planes), lambda i: (i, 0, 0, 0)),
            scratch_shapes=[pltpu.VMEM((ho + 2, wo + 2, planes), jnp.bfloat16)],
        ),
        compiler_params=pltpu.CompilerParams(
            dimension_semantics=("parallel",),     # batch split across TCs on v7x
            vmem_limit_bytes=_VMEM_LIMIT,
        ),
        cost_estimate=cost,
    )(*inputs)

    return jnp.transpose(out, (0, 3, 1, 2))        # NHWC -> NCHW


# ------------------------ deterministic parameter init ---------------------- #

def init_params(key, inplanes, planes, stride):
    ks = jax.random.split(key, 6)

    def bn_params(k, c):
        k1, k2, k3, k4 = jax.random.split(k, 4)
        return (jax.random.uniform(k1, (c,), jnp.float32, 0.5, 1.5),
                0.1 * jax.random.normal(k2, (c,), jnp.float32),
                0.1 * jax.random.normal(k3, (c,), jnp.float32),
                jax.random.uniform(k4, (c,), jnp.float32, 0.5, 1.5))

    p = {
        "conv1_w": 0.1 * jax.random.normal(ks[0], (planes, inplanes, 3, 3), jnp.float32),
        "conv2_w": 0.1 * jax.random.normal(ks[1], (planes, planes, 3, 3), jnp.float32),
    }
    p["bn1_gamma"], p["bn1_beta"], p["bn1_mean"], p["bn1_var"] = bn_params(ks[2], planes)
    p["bn2_gamma"], p["bn2_beta"], p["bn2_mean"], p["bn2_var"] = bn_params(ks[3], planes)
    if stride != 1 or inplanes != planes:
        p["down_conv_w"] = 0.1 * jax.random.normal(
            ks[4], (planes, inplanes, 1, 1), jnp.float32)
        (p["down_bn_gamma"], p["down_bn_beta"],
         p["down_bn_mean"], p["down_bn_var"]) = bn_params(ks[5], planes)
    return p


# ------------------------------ pure-JAX reference -------------------------- #

def ref_forward(x, params, stride):
    dn = ("NCHW", "OIHW", "NCHW")

    def bn(z, g, b, m, v, eps=1e-5):
        rs = lambda a: a.reshape(1, -1, 1, 1)
        return (z - rs(m)) / jnp.sqrt(rs(v) + eps) * rs(g) + rs(b)

    out = lax.conv_general_dilated(x, params["conv1_w"], (stride, stride),
                                   ((1, 1), (1, 1)), dimension_numbers=dn)
    out = jnp.maximum(bn(out, params["bn1_gamma"], params["bn1_beta"],
                         params["bn1_mean"], params["bn1_var"]), 0.0)
    out = lax.conv_general_dilated(out, params["conv2_w"], (1, 1),
                                   ((1, 1), (1, 1)), dimension_numbers=dn)
    out = bn(out, params["bn2_gamma"], params["bn2_beta"],
             params["bn2_mean"], params["bn2_var"])
    if "down_conv_w" in params:
        ds = lax.conv_general_dilated(x, params["down_conv_w"], (stride, stride),
                                      ((0, 0), (0, 0)), dimension_numbers=dn)
        ds = bn(ds, params["down_bn_gamma"], params["down_bn_beta"],
                params["down_bn_mean"], params["down_bn_var"])
        out = out + ds
    # NOTE: matches the provided PyTorch module exactly -- no identity add when
    # downsample is None in this particular implementation.
    return jnp.maximum(out, 0.0)


# ----------------------------------- main ------------------------------------ #

if __name__ == "__main__":
    key = jax.random.PRNGKey(0)
    kx1, kp1, kx2, kp2 = jax.random.split(key, 4)

    # Tolerances sized for bf16 activations/weights (f32 MXU accumulation).
    ATOL, RTOL = 1e-1, 5e-2

    # ---- downsample path: stride=2, inplanes != planes ----------------------
    inplanes, planes, stride = 4, 8, 2
    x1 = jax.random.normal(kx1, (2, inplanes, 16, 16), jnp.float32)   # NCHW
    params1 = init_params(kp1, inplanes, planes, stride)
    fwd1 = jax.jit(functools.partial(basic_block_forward, stride=stride))
    out1 = jax.block_until_ready(fwd1(x1, params1))
    ref1 = ref_forward(x1, params1, stride)
    assert out1.shape == (2, planes, 8, 8), out1.shape
    assert jnp.allclose(out1, ref1, atol=ATOL, rtol=RTOL), \
        float(jnp.max(jnp.abs(out1 - ref1)))

    # ---- identity path: stride=1, inplanes == planes (no downsample) --------
    inplanes2, planes2, stride2 = 8, 8, 1
    x2 = jax.random.normal(kx2, (2, inplanes2, 16, 16), jnp.float32)
    params2 = init_params(kp2, inplanes2, planes2, stride2)
    fwd2 = jax.jit(functools.partial(basic_block_forward, stride=stride2))
    out2 = jax.block_until_ready(fwd2(x2, params2))
    ref2 = ref_forward(x2, params2, stride2)
    assert out2.shape == (2, planes2, 16, 16), out2.shape
    assert jnp.allclose(out2, ref2, atol=ATOL, rtol=RTOL), \
        float(jnp.max(jnp.abs(out2 - ref2)))

    print("KERNEL_OK")
</pallas_src>

<mosaic_0001>
module attributes {stable_mosaic.version = 11 : i64} {
  func.func @_basic_block_kernel(%arg0: i32, %arg1: memref<4x9x9x4xbf16, #tpu.memory_space<vmem>>, %arg2: memref<9x4x8xbf16, #tpu.memory_space<vmem>>, %arg3: memref<1x8xf32, #tpu.memory_space<vmem>>, %arg4: memref<9x8x8xbf16, #tpu.memory_space<vmem>>, %arg5: memref<1x8xf32, #tpu.memory_space<vmem>>, %arg6: memref<4x8xbf16, #tpu.memory_space<vmem>>, %arg7: memref<1x8x8x8xf32, #tpu.memory_space<vmem>>, %arg8: memref<10x10x8xbf16, #tpu.memory_space<vmem>>) attributes {dimension_semantics = [#tpu.dimension_semantics<parallel>], iteration_bounds = array<i64: 2>, scalar_prefetch = 0 : i64, scratch_operands = 1 : i64, tpu.core_type = #tpu.core_type<tc>, window_params = [{transform_indices = @transform_0, window_bounds = array<i64: 4, 9, 9, 4>}, {pipeline_mode = #tpu.pipeline_mode<synchronous>, transform_indices = @transform_1, window_bounds = array<i64: 9, 4, 8>}, {pipeline_mode = #tpu.pipeline_mode<synchronous>, transform_indices = @transform_2, window_bounds = array<i64: 1, 8>}, {pipeline_mode = #tpu.pipeline_mode<synchronous>, transform_indices = @transform_3, window_bounds = array<i64: 9, 8, 8>}, {pipeline_mode = #tpu.pipeline_mode<synchronous>, transform_indices = @transform_4, window_bounds = array<i64: 1, 8>}, {pipeline_mode = #tpu.pipeline_mode<synchronous>, transform_indices = @transform_5, window_bounds = array<i64: 4, 8>}, {transform_indices = @transform_6, window_bounds = array<i64: 1, 8, 8, 8>}]} {
    %cst = arith.constant 0.000000e+00 : f32
    %0 = vector.broadcast %cst : f32 to vector<64x8xf32>
    %c0 = arith.constant 0 : index
    %c0_0 = arith.constant 0 : index
    %c0_1 = arith.constant 0 : index
    %c0_2 = arith.constant 0 : index
    %1 = vector.load %arg1[%c0, %c0_0, %c0_1, %c0_2] : memref<4x9x9x4xbf16, #tpu.memory_space<vmem>>, vector<1x8x8x4xbf16>
    %2 = vector.shape_cast %1 : vector<1x8x8x4xbf16> to vector<8x8x4xbf16>
    %3 = vector.shape_cast %2 : vector<8x8x4xbf16> to vector<64x4xbf16>
    %c0_3 = arith.constant 0 : index
    %c0_4 = arith.constant 0 : index
    %c0_5 = arith.constant 0 : index
    %4 = vector.load %arg2[%c0_3, %c0_4, %c0_5] : memref<9x4x8xbf16, #tpu.memory_space<vmem>>, vector<1x4x8xbf16>
    %5 = vector.shape_cast %4 : vector<1x4x8xbf16> to vector<4x8xbf16>
    %cst_6 = arith.constant dense<0.000000e+00> : vector<64x8xf32>
    %6 = tpu.matmul %3, %5, %cst_6 {dimension_numbers = #tpu.dot_dimension_numbers<[1], [0], [0], [1], [0, 0, 1, 1], [], []>} : vector<64x4xbf16>, vector<4x8xbf16>, vector<64x8xf32> -> vector<64x8xf32>
    %7 = arith.addf %0, %6 : vector<64x8xf32>
    %c1 = arith.constant 1 : index
    %c0_7 = arith.constant 0 : index
    %c0_8 = arith.constant 0 : index
    %c0_9 = arith.constant 0 : index
    %8 = vector.load %arg1[%c1, %c0_7, %c0_8, %c0_9] : memref<4x9x9x4xbf16, #tpu.memory_space<vmem>>, vector<1x8x8x4xbf16>
    %9 = vector.shape_cast %8 : vector<1x8x8x4xbf16> to vector<8x8x4xbf16>
    %10 = vector.shape_cast %9 : vector<8x8x4xbf16> to vector<64x4xbf16>
    %c1_10 = arith.constant 1 : index
    %c0_11 = arith.constant 0 : index
    %c0_12 = arith.constant 0 : index
    %11 = vector.load %arg2[%c1_10, %c0_11, %c0_12] : memref<9x4x8xbf16, #tpu.memory_space<vmem>>, vector<1x4x8xbf16>
    %12 = vector.shape_cast %11 : vector<1x4x8xbf16> to vector<4x8xbf16>
    %cst_13 = arith.constant dense<0.000000e+00> : vector<64x8xf32>
    %13 = tpu.matmul %10, %12, %cst_13 {dimension_numbers = #tpu.dot_dimension_numbers<[1], [0], [0], [1], [0, 0, 1, 1], [], []>} : vector<64x4xbf16>, vector<4x8xbf16>, vector<64x8xf32> -> vector<64x8xf32>
    %14 = arith.addf %7, %13 : vector<64x8xf32>
    %c0_14 = arith.constant 0 : index
    %c0_15 = arith.constant 0 : index
    %c1_16 = arith.constant 1 : index
    %c0_17 = arith.constant 0 : index
    %15 = vector.load %arg1[%c0_14, %c0_15, %c1_16, %c0_17] : memref<4x9x9x4xbf16, #tpu.memory_space<vmem>>, vector<1x8x8x4xbf16>
    %16 = vector.shape_cast %15 : vector<1x8x8x4xbf16> to vector<8x8x4xbf16>
    %17 = vector.shape_cast %16 : vector<8x8x4xbf16> to vector<64x4xbf16>
    %c2 = arith.constant 2 : index
    %c0_18 = arith.constant 0 : index
    %c0_19 = arith.constant 0 : index
    %18 = vector.load %arg2[%c2, %c0_18, %c0_19] : memref<9x4x8xbf16, #tpu.memory_space<vmem>>, vector<1x4x8xbf16>
    %19 = vector.shape_cast %18 : vector<1x4x8xbf16> to vector<4x8xbf16>
    %cst_20 = arith.constant dense<0.000000e+00> : vector<64x8xf32>
    %20 = tpu.matmul %17, %19, %cst_20 {dimension_numbers = #tpu.dot_dimension_numbers<[1], [0], [0], [1], [0, 0, 1, 1], [], []>} : vector<64x4xbf16>, vector<4x8xbf16>, vector<64x8xf32> -> vector<64x8xf32>
    %21 = arith.addf %14, %20 : vector<64x8xf32>
    %c2_21 = arith.constant 2 : index
    %c0_22 = arith.constant 0 : index
    %c0_23 = arith.constant 0 : index
    %c0_24 = arith.constant 0 : index
    %22 = vector.load %arg1[%c2_21, %c0_22, %c0_23, %c0_24] : memref<4x9x9x4xbf16, #tpu.memory_space<vmem>>, vector<1x8x8x4xbf16>
    %23 = vector.shape_cast %22 : vector<1x8x8x4xbf16> to vector<8x8x4xbf16>
    %24 = vector.shape_cast %23 : vector<8x8x4xbf16> to vector<64x4xbf16>
    %c3 = arith.constant 3 : index
    %c0_25 = arith.constant 0 : index
    %c0_26 = arith.constant 0 : index
    %25 = vector.load %arg2[%c3, %c0_25, %c0_26] : memref<9x4x8xbf16, #tpu.memory_space<vmem>>, vector<1x4x8xbf16>
    %26 = vector.shape_cast %25 : vector<1x4x8xbf16> to vector<4x8xbf16>
    %cst_27 = arith.constant dense<0.000000e+00> : vector<64x8xf32>
    %27 = tpu.matmul %24, %26, %cst_27 {dimension_numbers = #tpu.dot_dimension_numbers<[1], [0], [0], [1], [0, 0, 1, 1], [], []>} : vector<64x4xbf16>, vector<4x8xbf16>, vector<64x8xf32> -> vector<64x8xf32>
    %28 = arith.addf %21, %27 : vector<64x8xf32>
    %c3_28 = arith.constant 3 : index
    %c0_29 = arith.constant 0 : index
    %c0_30 = arith.constant 0 : index
    %c0_31 = arith.constant 0 : index
    %29 = vector.load %arg1[%c3_28, %c0_29, %c0_30, %c0_31] : memref<4x9x9x4xbf16, #tpu.memory_space<vmem>>, vector<1x8x8x4xbf16>
    %30 = vector.shape_cast %29 : vector<1x8x8x4xbf16> to vector<8x8x4xbf16>
    %31 = vector.shape_cast %30 : vector<8x8x4xbf16> to vector<64x4xbf16>
    %c4 = arith.constant 4 : index
    %c0_32 = arith.constant 0 : index
    %c0_33 = arith.constant 0 : index
    %32 = vector.load %arg2[%c4, %c0_32, %c0_33] : memref<9x4x8xbf16, #tpu.memory_space<vmem>>, vector<1x4x8xbf16>
    %33 = vector.shape_cast %32 : vector<1x4x8xbf16> to vector<4x8xbf16>
    %cst_34 = arith.constant dense<0.000000e+00> : vector<64x8xf32>
    %34 = tpu.matmul %31, %33, %cst_34 {dimension_numbers = #tpu.dot_dimension_numbers<[1], [0], [0], [1], [0, 0, 1, 1], [], []>} : vector<64x4xbf16>, vector<4x8xbf16>, vector<64x8xf32> -> vector<64x8xf32>
    %35 = arith.addf %28, %34 : vector<64x8xf32>
    %c2_35 = arith.constant 2 : index
    %c0_36 = arith.constant 0 : index
    %c1_37 = arith.constant 1 : index
    %c0_38 = arith.constant 0 : index
    %36 = vector.load %arg1[%c2_35, %c0_36, %c1_37, %c0_38] : memref<4x9x9x4xbf16, #tpu.memory_space<vmem>>, vector<1x8x8x4xbf16>
    %37 = vector.shape_cast %36 : vector<1x8x8x4xbf16> to vector<8x8x4xbf16>
    %38 = vector.shape_cast %37 : vector<8x8x4xbf16> to vector<64x4xbf16>
    %c5 = arith.constant 5 : index
    %c0_39 = arith.constant 0 : index
    %c0_40 = arith.constant 0 : index
    %39 = vector.load %arg2[%c5, %c0_39, %c0_40] : memref<9x4x8xbf16, #tpu.memory_space<vmem>>, vector<1x4x8xbf16>
    %40 = vector.shape_cast %39 : vector<1x4x8xbf16> to vector<4x8xbf16>
    %cst_41 = arith.constant dense<0.000000e+00> : vector<64x8xf32>
    %41 = tpu.matmul %38, %40, %cst_41 {dimension_numbers = #tpu.dot_dimension_numbers<[1], [0], [0], [1], [0, 0, 1, 1], [], []>} : vector<64x4xbf16>, vector<4x8xbf16>, vector<64x8xf32> -> vector<64x8xf32>
    %42 = arith.addf %35, %41 : vector<64x8xf32>
    %c0_42 = arith.constant 0 : index
    %c1_43 = arith.constant 1 : index
    %c0_44 = arith.constant 0 : index
    %c0_45 = arith.constant 0 : index
    %43 = vector.load %arg1[%c0_42, %c1_43, %c0_44, %c0_45] : memref<4x9x9x4xbf16, #tpu.memory_space<vmem>>, vector<1x8x8x4xbf16>
    %44 = vector.shape_cast %43 : vector<1x8x8x4xbf16> to vector<8x8x4xbf16>
    %45 = vector.shape_cast %44 : vector<8x8x4xbf16> to vector<64x4xbf16>
    %c6 = arith.constant 6 : index
    %c0_46 = arith.constant 0 : index
    %c0_47 = arith.constant 0 : index
    %46 = vector.load %arg2[%c6, %c0_46, %c0_47] : memref<9x4x8xbf16, #tpu.memory_space<vmem>>, vector<1x4x8xbf16>
    %47 = vector.shape_cast %46 : vector<1x4x8xbf16> to vector<4x8xbf16>
    %cst_48 = arith.constant dense<0.000000e+00> : vector<64x8xf32>
    %48 = tpu.matmul %45, %47, %cst_48 {dimension_numbers = #tpu.dot_dimension_numbers<[1], [0], [0], [1], [0, 0, 1, 1], [], []>} : vector<64x4xbf16>, vector<4x8xbf16>, vector<64x8xf32> -> vector<64x8xf32>
    %49 = arith.addf %42, %48 : vector<64x8xf32>
    %c1_49 = arith.constant 1 : index
    %c1_50 = arith.constant 1 : index
    %c0_51 = arith.constant 0 : index
    %c0_52 = arith.constant 0 : index
    %50 = vector.load %arg1[%c1_49, %c1_50, %c0_51, %c0_52] : memref<4x9x9x4xbf16, #tpu.memory_space<vmem>>, vector<1x8x8x4xbf16>
    %51 = vector.shape_cast %50 : vector<1x8x8x4xbf16> to vector<8x8x4xbf16>
    %52 = vector.shape_cast %51 : vector<8x8x4xbf16> to vector<64x4xbf16>
    %c7 = arith.constant 7 : index
    %c0_53 = arith.constant 0 : index
    %c0_54 = arith.constant 0 : index
    %53 = vector.load %arg2[%c7, %c0_53, %c0_54] : memref<9x4x8xbf16, #tpu.memory_space<vmem>>, vector<1x4x8xbf16>
    %54 = vector.shape_cast %53 : vector<1x4x8xbf16> to vector<4x8xbf16>
    %cst_55 = arith.constant dense<0.000000e+00> : vector<64x8xf32>
    %55 = tpu.matmul %52, %54, %cst_55 {dimension_numbers = #tpu.dot_dimension_numbers<[1], [0], [0], [1], [0, 0, 1, 1], [], []>} : vector<64x4xbf16>, vector<4x8xbf16>, vector<64x8xf32> -> vector<64x8xf32>
    %56 = arith.addf %49, %55 : vector<64x8xf32>
    %c0_56 = arith.constant 0 : index
    %c1_57 = arith.constant 1 : index
    %c1_58 = arith.constant 1 : index
    %c0_59 = arith.constant 0 : index
    %57 = vector.load %arg1[%c0_56, %c1_57, %c1_58, %c0_59] : memref<4x9x9x4xbf16, #tpu.memory_space<vmem>>, vector<1x8x8x4xbf16>
    %58 = vector.shape_cast %57 : vector<1x8x8x4xbf16> to vector<8x8x4xbf16>
    %59 = vector.shape_cast %58 : vector<8x8x4xbf16> to vector<64x4xbf16>
    %c8 = arith.constant 8 : index
    %c0_60 = arith.constant 0 : index
    %c0_61 = arith.constant 0 : index
    %60 = vector.load %arg2[%c8, %c0_60, %c0_61] : memref<9x4x8xbf16, #tpu.memory_space<vmem>>, vector<1x4x8xbf16>
    %61 = vector.shape_cast %60 : vector<1x4x8xbf16> to vector<4x8xbf16>
    %cst_62 = arith.constant dense<0.000000e+00> : vector<64x8xf32>
    %62 = tpu.matmul %59, %61, %cst_62 {dimension_numbers = #tpu.dot_dimension_numbers<[1], [0], [0], [1], [0, 0, 1, 1], [], []>} : vector<64x4xbf16>, vector<4x8xbf16>, vector<64x8xf32> -> vector<64x8xf32>
    %63 = arith.addf %56, %62 : vector<64x8xf32>
    %c0_63 = arith.constant 0 : index
    %c0_64 = arith.constant 0 : index
    %64 = vector.load %arg3[%c0_63, %c0_64] : memref<1x8xf32, #tpu.memory_space<vmem>>, vector<1x8xf32>
    %65 = vector.broadcast %64 : vector<1x8xf32> to vector<64x8xf32>
    %66 = arith.addf %63, %65 : vector<64x8xf32>
    %cst_65 = arith.constant 0.000000e+00 : f32
    %67 = vector.broadcast %cst_65 : f32 to vector<64x8xf32>
    %68 = arith.maximumf %66, %67 : vector<64x8xf32>
    %69 = arith.truncf %68 : vector<64x8xf32> to vector<64x8xbf16>
    %cst_66 = arith.constant 0.000000e+00 : bf16
    %70 = vector.broadcast %cst_66 : bf16 to vector<10x10x8xbf16>
    %c0_67 = arith.constant 0 : index
    %c0_68 = arith.constant 0 : index
    %c0_69 = arith.constant 0 : index
    %71 = vector.load %arg8[%c0_67, %c0_68, %c0_69] : memref<10x10x8xbf16, #tpu.memory_space<vmem>>, vector<10x10x8xbf16>
    tpu.vector_store %arg8[%c0_67, %c0_68, %c0_69], %70 {strides = array<i32>} : memref<10x10x8xbf16, #tpu.memory_space<vmem>>, vector<10x10x8xbf16>,
    %72 = vector.shape_cast %69 : vector<64x8xbf16> to vector<8x8x8xbf16>
    %c1_70 = arith.constant 1 : index
    %c1_71 = arith.constant 1 : index
    %c0_72 = arith.constant 0 : index
    %73 = vector.load %arg8[%c1_70, %c1_71, %c0_72] : memref<10x10x8xbf16, #tpu.memory_space<vmem>>, vector<8x8x8xbf16>
    tpu.vector_store %arg8[%c1_70, %c1_71, %c0_72], %72 {strides = array<i32>} : memref<10x10x8xbf16, #tpu.memory_space<vmem>>, vector<8x8x8xbf16>,
    %cst_73 = arith.constant 0.000000e+00 : f32
    %74 = vector.broadcast %cst_73 : f32 to vector<64x8xf32>
    %c0_74 = arith.constant 0 : index
    %c0_75 = arith.constant 0 : index
    %c0_76 = arith.constant 0 : index
    %75 = vector.load %arg8[%c0_74, %c0_75, %c0_76] : memref<10x10x8xbf16, #tpu.memory_space<vmem>>, vector<8x8x8xbf16>
    %76 = vector.shape_cast %75 : vector<8x8x8xbf16> to vector<64x8xbf16>
    %c0_77 = arith.constant 0 : index
    %c0_78 = arith.constant 0 : index
    %c0_79 = arith.constant 0 : index
    %77 = vector.load %arg4[%c0_77, %c0_78, %c0_79] : memref<9x8x8xbf16, #tpu.memory_space<vmem>>, vector<1x8x8xbf16>
    %78 = vector.shape_cast %77 : vector<1x8x8xbf16> to vector<8x8xbf16>
    %cst_80 = arith.constant dense<0.000000e+00> : vector<64x8xf32>
    %79 = tpu.matmul %76, %78, %cst_80 {dimension_numbers = #tpu.dot_dimension_numbers<[1], [0], [0], [1], [0, 0, 1, 1], [], []>} : vector<64x8xbf16>, vector<8x8xbf16>, vector<64x8xf32> -> vector<64x8xf32>
    %80 = arith.addf %74, %79 : vector<64x8xf32>
    %c0_81 = arith.constant 0 : index
    %c1_82 = arith.constant 1 : index
    %c0_83 = arith.constant 0 : index
    %81 = vector.load %arg8[%c0_81, %c1_82, %c0_83] : memref<10x10x8xbf16, #tpu.memory_space<vmem>>, vector<8x8x8xbf16>
    %82 = vector.shape_cast %81 : vector<8x8x8xbf16> to vector<64x8xbf16>
    %c1_84 = arith.constant 1 : index
    %c0_85 = arith.constant 0 : index
    %c0_86 = arith.constant 0 : index
    %83 = vector.load %arg4[%c1_84, %c0_85, %c0_86] : memref<9x8x8xbf16, #tpu.memory_space<vmem>>, vector<1x8x8xbf16>
    %84 = vector.shape_cast %83 : vector<1x8x8xbf16> to vector<8x8xbf16>
    %cst_87 = arith.constant dense<0.000000e+00> : vector<64x8xf32>
    %85 = tpu.matmul %82, %84, %cst_87 {dimension_numbers = #tpu.dot_dimension_numbers<[1], [0], [0], [1], [0, 0, 1, 1], [], []>} : vector<64x8xbf16>, vector<8x8xbf16>, vector<64x8xf32> -> vector<64x8xf32>
    %86 = arith.addf %80, %85 : vector<64x8xf32>
    %c0_88 = arith.constant 0 : index
    %c2_89 = arith.constant 2 : index
    %c0_90 = arith.constant 0 : index
    %87 = vector.load %arg8[%c0_88, %c2_89, %c0_90] : memref<10x10x8xbf16, #tpu.memory_space<vmem>>, vector<8x8x8xbf16>
    %88 = vector.shape_cast %87 : vector<8x8x8xbf16> to vector<64x8xbf16>
    %c2_91 = arith.constant 2 : index
    %c0_92 = arith.constant 0 : index
    %c0_93 = arith.constant 0 : index
    %89 = vector.load %arg4[%c2_91, %c0_92, %c0_93] : memref<9x8x8xbf16, #tpu.memory_space<vmem>>, vector<1x8x8xbf16>
    %90 = vector.shape_cast %89 : vector<1x8x8xbf16> to vector<8x8xbf16>
    %cst_94 = arith.constant dense<0.000000e+00> : vector<64x8xf32>
    %91 = tpu.matmul %88, %90, %cst_94 {dimension_numbers = #tpu.dot_dimension_numbers<[1], [0], [0], [1], [0, 0, 1, 1], [], []>} : vector<64x8xbf16>, vector<8x8xbf16>, vector<64x8xf32> -> vector<64x8xf32>
    %92 = arith.addf %86, %91 : vector<64x8xf32>
    %c1_95 = arith.constant 1 : index
    %c0_96 = arith.constant 0 : index
    %c0_97 = arith.constant 0 : index
    %93 = vector.load %arg8[%c1_95, %c0_96, %c0_97] : memref<10x10x8xbf16, #tpu.memory_space<vmem>>, vector<8x8x8xbf16>
    %94 = vector.shape_cast %93 : vector<8x8x8xbf16> to vector<64x8xbf16>
    %c3_98 = arith.constant 3 : index
    %c0_99 = arith.constant 0 : index
    %c0_100 = arith.constant 0 : index
    %95 = vector.load %arg4[%c3_98, %c0_99, %c0_100] : memref<9x8x8xbf16, #tpu.memory_space<vmem>>, vector<1x8x8xbf16>
    %96 = vector.shape_cast %95 : vector<1x8x8xbf16> to vector<8x8xbf16>
    %cst_101 = arith.constant dense<0.000000e+00> : vector<64x8xf32>
    %97 = tpu.matmul %94, %96, %cst_101 {dimension_numbers = #tpu.dot_dimension_numbers<[1], [0], [0], [1], [0, 0, 1, 1], [], []>} : vector<64x8xbf16>, vector<8x8xbf16>, vector<64x8xf32> -> vector<64x8xf32>
    %98 = arith.addf %92, %97 : vector<64x8xf32>
    %c1_102 = arith.constant 1 : index
    %c1_103 = arith.constant 1 : index
    %c0_104 = arith.constant 0 : index
    %99 = vector.load %arg8[%c1_102, %c1_103, %c0_104] : memref<10x10x8xbf16, #tpu.memory_space<vmem>>, vector<8x8x8xbf16>
    %100 = vector.shape_cast %99 : vector<8x8x8xbf16> to vector<64x8xbf16>
    %c4_105 = arith.constant 4 : index
    %c0_106 = arith.constant 0 : index
    %c0_107 = arith.constant 0 : index
    %101 = vector.load %arg4[%c4_105, %c0_106, %c0_107] : memref<9x8x8xbf16, #tpu.memory_space<vmem>>, vector<1x8x8xbf16>
    %102 = vector.shape_cast %101 : vector<1x8x8xbf16> to vector<8x8xbf16>
    %cst_108 = arith.constant dense<0.000000e+00> : vector<64x8xf32>
    %103 = tpu.matmul %100, %102, %cst_108 {dimension_numbers = #tpu.dot_dimension_numbers<[1], [0], [0], [1], [0, 0, 1, 1], [], []>} : vector<64x8xbf16>, vector<8x8xbf16>, vector<64x8xf32> -> vector<64x8xf32>
    %104 = arith.addf %98, %103 : vector<64x8xf32>
    %c1_109 = arith.constant 1 : index
    %c2_110 = arith.constant 2 : index
    %c0_111 = arith.constant 0 : index
    %105 = vector.load %arg8[%c1_109, %c2_110, %c0_111] : memref<10x10x8xbf16, #tpu.memory_space<vmem>>, vector<8x8x8xbf16>
    %106 = vector.shape_cast %105 : vector<8x8x8xbf16> to vector<64x8xbf16>
    %c5_112 = arith.constant 5 : index
    %c0_113 = arith.constant 0 : index
    %c0_114 = arith.constant 0 : index
    %107 = vector.load %arg4[%c5_112, %c0_113, %c0_114] : memref<9x8x8xbf16, #tpu.memory_space<vmem>>, vector<1x8x8xbf16>
    %108 = vector.shape_cast %107 : vector<1x8x8xbf16> to vector<8x8xbf16>
    %cst_115 = arith.constant dense<0.000000e+00> : vector<64x8xf32>
    %109 = tpu.matmul %106, %108, %cst_115 {dimension_numbers = #tpu.dot_dimension_numbers<[1], [0], [0], [1], [0, 0, 1, 1], [], []>} : vector<64x8xbf16>, vector<8x8xbf16>, vector<64x8xf32> -> vector<64x8xf32>
    %110 = arith.addf %104, %109 : vector<64x8xf32>
    %c2_116 = arith.constant 2 : index
    %c0_117 = arith.constant 0 : index
    %c0_118 = arith.constant 0 : index
    %111 = vector.load %arg8[%c2_116, %c0_117, %c0_118] : memref<10x10x8xbf16, #tpu.memory_space<vmem>>, vector<8x8x8xbf16>
    %112 = vector.shape_cast %111 : vector<8x8x8xbf16> to vector<64x8xbf16>
    %c6_119 = arith.constant 6 : index
    %c0_120 = arith.constant 0 : index
    %c0_121 = arith.constant 0 : index
    %113 = vector.load %arg4[%c6_119, %c0_120, %c0_121] : memref<9x8x8xbf16, #tpu.memory_space<vmem>>, vector<1x8x8xbf16>
    %114 = vector.shape_cast %113 : vector<1x8x8xbf16> to vector<8x8xbf16>
    %cst_122 = arith.constant dense<0.000000e+00> : vector<64x8xf32>
    %115 = tpu.matmul %112, %114, %cst_122 {dimension_numbers = #tpu.dot_dimension_numbers<[1], [0], [0], [1], [0, 0, 1, 1], [], []>} : vector<64x8xbf16>, vector<8x8xbf16>, vector<64x8xf32> -> vector<64x8xf32>
    %116 = arith.addf %110, %115 : vector<64x8xf32>
    %c2_123 = arith.constant 2 : index
    %c1_124 = arith.constant 1 : index
    %c0_125 = arith.constant 0 : index
    %117 = vector.load %arg8[%c2_123, %c1_124, %c0_125] : memref<10x10x8xbf16, #tpu.memory_space<vmem>>, vector<8x8x8xbf16>
    %118 = vector.shape_cast %117 : vector<8x8x8xbf16> to vector<64x8xbf16>
    %c7_126 = arith.constant 7 : index
    %c0_127 = arith.constant 0 : index
    %c0_128 = arith.constant 0 : index
    %119 = vector.load %arg4[%c7_126, %c0_127, %c0_128] : memref<9x8x8xbf16, #tpu.memory_space<vmem>>, vector<1x8x8xbf16>
    %120 = vector.shape_cast %119 : vector<1x8x8xbf16> to vector<8x8xbf16>
    %cst_129 = arith.constant dense<0.000000e+00> : vector<64x8xf32>
    %121 = tpu.matmul %118, %120, %cst_129 {dimension_numbers = #tpu.dot_dimension_numbers<[1], [0], [0], [1], [0, 0, 1, 1], [], []>} : vector<64x8xbf16>, vector<8x8xbf16>, vector<64x8xf32> -> vector<64x8xf32>
    %122 = arith.addf %116, %121 : vector<64x8xf32>
    %c2_130 = arith.constant 2 : index
    %c2_131 = arith.constant 2 : index
    %c0_132 = arith.constant 0 : index
    %123 = vector.load %arg8[%c2_130, %c2_131, %c0_132] : memref<10x10x8xbf16, #tpu.memory_space<vmem>>, vector<8x8x8xbf16>
    %124 = vector.shape_cast %123 : vector<8x8x8xbf16> to vector<64x8xbf16>
    %c8_133 = arith.constant 8 : index
    %c0_134 = arith.constant 0 : index
    %c0_135 = arith.constant 0 : index
    %125 = vector.load %arg4[%c8_133, %c0_134, %c0_135] : memref<9x8x8xbf16, #tpu.memory_space<vmem>>, vector<1x8x8xbf16>
    %126 = vector.shape_cast %125 : vector<1x8x8xbf16> to vector<8x8xbf16>
    %cst_136 = arith.constant dense<0.000000e+00> : vector<64x8xf32>
    %127 = tpu.matmul %124, %126, %cst_136 {dimension_numbers = #tpu.dot_dimension_numbers<[1], [0], [0], [1], [0, 0, 1, 1], [], []>} : vector<64x8xbf16>, vector<8x8xbf16>, vector<64x8xf32> -> vector<64x8xf32>
    %128 = arith.addf %122, %127 : vector<64x8xf32>
    %c3_137 = arith.constant 3 : index
    %c0_138 = arith.constant 0 : index
    %c0_139 = arith.constant 0 : index
    %c0_140 = arith.constant 0 : index
    %129 = vector.load %arg1[%c3_137, %c0_138, %c0_139, %c0_140] : memref<4x9x9x4xbf16, #tpu.memory_space<vmem>>, vector<1x8x8x4xbf16>
    %130 = vector.shape_cast %129 : vector<1x8x8x4xbf16> to vector<8x8x4xbf16>
    %131 = vector.shape_cast %130 : vector<8x8x4xbf16> to vector<64x4xbf16>
    %c0_141 = arith.constant 0 : index
    %c0_142 = arith.constant 0 : index
    %132 = vector.load %arg6[%c0_141, %c0_142] : memref<4x8xbf16, #tpu.memory_space<vmem>>, vector<4x8xbf16>
    %cst_143 = arith.constant dense<0.000000e+00> : vector<64x8xf32>
    %133 = tpu.matmul %131, %132, %cst_143 {dimension_numbers = #tpu.dot_dimension_numbers<[1], [0], [0], [1], [0, 0, 1, 1], [], []>} : vector<64x4xbf16>, vector<4x8xbf16>, vector<64x8xf32> -> vector<64x8xf32>
    %134 = arith.addf %128, %133 : vector<64x8xf32>
    %c0_144 = arith.constant 0 : index
    %c0_145 = arith.constant 0 : index
    %135 = vector.load %arg5[%c0_144, %c0_145] : memref<1x8xf32, #tpu.memory_space<vmem>>, vector<1x8xf32>
    %136 = vector.broadcast %135 : vector<1x8xf32> to vector<64x8xf32>
    %137 = arith.addf %134, %136 : vector<64x8xf32>
    %cst_146 = arith.constant 0.000000e+00 : f32
    %138 = vector.broadcast %cst_146 : f32 to vector<64x8xf32>
    %139 = arith.maximumf %137, %138 : vector<64x8xf32>
    %140 = vector.shape_cast %139 : vector<64x8xf32> to vector<8x8x8xf32>
    %c0_147 = arith.constant 0 : index
    %c0_148 = arith.constant 0 : index
    %c0_149 = arith.constant 0 : index
    %c0_150 = arith.constant 0 : index
    %141 = vector.load %arg7[%c0_147, %c0_148, %c0_149, %c0_150] : memref<1x8x8x8xf32, #tpu.memory_space<vmem>>, vector<1x8x8x8xf32>
    %142 = vector.shape_cast %141 : vector<1x8x8x8xf32> to vector<8x8x8xf32>
    %143 = vector.shape_cast %140 : vector<8x8x8xf32> to vector<1x8x8x8xf32>
    tpu.vector_store %arg7[%c0_147, %c0_148, %c0_149, %c0_150], %143 {strides = array<i32>} : memref<1x8x8x8xf32, #tpu.memory_space<vmem>>, vector<1x8x8x8xf32>,
    return
  }
  func.func @transform_0(%arg0: i32) -> (i32, i32, i32, i32) {
    %c0_i32 = arith.constant 0 : i32
    %c0_i32_0 = arith.constant 0 : i32
    %c0_i32_1 = arith.constant 0 : i32
    %c0_i32_2 = arith.constant 0 : i32
    return %arg0, %c0_i32, %c0_i32_0, %c0_i32_1 : i32, i32, i32, i32
  }
  func.func @transform_1(%arg0: i32) -> (i32, i32, i32) {
    %c0_i32 = arith.constant 0 : i32
    %c0_i32_0 = arith.constant 0 : i32
    %c0_i32_1 = arith.constant 0 : i32
    %c0_i32_2 = arith.constant 0 : i32
    return %c0_i32, %c0_i32_0, %c0_i32_1 : i32, i32, i32
  }
  func.func @transform_2(%arg0: i32) -> (i32, i32) {
    %c0_i32 = arith.constant 0 : i32
    %c0_i32_0 = arith.constant 0 : i32
    %c0_i32_1 = arith.constant 0 : i32
    return %c0_i32, %c0_i32_0 : i32, i32
  }
  func.func @transform_3(%arg0: i32) -> (i32, i32, i32) {
    %c0_i32 = arith.constant 0 : i32
    %c0_i32_0 = arith.constant 0 : i32
    %c0_i32_1 = arith.constant 0 : i32
    %c0_i32_2 = arith.constant 0 : i32
    return %c0_i32, %c0_i32_0, %c0_i32_1 : i32, i32, i32
  }
  func.func @transform_4(%arg0: i32) -> (i32, i32) {
    %c0_i32 = arith.constant 0 : i32
    %c0_i32_0 = arith.constant 0 : i32
    %c0_i32_1 = arith.constant 0 : i32
    return %c0_i32, %c0_i32_0 : i32, i32
  }
  func.func @transform_5(%arg0: i32) -> (i32, i32) {
    %c0_i32 = arith.constant 0 : i32
    %c0_i32_0 = arith.constant 0 : i32
    %c0_i32_1 = arith.constant 0 : i32
    return %c0_i32, %c0_i32_0 : i32, i32
  }
  func.func @transform_6(%arg0: i32) -> (i32, i32, i32, i32) {
    %c0_i32 = arith.constant 0 : i32
    %c0_i32_0 = arith.constant 0 : i32
    %c0_i32_1 = arith.constant 0 : i32
    %c0_i32_2 = arith.constant 0 : i32
    return %arg0, %c0_i32, %c0_i32_0, %c0_i32_1 : i32, i32, i32, i32
  }
}

</mosaic_0001>

<llo_original>
// kernel: basic_block_forward.1
$region0: #{basic_block_forward.1}
  #allocation0 [shape = 'u32[]', space=smem, size = 0x4, offset = 0x4, fixed_abs, tag = 'smem constant byte address 0x4 - core index']
  #allocation1 [shape = 'u32[144,128]{1,0:T(1,128)}', space=vmem, size = 0x12000, scoped, tag = 'internal scratch']
  #allocation2 [shape = 'bf16[10,10,8]{2,1,0:T(8,128)(2,1)}', space=vmem, size = 0xa000, scoped, tag = 'scratch operand']
  %s0 = inlined_call_operand.vmem [shape: bf16[8,9,9,4], index: 0, kind: input, shape index: {}]
  %s1 = inlined_call_operand.vmem [shape: bf16[9,4,8], index: 1, kind: input, shape index: {}]
  %s2 = inlined_call_operand.vmem [shape: f32[1,8], index: 2, kind: input, shape index: {}]
  %s3 = inlined_call_operand.vmem [shape: bf16[9,8,8], index: 3, kind: input, shape index: {}]
  %s4 = inlined_call_operand.vmem [shape: f32[1,8], index: 4, kind: input, shape index: {}]
  %s5 = inlined_call_operand.vmem [shape: bf16[4,8], index: 5, kind: input, shape index: {}]
  %s6 = inlined_call_operand.vmem [shape: f32[2,8,8,8], index: 6, kind: output, shape index: {}]
  %s7 = sld [smem:[#allocation0]]
  $region57: #{basic_block_forward.1} parent=0
    _
  %s9 = ssub.s32 1, %s7
  %s10 = scalar_select 0, %s9, %s7
  loop: start=0, step=1, limit=4
  $region2: #{basic_block_forward.1} parent=0 // loop_pre_header
    _
  $region3: #{basic_block_forward.1} parent=0 // loop_header
    %s12 = sphi 0, %s16
    %p13 = scmp.ge.s32.totalorder %s12, 4
    %s22 = sphi 0, %s24
    %s25 = sphi 0, %s22
    %s26 = sphi 0, %s25
    %s42 = sphi 0, %s26
    %s46 = sphi 0, %s46
    %s48 = sphi 0, %s46
    %s49 = sphi 0, %s48
    %s63 = sphi 0, %s49
    %s67 = sphi 0, %s67
    %s69 = sphi 0, %s67
    %s70 = sphi 0, %s69
    %s84 = sphi 0, %s70
    %s88 = sphi 0, %s88
    %s90 = sphi 0, %s88
    %s91 = sphi 0, %s90
    %s105 = sphi 0, %s91
    %s109 = sphi 0, %s109
    %s111 = sphi 0, %s109
    %s112 = sphi 0, %s111
    %s126 = sphi 0, %s112
    %s130 = sphi 0, %s130
    %s132 = sphi 0, %s130
    %s133 = sphi 0, %s132
    %s147 = sphi 0, %s133
    %s153 = sphi 0, %s155
    %s156 = sphi 0, %s153
    %s157 = sphi 0, %s156
    %s173 = sphi 0, %s157
  $region4: #{basic_block_forward.1} parent=0 // loop_header_branch
    %15 = sbr.rel (%p13) target = $region8
  $region5: #{basic_block_forward.1} parent=0 // loop_body
    %s17 = ssub.s32 %s12, 1
    %s18 = ssub.s32 %s12, 2
    %s19 = sadd.s32 %s12, 1
    %s20 = ssub.s32 %s12, %s19
    %p21 = scmp.eq.s32.totalorder %s20, 0
    %s23 = sadd.s32 %s22, 1
    %s24 = scalar_select %p21, %s22, %s23
    %p27 = pneg %p21
    %p28 = scmp.eq.s32.totalorder %s12, 1
    %p29 = por %p27, %p28
    %p30 = scmp.ne.s32.totalorder %s22, %s25
    %p31 = scmp.eq.s32.totalorder %s12, 0
    %p32 = por %p30, %p31
    %p33 = scmp.ne.s32.totalorder %s22, %s25
    %p34 = scmp.eq.s32.totalorder %s17, 1
    %p35 = por %p33, %p34
    %p36 = scmp.ne.s32.totalorder %s25, %s26
    %p37 = scmp.eq.s32.totalorder %s17, 0
    %p38 = por %p36, %p37
    %p39 = scmp.ne.s32.totalorder %s25, %s26
    %p40 = scmp.eq.s32.totalorder %s18, 1
    %p41 = por %p39, %p40
    %p43 = scmp.ne.s32.totalorder %s26, %s42
    %p44 = scmp.eq.s32.totalorder %s18, 0
    %p45 = por %p43, %p44
    %s47 = sadd.s32 %s46, 1
    %p50 = scmp.eq.s32.totalorder %s12, 1
    %p51 = scmp.ne.s32.totalorder %s46, %s48
    %p52 = scmp.eq.s32.totalorder %s12, 0
    %p53 = por %p51, %p52
    %p54 = scmp.ne.s32.totalorder %s46, %s48
    %p55 = scmp.eq.s32.totalorder %s17, 1
    %p56 = por %p54, %p55
    %p57 = scmp.ne.s32.totalorder %s48, %s49
    %p58 = scmp.eq.s32.totalorder %s17, 0
    %p59 = por %p57, %p58
    %p60 = scmp.ne.s32.totalorder %s48, %s49
    %p61 = scmp.eq.s32.totalorder %s18, 1
    %p62 = por %p60, %p61
    %p64 = scmp.ne.s32.totalorder %s49, %s63
    %p65 = scmp.eq.s32.totalorder %s18, 0
    %p66 = por %p64, %p65
    %s68 = sadd.s32 %s67, 1
    %p71 = scmp.eq.s32.totalorder %s12, 1
    %p72 = scmp.ne.s32.totalorder %s67, %s69
    %p73 = scmp.eq.s32.totalorder %s12, 0
    %p74 = por %p72, %p73
    %p75 = scmp.ne.s32.totalorder %s67, %s69
    %p76 = scmp.eq.s32.totalorder %s17, 1
    %p77 = por %p75, %p76
    %p78 = scmp.ne.s32.totalorder %s69, %s70
    %p79 = scmp.eq.s32.totalorder %s17, 0
    %p80 = por %p78, %p79
    %p81 = scmp.ne.s32.totalorder %s69, %s70
    %p82 = scmp.eq.s32.totalorder %s18, 1
    %p83 = por %p81, %p82
    %p85 = scmp.ne.s32.totalorder %s70, %s84
    %p86 = scmp.eq.s32.totalorder %s18, 0
    %p87 = por %p85, %p86
    %s89 = sadd.s32 %s88, 1
    %p92 = scmp.eq.s32.totalorder %s12, 1
    %p93 = scmp.ne.s32.totalorder %s88, %s90
    %p94 = scmp.eq.s32.totalorder %s12, 0
    %p95 = por %p93, %p94
    %p96 = scmp.ne.s32.totalorder %s88, %s90
    %p97 = scmp.eq.s32.totalorder %s17, 1
    %p98 = por %p96, %p97
    %p99 = scmp.ne.s32.totalorder %s90, %s91
    %p100 = scmp.eq.s32.totalorder %s17, 0
    %p101 = por %p99, %p100
    %p102 = scmp.ne.s32.totalorder %s90, %s91
    %p103 = scmp.eq.s32.totalorder %s18, 1
    %p104 = por %p102, %p103
    %p106 = scmp.ne.s32.totalorder %s91, %s105
    %p107 = scmp.eq.s32.totalorder %s18, 0
    %p108 = por %p106, %p107
    %s110 = sadd.s32 %s109, 1
    %p113 = scmp.eq.s32.totalorder %s12, 1
    %p114 = scmp.ne.s32.totalorder %s109, %s111
    %p115 = scmp.eq.s32.totalorder %s12, 0
    %p116 = por %p114, %p115
    %p117 = scmp.ne.s32.totalorder %s109, %s111
    %p118 = scmp.eq.s32.totalorder %s17, 1
    %p119 = por %p117, %p118
    %p120 = scmp.ne.s32.totalorder %s111, %s112
    %p121 = scmp.eq.s32.totalorder %s17, 0
    %p122 = por %p120, %p121
    %p123 = scmp.ne.s32.totalorder %s111, %s112
    %p124 = scmp.eq.s32.totalorder %s18, 1
    %p125 = por %p123, %p124
    %p127 = scmp.ne.s32.totalorder %s112, %s126
    %p128 = scmp.eq.s32.totalorder %s18, 0
    %p129 = por %p127, %p128
    %s131 = sadd.s32 %s130, 1
    %p134 = scmp.eq.s32.totalorder %s12, 1
    %p135 = scmp.ne.s32.totalorder %s130, %s132
    %p136 = scmp.eq.s32.totalorder %s12, 0
    %p137 = por %p135, %p136
    %p138 = scmp.ne.s32.totalorder %s130, %s132
    %p139 = scmp.eq.s32.totalorder %s17, 1
    %p140 = por %p138, %p139
    %p141 = scmp.ne.s32.totalorder %s132, %s133
    %p142 = scmp.eq.s32.totalorder %s17, 0
    %p143 = por %p141, %p142
    %p144 = scmp.ne.s32.totalorder %s132, %s133
    %p145 = scmp.eq.s32.totalorder %s18, 1
    %p146 = por %p144, %p145
    %p148 = scmp.ne.s32.totalorder %s133, %s147
    %p149 = scmp.eq.s32.totalorder %s18, 0
    %p150 = por %p148, %p149
    %s151 = ssub.s32 %s12, %s19
    %p152 = scmp.eq.s32.totalorder %s151, 0
    %s154 = sadd.s32 %s153, 1
    %s155 = scalar_select %p152, %s153, %s154
    %p158 = pneg %p152
    %p159 = scmp.eq.s32.totalorder %s12, 1
    %p160 = por %p158, %p159
    %p161 = scmp.ne.s32.totalorder %s153, %s156
    %p162 = scmp.eq.s32.totalorder %s12, 0
    %p163 = por %p161, %p162
    %p164 = scmp.ne.s32.totalorder %s153, %s156
    %p165 = scmp.eq.s32.totalorder %s17, 1
    %p166 = por %p164, %p165
    %p167 = scmp.ne.s32.totalorder %s156, %s157
    %p168 = scmp.eq.s32.totalorder %s17, 0
    %p169 = por %p167, %p168
    %p170 = scmp.ne.s32.totalorder %s156, %s157
    %p171 = scmp.eq.s32.totalorder %s18, 1
    %p172 = por %p170, %p171
    %p174 = scmp.ne.s32.totalorder %s157, %s173
    %p175 = scmp.eq.s32.totalorder %s18, 0
    %p176 = por %p174, %p175
    %p177 = scmp.le.s32.totalorder 1, %s12
    %p178 = scmp.lt.s32.totalorder %s12, 3
    %p179 = pnand %p177, %p178
    %p180 = pneg %p179
    // Predicated region
    $region9: #{basic_block_forward.1} parent=5 // pred_check
      _
    $region10: #{basic_block_forward.1} parent=5 // pred_check_branch
      %182 = sbr.rel (%p179) target = $region12
    $region11: #{basic_block_forward.1} parent=5 // pred_region
      %s183 = ssub.s32 %s12, 1
      // Predicated region
      $region13: #{basic_block_forward.1} parent=11 // pred_check
        %p184 = pneg %p59
      $region14: #{basic_block_forward.1} parent=11 // pred_check_branch
        %186 = sbr.rel (%p184) target = $region16
      $region15: #{basic_block_forward.1} parent=11 // pred_region
        _
      $region16: #{basic_block_forward.1} parent=11 // pred_fallthru
        _
      // Predicated region
      $region17: #{basic_block_forward.1} parent=11 // pred_check
        %p187 = pneg %p80
      $region18: #{basic_block_forward.1} parent=11 // pred_check_branch
        %189 = sbr.rel (%p187) target = $region20
      $region19: #{basic_block_forward.1} parent=11 // pred_region
        _
      $region20: #{basic_block_forward.1} parent=11 // pred_fallthru
        _
      // Predicated region
      $region21: #{basic_block_forward.1} parent=11 // pred_check
        %p190 = pneg %p101
      $region22: #{basic_block_forward.1} parent=11 // pred_check_branch
        %192 = sbr.rel (%p190) target = $region24
      $region23: #{basic_block_forward.1} parent=11 // pred_region
        _
      $region24: #{basic_block_forward.1} parent=11 // pred_fallthru
        _
      // Predicated region
      $region25: #{basic_block_forward.1} parent=11 // pred_check
        %p193 = pneg %p122
      $region26: #{basic_block_forward.1} parent=11 // pred_check_branch
        %195 = sbr.rel (%p193) target = $region28
      $region27: #{basic_block_forward.1} parent=11 // pred_region
        _
      $region28: #{basic_block_forward.1} parent=11 // pred_fallthru
        _
      // Predicated region
      $region29: #{basic_block_forward.1} parent=11 // pred_check
        %p196 = pneg %p143
      $region30: #{basic_block_forward.1} parent=11 // pred_check_branch
        %198 = sbr.rel (%p196) target = $region32
      $region31: #{basic_block_forward.1} parent=11 // pred_region
        _
      $region32: #{basic_block_forward.1} parent=11 // pred_fallthru
        _
    $region12: #{basic_block_forward.1} parent=5 // pred_fallthru
      _
    %p199 = scmp.lt.s32.totalorder %s12, 2
    // Predicated region
    $region33: #{basic_block_forward.1} parent=5 // pred_check
      %p200 = pneg %p199
    $region34: #{basic_block_forward.1} parent=5 // pred_check_branch
      %202 = sbr.rel (%p200) target = $region36
    $region35: #{basic_block_forward.1} parent=5 // pred_region
      // Predicated region
      $region37: #{basic_block_forward.1} parent=35 // pred_check
        %p203 = pneg %p32
      $region38: #{basic_block_forward.1} parent=35 // pred_check_branch
        %205 = sbr.rel (%p203) target = $region40
      $region39: #{basic_block_forward.1} parent=35 // pred_region
        %s206 = smul.u32 4, %s12
        %p207 = scmp.lt.s32.totalorder %s206, 7
        %s208 = scalar_select %p207, %s206, 7
        %s209 = smul.addr %s208, 18
        %s210 = smul.addr %s209, 4
        %s211 = scalar_lea.vmem %s0, %s210
        %s212 = smul.u32 4, %s12
      $region40: #{basic_block_forward.1} parent=35 // pred_fallthru
        _
    $region36: #{basic_block_forward.1} parent=5 // pred_fallthru
      _
    %p213 = scmp.le.s32.totalorder 1, %s12
    %p214 = scmp.lt.s32.totalorder %s12, 3
    %p215 = pnand %p213, %p214
    %p216 = pneg %p215
    // Predicated region
    $region41: #{basic_block_forward.1} parent=5 // pred_check
      _
    $region42: #{basic_block_forward.1} parent=5 // pred_check_branch
      %218 = sbr.rel (%p215) target = $region44
    $region43: #{basic_block_forward.1} parent=5 // pred_region
      %s219 = ssub.s32 %s12, 1
      %s220 = smul.u32 4, %s17
      %p221 = scmp.lt.s32.totalorder %s220, 7
      %s222 = scalar_select %p221, %s220, 7
      %s223 = smul.addr %s222, 18
      %s224 = smul.addr %s223, 4
      %s225 = scalar_lea.vmem %s0, %s224
      %p226 = pneg %p38
      %p227 = pneg %p35
      %p228 = pneg %p59
      %p229 = pneg %p56
      %p230 = pneg %p80
      %p231 = pneg %p77
      %p232 = pneg %p101
      %p233 = pneg %p98
      %p234 = pneg %p122
      %p235 = pneg %p119
      %p236 = pneg %p143
      %p237 = pneg %p140
      %p238 = pneg %p169
      %p239 = pneg %p166
      %p240 = scmp.lt.s32.totalorder %s17, 1
      %s241 = scalar_select %p240, %s17, 1
      %s242 = smul.addr %s241, 8
      %s243 = smul.addr %s242, 8
      %s244 = scalar_lea.vmem %s6, %s243
      %s245 = smul.u32 4, %s17
      %p246 = scmp.lt.s32.totalorder %s245, 7
      %s247 = scalar_select %p246, %s245, 7
      %s248 = smul.addr %s247, 18
      %s249 = smul.addr %s248, 4
      %s250 = scalar_lea.vmem %s0, %s249
      %s251 = smul.u32 4, %s17
      %p252 = scmp.lt.s32.totalorder %s17, 1
      %s253 = scalar_select %p252, %s17, 1
      %s254 = smul.addr %s253, 8
      %s255 = smul.addr %s254, 8
      %s256 = scalar_lea.vmem %s6, %s255
      %v258 = vld [vmem:[%s250] sm:$0xf]
      %v259 = vld [vmem:[%s250 + $0x8] sm:$0xf]
      %v260 = vld [vmem:[%s250 + $0x10] sm:$0xf]
      %v261 = vld [vmem:[%s250 + $0x18] sm:$0xf]
      %v262 = vld [vmem:[%s250 + $0x20] sm:$0xf]
      %v263 = vld [vmem:[%s250 + $0x28] sm:$0xf]
      %v264 = vld [vmem:[%s250 + $0x30] sm:$0xf]
      %v265 = vld [vmem:[%s250 + $0x38] sm:$0xf]
      %v266 = vld [vmem:[%s1] sm:$0x3]
      %s267 = scalar_lea.vmem %s250, 72
      %v268 = vld [vmem:[%s267] sm:$0xf]
      %v269 = vld [vmem:[%s267 + $0x8] sm:$0xf]
      %v270 = vld [vmem:[%s267 + $0x10] sm:$0xf]
      %v271 = vld [vmem:[%s267 + $0x18] sm:$0xf]
      %v272 = vld [vmem:[%s267 + $0x20] sm:$0xf]
      %v273 = vld [vmem:[%s267 + $0x28] sm:$0xf]
      %v274 = vld [vmem:[%s267 + $0x30] sm:$0xf]
      %v275 = vld [vmem:[%s267 + $0x38] sm:$0xf]
      %s276 = scalar_lea.vmem %s1, 2
      %v277 = vld [vmem:[%s276] sm:$0x3]
      %v286 = vunpack.c.l.b16 %v268
      %v287 = vunpack.c.l.b16 %v269
      %v288 = vunpack.c.l.b16 %v270
      %v289 = vunpack.c.l.b16 %v271
      %v290 = vunpack.c.l.b16 %v272
      %v291 = vunpack.c.l.b16 %v273
      %v292 = vunpack.c.l.b16 %v274
      %v293 = vunpack.c.l.b16 %v275
      %v294 = vpack.c.b16 %v287, %v286
      %v295 = vpack.c.b16 %v289, %v288
      %v296 = vpack.c.b16 %v291, %v290
      %v297 = vpack.c.b16 %v293, %v292
      %vm298 = vcmask 31744
      %v300 = vsel %vm298, %v294, 0
      %v303 = vsel %vm298, %v295, 0
      %v306 = vsel %vm298, %v296, 0
      %v309 = vsel %vm298, %v297, 0
      %vm311 = vcmask 1041408
      %v313 = vsel %vm311, %v277, 0
      %315 = vmatprep.subr.bf16.mxu0 0
      %316 = vmatpush1.bf16.msra.mxu0 %v313
      %317 = vmatprep.subr.bf16.mxu0 0
      %318 = vmatpush1.bf16.msra.mxu0 0
      %319 = vmatprep.subr.bf16.mxu0 0
      %320 = vmatpush1.bf16.msra.mxu0 0
      %321 = vmatprep.subr.bf16.mxu0 0
      %322 = vmatpush1.bf16.msra.mxu0 0
      %323 = vmatprep.subr.bf16.mxu0 0
      %324 = vmatpush1.bf16.msra.mxu0 0
      %325 = vmatprep.subr.bf16.mxu0 0
      %326 = vmatpush1.bf16.msra.mxu0 0
      %327 = vmatprep.subr.bf16.mxu0 0
      %328 = vmatpush1.bf16.msra.mxu0 0
      %329 = vmatprep.subr.bf16.mxu0 0
      %330 = vmatpush1.bf16.msra.mxu0 0
      %331 = vmatprep.subr.bf16.mxu0 0
      %332 = vmatpush1.bf16.msra.mxu0 0
      %333 = vmatprep.subr.bf16.mxu0 0
      %334 = vmatpush1.bf16.msra.mxu0 0
      %335 = vmatprep.subr.bf16.mxu0 0
      %336 = vmatpush1.bf16.msra.mxu0 0
      %337 = vmatprep.subr.bf16.mxu0 0
      %338 = vmatpush1.bf16.msra.mxu0 0
      %339 = vmatprep.subr.bf16.mxu0 0
      %340 = vmatpush1.bf16.msra.mxu0 0
      %341 = vmatprep.subr.bf16.mxu0 0
      %342 = vmatpush1.bf16.msra.mxu0 0
      %343 = vmatprep.subr.bf16.mxu0 0
      %344 = vmatpush1.bf16.msra.mxu0 0
      %345 = vmatprep.subr.bf16.mxu0 0
      %346 = vmatpush1.bf16.msra.mxu0 0
      %347 = vmatprep.mubr.bf16.mxu0 0
      %348 = vmatmul.mubr.bf16.gmra.mrb[0].mxu0 %v300
      %v349 = vpop.f32.mrb[0].mxu0
      %v350 = vadd.f32 0.0, %v349
      %v351 = vpop.f32.mrb[0].mxu0
      %v352 = vpop.f32.mrb[0].mxu0
      %v353 = vadd.f32 0.0, %v352
      %v354 = vpop.f32.mrb[0].mxu0
      %355 = vmatprep.mubr.bf16.mxu0 0
      %356 = vmatmul.mubr.bf16.gmra.mrb[0].mxu0 %v303
      %v357 = vpop.f32.mrb[0].mxu0
      %v358 = vadd.f32 0.0, %v357
      %v359 = vpop.f32.mrb[0].mxu0
      %v360 = vpop.f32.mrb[0].mxu0
      %v361 = vadd.f32 0.0, %v360
      %v362 = vpop.f32.mrb[0].mxu0
      %363 = vmatprep.mubr.bf16.mxu0 0
      %364 = vmatmul.mubr.bf16.gmra.mrb[0].mxu0 %v306
      %v365 = vpop.f32.mrb[0].mxu0
      %v366 = vadd.f32 0.0, %v365
      %v367 = vpop.f32.mrb[0].mxu0
      %v368 = vpop.f32.mrb[0].mxu0
      %v369 = vadd.f32 0.0, %v368
      %v370 = vpop.f32.mrb[0].mxu0
      %371 = vmatprep.mubr.bf16.mxu0 0
      %372 = vmatmul.mubr.bf16.gmra.mrb[0].mxu0 %v309
      %v373 = vpop.f32.mrb[0].mxu0
      %v374 = vadd.f32 0.0, %v373
      %v375 = vpop.f32.mrb[0].mxu0
      %v376 = vpop.f32.mrb[0].mxu0
      %v377 = vadd.f32 0.0, %v376
      %v378 = vpop.f32.mrb[0].mxu0
      %379 = vdwg.mxu0
      %v388 = vunpack.c.l.b16 %v258
      %v389 = vunpack.c.l.b16 %v259
      %v390 = vunpack.c.l.b16 %v260
      %v391 = vunpack.c.l.b16 %v261
      %v392 = vunpack.c.l.b16 %v262
      %v393 = vunpack.c.l.b16 %v263
      %v394 = vunpack.c.l.b16 %v264
      %v395 = vunpack.c.l.b16 %v265
      %v396 = vpack.c.b16 %v389, %v388
      %v397 = vpack.c.b16 %v391, %v390
      %v398 = vpack.c.b16 %v393, %v392
      %v399 = vpack.c.b16 %v395, %v394
      %v401 = vsel %vm298, %v396, 0
      %v404 = vsel %vm298, %v397, 0
      %v407 = vsel %vm298, %v398, 0
      %v410 = vsel %vm298, %v399, 0
      %v413 = vsel %vm311, %v266, 0
      %415 = vmatprep.subr.bf16.mxu0 0
      %416 = vmatpush1.bf16.msra.mxu0 %v413
      %417 = vmatprep.subr.bf16.mxu0 0
      %418 = vmatpush1.bf16.msra.mxu0 0
      %419 = vmatprep.subr.bf16.mxu0 0
      %420 = vmatpush1.bf16.msra.mxu0 0
      %421 = vmatprep.subr.bf16.mxu0 0
      %422 = vmatpush1.bf16.msra.mxu0 0
      %423 = vmatprep.subr.bf16.mxu0 0
      %424 = vmatpush1.bf16.msra.mxu0 0
      %425 = vmatprep.subr.bf16.mxu0 0
      %426 = vmatpush1.bf16.msra.mxu0 0
      %427 = vmatprep.subr.bf16.mxu0 0
      %428 = vmatpush1.bf16.msra.mxu0 0
      %429 = vmatprep.subr.bf16.mxu0 0
      %430 = vmatpush1.bf16.msra.mxu0 0
      %431 = vmatprep.subr.bf16.mxu0 0
      %432 = vmatpush1.bf16.msra.mxu0 0
      %433 = vmatprep.subr.bf16.mxu0 0
      %434 = vmatpush1.bf16.msra.mxu0 0
      %435 = vmatprep.subr.bf16.mxu0 0
      %436 = vmatpush1.bf16.msra.mxu0 0
      %437 = vmatprep.subr.bf16.mxu0 0
      %438 = vmatpush1.bf16.msra.mxu0 0
      %439 = vmatprep.subr.bf16.mxu0 0
      %440 = vmatpush1.bf16.msra.mxu0 0
      %441 = vmatprep.subr.bf16.mxu0 0
      %442 = vmatpush1.bf16.msra.mxu0 0
      %443 = vmatprep.subr.bf16.mxu0 0
      %444 = vmatpush1.bf16.msra.mxu0 0
      %445 = vmatprep.subr.bf16.mxu0 0
      %446 = vmatpush1.bf16.msra.mxu0 0
      %447 = vmatprep.mubr.bf16.mxu0 0
      %448 = vmatmul.mubr.bf16.gmra.mrb[0].mxu0 %v401
      %v449 = vpop.f32.mrb[0].mxu0
      %v450 = vadd.f32 %v350, %v449
      %v451 = vpop.f32.mrb[0].mxu0
      %v452 = vpop.f32.mrb[0].mxu0
      %v453 = vadd.f32 %v353, %v452
      %v454 = vpop.f32.mrb[0].mxu0
      %455 = vmatprep.mubr.bf16.mxu0 0
      %456 = vmatmul.mubr.bf16.gmra.mrb[0].mxu0 %v404
      %v457 = vpop.f32.mrb[0].mxu0
      %v458 = vadd.f32 %v358, %v457
      %v459 = vpop.f32.mrb[0].mxu0
      %v460 = vpop.f32.mrb[0].mxu0
      %v461 = vadd.f32 %v361, %v460
      %v462 = vpop.f32.mrb[0].mxu0
      %463 = vmatprep.mubr.bf16.mxu0 0
      %464 = vmatmul.mubr.bf16.gmra.mrb[0].mxu0 %v407
      %v465 = vpop.f32.mrb[0].mxu0
      %v466 = vadd.f32 %v366, %v465
      %v467 = vpop.f32.mrb[0].mxu0
      %v468 = vpop.f32.mrb[0].mxu0
      %v469 = vadd.f32 %v369, %v468
      %v470 = vpop.f32.mrb[0].mxu0
      %471 = vmatprep.mubr.bf16.mxu0 0
      %472 = vmatmul.mubr.bf16.gmra.mrb[0].mxu0 %v410
      %v473 = vpop.f32.mrb[0].mxu0
      %v474 = vadd.f32 %v374, %v473
      %v475 = vpop.f32.mrb[0].mxu0
      %v476 = vpop.f32.mrb[0].mxu0
      %v477 = vadd.f32 %v377, %v476
      %v478 = vpop.f32.mrb[0].mxu0
      %479 = vdwg.mxu0
      %v480 = vld [vmem:[%s250] sm:$0xf]
      %v481 = vld [vmem:[%s250 + $0x4] sm:$0x1]
      %v482 = vld [vmem:[%s250 + $0x8] sm:$0xf]
      %v483 = vld [vmem:[%s250 + $0xc] sm:$0x1]
      %v484 = vld [vmem:[%s250 + $0x10] sm:$0xf]
      %v485 = vld [vmem:[%s250 + $0x14] sm:$0x1]
      %v486 = vld [vmem:[%s250 + $0x18] sm:$0xf]
      %v487 = vld [vmem:[%s250 + $0x1c] sm:$0x1]
      %v488 = vld [vmem:[%s250 + $0x20] sm:$0xf]
      %v489 = vld [vmem:[%s250 + $0x24] sm:$0x1]
      %v490 = vld [vmem:[%s250 + $0x28] sm:$0xf]
      %v491 = vld [vmem:[%s250 + $0x2c] sm:$0x1]
      %v492 = vld [vmem:[%s250 + $0x30] sm:$0xf]
      %v493 = vld [vmem:[%s250 + $0x34] sm:$0x1]
      %v494 = vld [vmem:[%s250 + $0x38] sm:$0xf]
      %v495 = vld [vmem:[%s250 + $0x3c] sm:$0x1]
      %vm496 = vsmask.f32 3328
      %vm497 = vsmask.f32 7440
      %vm498 = vmor %vm496, %vm497
      %v500 = vshrl.u32 %v480, 16
      %v502 = vrot.slane %v500, 4
      %v503 = vshll.u32 %v480, 16
      %v505 = vrot.slane %v503, 5
      %v506 = vor.u32 %v502, %v505
      %v507 = vrot.slane %v506, 4
      %v509 = vshll.u32 %v481, 16
      %v511 = vrot.slane %v509, 5
      %v512 = vsel %vm498, %v507, %v511
      %v514 = vshrl.u32 %v482, 16
      %v516 = vrot.slane %v514, 4
      %v517 = vshll.u32 %v482, 16
      %v519 = vrot.slane %v517, 5
      %v520 = vor.u32 %v516, %v519
      %v521 = vrot.slane %v520, 4
      %v523 = vshll.u32 %v483, 16
      %v525 = vrot.slane %v523, 5
      %v526 = vsel %vm498, %v521, %v525
      %v528 = vshrl.u32 %v484, 16
      %v530 = vrot.slane %v528, 4
      %v531 = vshll.u32 %v484, 16
      %v533 = vrot.slane %v531, 5
      %v534 = vor.u32 %v530, %v533
      %v535 = vrot.slane %v534, 4
      %v537 = vshll.u32 %v485, 16
      %v539 = vrot.slane %v537, 5
      %v540 = vsel %vm498, %v535, %v539
      %v542 = vshrl.u32 %v486, 16
      %v544 = vrot.slane %v542, 4
      %v545 = vshll.u32 %v486, 16
      %v547 = vrot.slane %v545, 5
      %v548 = vor.u32 %v544, %v547
      %v549 = vrot.slane %v548, 4
      %v551 = vshll.u32 %v487, 16
      %v553 = vrot.slane %v551, 5
      %v554 = vsel %vm498, %v549, %v553
      %v556 = vshrl.u32 %v488, 16
      %v558 = vrot.slane %v556, 4
      %v559 = vshll.u32 %v488, 16
      %v561 = vrot.slane %v559, 5
      %v562 = vor.u32 %v558, %v561
      %v563 = vrot.slane %v562, 4
      %v565 = vshll.u32 %v489, 16
      %v567 = vrot.slane %v565, 5
      %v568 = vsel %vm498, %v563, %v567
      %v570 = vshrl.u32 %v490, 16
      %v572 = vrot.slane %v570, 4
      %v573 = vshll.u32 %v490, 16
      %v575 = vrot.slane %v573, 5
      %v576 = vor.u32 %v572, %v575
      %v577 = vrot.slane %v576, 4
      %v579 = vshll.u32 %v491, 16
      %v581 = vrot.slane %v579, 5
      %v582 = vsel %vm498, %v577, %v581
      %v584 = vshrl.u32 %v492, 16
      %v586 = vrot.slane %v584, 4
      %v587 = vshll.u32 %v492, 16
      %v589 = vrot.slane %v587, 5
      %v590 = vor.u32 %v586, %v589
      %v591 = vrot.slane %v590, 4
      %v593 = vshll.u32 %v493, 16
      %v595 = vrot.slane %v593, 5
      %v596 = vsel %vm498, %v591, %v595
      %v598 = vshrl.u32 %v494, 16
      %v600 = vrot.slane %v598, 4
      %v601 = vshll.u32 %v494, 16
      %v603 = vrot.slane %v601, 5
      %v604 = vor.u32 %v600, %v603
      %v605 = vrot.slane %v604, 4
      %v607 = vshll.u32 %v495, 16
      %v609 = vrot.slane %v607, 5
      %v610 = vsel %vm498, %v605, %v609
      %s611 = scalar_lea.vmem %s1, 4
      %v612 = vld [vmem:[%s611] sm:$0x3]
      %v613 = vunpack.c.l.b16 %v512
      %v614 = vunpack.c.l.b16 %v526
      %v615 = vunpack.c.l.b16 %v540
      %v616 = vunpack.c.l.b16 %v554
      %v617 = vunpack.c.l.b16 %v568
      %v618 = vunpack.c.l.b16 %v582
      %v619 = vunpack.c.l.b16 %v596
      %v620 = vunpack.c.l.b16 %v610
      %v621 = vpack.c.b16 %v614, %v613
      %v622 = vpack.c.b16 %v616, %v615
      %v623 = vpack.c.b16 %v618, %v617
      %v624 = vpack.c.b16 %v620, %v619
      %v626 = vsel %vm298, %v621, 0
      %v629 = vsel %vm298, %v622, 0
      %v632 = vsel %vm298, %v623, 0
      %v635 = vsel %vm298, %v624, 0
      %v638 = vsel %vm311, %v612, 0
      %640 = vmatprep.subr.bf16.mxu0 0
      %641 = vmatpush1.bf16.msra.mxu0 %v638
      %642 = vmatprep.subr.bf16.mxu0 0
      %643 = vmatpush1.bf16.msra.mxu0 0
      %644 = vmatprep.subr.bf16.mxu0 0
      %645 = vmatpush1.bf16.msra.mxu0 0
      %646 = vmatprep.subr.bf16.mxu0 0
      %647 = vmatpush1.bf16.msra.mxu0 0
      %648 = vmatprep.subr.bf16.mxu0 0
      %649 = vmatpush1.bf16.msra.mxu0 0
      %650 = vmatprep.subr.bf16.mxu0 0
      %651 = vmatpush1.bf16.msra.mxu0 0
      %652 = vmatprep.subr.bf16.mxu0 0
      %653 = vmatpush1.bf16.msra.mxu0 0
      %654 = vmatprep.subr.bf16.mxu0 0
      %655 = vmatpush1.bf16.msra.mxu0 0
      %656 = vmatprep.subr.bf16.mxu0 0
      %657 = vmatpush1.bf16.msra.mxu0 0
      %658 = vmatprep.subr.bf16.mxu0 0
      %659 = vmatpush1.bf16.msra.mxu0 0
      %660 = vmatprep.subr.bf16.mxu0 0
      %661 = vmatpush1.bf16.msra.mxu0 0
      %662 = vmatprep.subr.bf16.mxu0 0
      %663 = vmatpush1.bf16.msra.mxu0 0
      %664 = vmatprep.subr.bf16.mxu0 0
      %665 = vmatpush1.bf16.msra.mxu0 0
      %666 = vmatprep.subr.bf16.mxu0 0
      %667 = vmatpush1.bf16.msra.mxu0 0
      %668 = vmatprep.subr.bf16.mxu0 0
      %669 = vmatpush1.bf16.msra.mxu0 0
      %670 = vmatprep.subr.bf16.mxu0 0
      %671 = vmatpush1.bf16.msra.mxu0 0
      %672 = vmatprep.mubr.bf16.mxu0 0
      %673 = vmatmul.mubr.bf16.gmra.mrb[0].mxu0 %v626
      %v674 = vpop.f32.mrb[0].mxu0
      %v675 = vadd.f32 0.0, %v674
      %v676 = vpop.f32.mrb[0].mxu0
      %v677 = vpop.f32.mrb[0].mxu0
      %v678 = vadd.f32 0.0, %v677
      %v679 = vpop.f32.mrb[0].mxu0
      %680 = vmatprep.mubr.bf16.mxu0 0
      %681 = vmatmul.mubr.bf16.gmra.mrb[0].mxu0 %v629
      %v682 = vpop.f32.mrb[0].mxu0
      %v683 = vadd.f32 0.0, %v682
      %v684 = vpop.f32.mrb[0].mxu0
      %v685 = vpop.f32.mrb[0].mxu0
      %v686 = vadd.f32 0.0, %v685
      %v687 = vpop.f32.mrb[0].mxu0
      %688 = vmatprep.mubr.bf16.mxu0 0
      %689 = vmatmul.mubr.bf16.gmra.mrb[0].mxu0 %v632
      %v690 = vpop.f32.mrb[0].mxu0
      %v691 = vadd.f32 0.0, %v690
      %v692 = vpop.f32.mrb[0].mxu0
      %v693 = vpop.f32.mrb[0].mxu0
      %v694 = vadd.f32 0.0, %v693
      %v695 = vpop.f32.mrb[0].mxu0
      %696 = vmatprep.mubr.bf16.mxu0 0
      %697 = vmatmul.mubr.bf16.gmra.mrb[0].mxu0 %v635
      %v698 = vpop.f32.mrb[0].mxu0
      %v699 = vadd.f32 0.0, %v698
      %v700 = vpop.f32.mrb[0].mxu0
      %v701 = vpop.f32.mrb[0].mxu0
      %v702 = vadd.f32 0.0, %v701
      %v703 = vpop.f32.mrb[0].mxu0
      %704 = vdwg.mxu0
      %v705 = vadd.f32 %v450, %v675
      %v706 = vadd.f32 %v453, %v678
      %v707 = vadd.f32 %v458, %v683
      %v708 = vadd.f32 %v461, %v686
      %v709 = vadd.f32 %v466, %v691
      %v710 = vadd.f32 %v469, %v694
      %v711 = vadd.f32 %v474, %v699
      %v712 = vadd.f32 %v477, %v702
      %s713 = scalar_lea.vmem %s250, 144
      %v714 = vld [vmem:[%s713] sm:$0xf]
      %v715 = vld [vmem:[%s713 + $0x8] sm:$0xf]
      %v716 = vld [vmem:[%s713 + $0x10] sm:$0xf]
      %v717 = vld [vmem:[%s713 + $0x18] sm:$0xf]
      %v718 = vld [vmem:[%s713 + $0x20] sm:$0xf]
      %v719 = vld [vmem:[%s713 + $0x28] sm:$0xf]
      %v720 = vld [vmem:[%s713 + $0x30] sm:$0xf]
      %v721 = vld [vmem:[%s713 + $0x38] sm:$0xf]
      %s722 = scalar_lea.vmem %s1, 6
      %v723 = vld [vmem:[%s722] sm:$0x3]
      %v732 = vunpack.c.l.b16 %v714
      %v733 = vunpack.c.l.b16 %v715
      %v734 = vunpack.c.l.b16 %v716
      %v735 = vunpack.c.l.b16 %v717
      %v736 = vunpack.c.l.b16 %v718
      %v737 = vunpack.c.l.b16 %v719
      %v738 = vunpack.c.l.b16 %v720
      %v739 = vunpack.c.l.b16 %v721
      %v740 = vpack.c.b16 %v733, %v732
      %v741 = vpack.c.b16 %v735, %v734
      %v742 = vpack.c.b16 %v737, %v736
      %v743 = vpack.c.b16 %v739, %v738
      %v745 = vsel %vm298, %v740, 0
      %v748 = vsel %vm298, %v741, 0
      %v751 = vsel %vm298, %v742, 0
      %v754 = vsel %vm298, %v743, 0
      %v757 = vsel %vm311, %v723, 0
      %759 = vmatprep.subr.bf16.mxu0 0
      %760 = vmatpush1.bf16.msra.mxu0 %v757
      %761 = vmatprep.subr.bf16.mxu0 0
      %762 = vmatpush1.bf16.msra.mxu0 0
      %763 = vmatprep.subr.bf16.mxu0 0
      %764 = vmatpush1.bf16.msra.mxu0 0
      %765 = vmatprep.subr.bf16.mxu0 0
      %766 = vmatpush1.bf16.msra.mxu0 0
      %767 = vmatprep.subr.bf16.mxu0 0
      %768 = vmatpush1.bf16.msra.mxu0 0
      %769 = vmatprep.subr.bf16.mxu0 0
      %770 = vmatpush1.bf16.msra.mxu0 0
      %771 = vmatprep.subr.bf16.mxu0 0
      %772 = vmatpush1.bf16.msra.mxu0 0
      %773 = vmatprep.subr.bf16.mxu0 0
      %774 = vmatpush1.bf16.msra.mxu0 0
      %775 = vmatprep.subr.bf16.mxu0 0
      %776 = vmatpush1.bf16.msra.mxu0 0
      %777 = vmatprep.subr.bf16.mxu0 0
      %778 = vmatpush1.bf16.msra.mxu0 0
      %779 = vmatprep.subr.bf16.mxu0 0
      %780 = vmatpush1.bf16.msra.mxu0 0
      %781 = vmatprep.subr.bf16.mxu0 0
      %782 = vmatpush1.bf16.msra.mxu0 0
      %783 = vmatprep.subr.bf16.mxu0 0
      %784 = vmatpush1.bf16.msra.mxu0 0
      %785 = vmatprep.subr.bf16.mxu0 0
      %786 = vmatpush1.bf16.msra.mxu0 0
      %787 = vmatprep.subr.bf16.mxu0 0
      %788 = vmatpush1.bf16.msra.mxu0 0
      %789 = vmatprep.subr.bf16.mxu0 0
      %790 = vmatpush1.bf16.msra.mxu0 0
      %791 = vmatprep.mubr.bf16.mxu0 0
      %792 = vmatmul.mubr.bf16.gmra.mrb[0].mxu0 %v745
      %v793 = vpop.f32.mrb[0].mxu0
      %v794 = vadd.f32 0.0, %v793
      %v795 = vpop.f32.mrb[0].mxu0
      %v796 = vpop.f32.mrb[0].mxu0
      %v797 = vadd.f32 0.0, %v796
      %v798 = vpop.f32.mrb[0].mxu0
      %799 = vmatprep.mubr.bf16.mxu0 0
      %800 = vmatmul.mubr.bf16.gmra.mrb[0].mxu0 %v748
      %v801 = vpop.f32.mrb[0].mxu0
      %v802 = vadd.f32 0.0, %v801
      %v803 = vpop.f32.mrb[0].mxu0
      %v804 = vpop.f32.mrb[0].mxu0
      %v805 = vadd.f32 0.0, %v804
      %v806 = vpop.f32.mrb[0].mxu0
      %807 = vmatprep.mubr.bf16.mxu0 0
      %808 = vmatmul.mubr.bf16.gmra.mrb[0].mxu0 %v751
      %v809 = vpop.f32.mrb[0].mxu0
      %v810 = vadd.f32 0.0, %v809
      %v811 = vpop.f32.mrb[0].mxu0
      %v812 = vpop.f32.mrb[0].mxu0
      %v813 = vadd.f32 0.0, %v812
      %v814 = vpop.f32.mrb[0].mxu0
      %815 = vmatprep.mubr.bf16.mxu0 0
      %816 = vmatmul.mubr.bf16.gmra.mrb[0].mxu0 %v754
      %v817 = vpop.f32.mrb[0].mxu0
      %v818 = vadd.f32 0.0, %v817
      %v819 = vpop.f32.mrb[0].mxu0
      %v820 = vpop.f32.mrb[0].mxu0
      %v821 = vadd.f32 0.0, %v820
      %v822 = vpop.f32.mrb[0].mxu0
      %823 = vdwg.mxu0
      %v824 = vadd.f32 %v705, %v794
      %v825 = vadd.f32 %v706, %v797
      %v826 = vadd.f32 %v707, %v802
      %v827 = vadd.f32 %v708, %v805
      %v828 = vadd.f32 %v709, %v810
      %v829 = vadd.f32 %v710, %v813
      %v830 = vadd.f32 %v711, %v818
      %v831 = vadd.f32 %v712, %v821
      %s832 = scalar_lea.vmem %s250, 216
      %v833 = vld [vmem:[%s832] sm:$0xf]
      %v834 = vld [vmem:[%s832 + $0x8] sm:$0xf]
      %v835 = vld [vmem:[%s832 + $0x10] sm:$0xf]
      %v836 = vld [vmem:[%s832 + $0x18] sm:$0xf]
      %v837 = vld [vmem:[%s832 + $0x20] sm:$0xf]
      %v838 = vld [vmem:[%s832 + $0x28] sm:$0xf]
      %v839 = vld [vmem:[%s832 + $0x30] sm:$0xf]
      %v840 = vld [vmem:[%s832 + $0x38] sm:$0xf]
      %s841 = scalar_lea.vmem %s1, 8
      %v842 = vld [vmem:[%s841] sm:$0x3]
      %v851 = vunpack.c.l.b16 %v833
      %v852 = vunpack.c.l.b16 %v834
      %v853 = vunpack.c.l.b16 %v835
      %v854 = vunpack.c.l.b16 %v836
      %v855 = vunpack.c.l.b16 %v837
      %v856 = vunpack.c.l.b16 %v838
      %v857 = vunpack.c.l.b16 %v839
      %v858 = vunpack.c.l.b16 %v840
      %v859 = vpack.c.b16 %v852, %v851
      %v860 = vpack.c.b16 %v854, %v853
      %v861 = vpack.c.b16 %v856, %v855
      %v862 = vpack.c.b16 %v858, %v857
      %v864 = vsel %vm298, %v859, 0
      %v867 = vsel %vm298, %v860, 0
      %v870 = vsel %vm298, %v861, 0
      %v873 = vsel %vm298, %v862, 0
      %v876 = vsel %vm311, %v842, 0
      %878 = vmatprep.subr.bf16.mxu0 0
      %879 = vmatpush1.bf16.msra.mxu0 %v876
      %880 = vmatprep.subr.bf16.mxu0 0
      %881 = vmatpush1.bf16.msra.mxu0 0
      %882 = vmatprep.subr.bf16.mxu0 0
      %883 = vmatpush1.bf16.msra.mxu0 0
      %884 = vmatprep.subr.bf16.mxu0 0
      %885 = vmatpush1.bf16.msra.mxu0 0
      %886 = vmatprep.subr.bf16.mxu0 0
      %887 = vmatpush1.bf16.msra.mxu0 0
      %888 = vmatprep.subr.bf16.mxu0 0
      %889 = vmatpush1.bf16.msra.mxu0 0
      %890 = vmatprep.subr.bf16.mxu0 0
      %891 = vmatpush1.bf16.msra.mxu0 0
      %892 = vmatprep.subr.bf16.mxu0 0
      %893 = vmatpush1.bf16.msra.mxu0 0
      %894 = vmatprep.subr.bf16.mxu0 0
      %895 = vmatpush1.bf16.msra.mxu0 0
      %896 = vmatprep.subr.bf16.mxu0 0
      %897 = vmatpush1.bf16.msra.mxu0 0
      %898 = vmatprep.subr.bf16.mxu0 0
      %899 = vmatpush1.bf16.msra.mxu0 0
      %900 = vmatprep.subr.bf16.mxu0 0
      %901 = vmatpush1.bf16.msra.mxu0 0
      %902 = vmatprep.subr.bf16.mxu0 0
      %903 = vmatpush1.bf16.msra.mxu0 0
      %904 = vmatprep.subr.bf16.mxu0 0
      %905 = vmatpush1.bf16.msra.mxu0 0
      %906 = vmatprep.subr.bf16.mxu0 0
      %907 = vmatpush1.bf16.msra.mxu0 0
      %908 = vmatprep.subr.bf16.mxu0 0
      %909 = vmatpush1.bf16.msra.mxu0 0
      %910 = vmatprep.mubr.bf16.mxu0 0
      %911 = vmatmul.mubr.bf16.gmra.mrb[0].mxu0 %v864
      %v912 = vpop.f32.mrb[0].mxu0
      %v913 = vadd.f32 0.0, %v912
      %v914 = vpop.f32.mrb[0].mxu0
      %v915 = vpop.f32.mrb[0].mxu0
      %v916 = vadd.f32 0.0, %v915
      %v917 = vpop.f32.mrb[0].mxu0
      %918 = vmatprep.mubr.bf16.mxu0 0
      %919 = vmatmul.mubr.bf16.gmra.mrb[0].mxu0 %v867
      %v920 = vpop.f32.mrb[0].mxu0
      %v921 = vadd.f32 0.0, %v920
      %v922 = vpop.f32.mrb[0].mxu0
      %v923 = vpop.f32.mrb[0].mxu0
      %v924 = vadd.f32 0.0, %v923
      %v925 = vpop.f32.mrb[0].mxu0
      %926 = vmatprep.mubr.bf16.mxu0 0
      %927 = vmatmul.mubr.bf16.gmra.mrb[0].mxu0 %v870
      %v928 = vpop.f32.mrb[0].mxu0
      %v929 = vadd.f32 0.0, %v928
      %v930 = vpop.f32.mrb[0].mxu0
      %v931 = vpop.f32.mrb[0].mxu0
      %v932 = vadd.f32 0.0, %v931
      %v933 = vpop.f32.mrb[0].mxu0
      %934 = vmatprep.mubr.bf16.mxu0 0
      %935 = vmatmul.mubr.bf16.gmra.mrb[0].mxu0 %v873
      %v936 = vpop.f32.mrb[0].mxu0
      %v937 = vadd.f32 0.0, %v936
      %v938 = vpop.f32.mrb[0].mxu0
      %v939 = vpop.f32.mrb[0].mxu0
      %v940 = vadd.f32 0.0, %v939
      %v941 = vpop.f32.mrb[0].mxu0
      %942 = vdwg.mxu0
      %v943 = vadd.f32 %v824, %v913
      %v944 = vadd.f32 %v825, %v916
      %v945 = vadd.f32 %v826, %v921
      %v946 = vadd.f32 %v827, %v924
      %v947 = vadd.f32 %v828, %v929
      %v948 = vadd.f32 %v829, %v932
      %v949 = vadd.f32 %v830, %v937
      %v950 = vadd.f32 %v831, %v940
      %v951 = vld [vmem:[%s713] sm:$0xf]
      %v952 = vld [vmem:[%s713 + $0x4] sm:$0x1]
      %v953 = vld [vmem:[%s713 + $0x8] sm:$0xf]
      %v954 = vld [vmem:[%s713 + $0xc] sm:$0x1]
      %v955 = vld [vmem:[%s713 + $0x10] sm:$0xf]
      %v956 = vld [vmem:[%s713 + $0x14] sm:$0x1]
      %v957 = vld [vmem:[%s713 + $0x18] sm:$0xf]
      %v958 = vld [vmem:[%s713 + $0x1c] sm:$0x1]
      %v959 = vld [vmem:[%s713 + $0x20] sm:$0xf]
      %v960 = vld [vmem:[%s713 + $0x24] sm:$0x1]
      %v961 = vld [vmem:[%s713 + $0x28] sm:$0xf]
      %v962 = vld [vmem:[%s713 + $0x2c] sm:$0x1]
      %v963 = vld [vmem:[%s713 + $0x30] sm:$0xf]
      %v964 = vld [vmem:[%s713 + $0x34] sm:$0x1]
      %v965 = vld [vmem:[%s713 + $0x38] sm:$0xf]
      %v966 = vld [vmem:[%s713 + $0x3c] sm:$0x1]
      %v968 = vshrl.u32 %v951, 16
      %v970 = vrot.slane %v968, 4
      %v971 = vshll.u32 %v951, 16
      %v973 = vrot.slane %v971, 5
      %v974 = vor.u32 %v970, %v973
      %v975 = vrot.slane %v974, 4
      %v977 = vshll.u32 %v952, 16
      %v979 = vrot.slane %v977, 5
      %v980 = vsel %vm498, %v975, %v979
      %v982 = vshrl.u32 %v953, 16
      %v984 = vrot.slane %v982, 4
      %v985 = vshll.u32 %v953, 16
      %v987 = vrot.slane %v985, 5
      %v988 = vor.u32 %v984, %v987
      %v989 = vrot.slane %v988, 4
      %v991 = vshll.u32 %v954, 16
      %v993 = vrot.slane %v991, 5
      %v994 = vsel %vm498, %v989, %v993
      %v996 = vshrl.u32 %v955, 16
      %v998 = vrot.slane %v996, 4
      %v999 = vshll.u32 %v955, 16
      %v1001 = vrot.slane %v999, 5
      %v1002 = vor.u32 %v998, %v1001
      %v1003 = vrot.slane %v1002, 4
      %v1005 = vshll.u32 %v956, 16
      %v1007 = vrot.slane %v1005, 5
      %v1008 = vsel %vm498, %v1003, %v1007
      %v1010 = vshrl.u32 %v957, 16
      %v1012 = vrot.slane %v1010, 4
      %v1013 = vshll.u32 %v957, 16
      %v1015 = vrot.slane %v1013, 5
      %v1016 = vor.u32 %v1012, %v1015
      %v1017 = vrot.slane %v1016, 4
      %v1019 = vshll.u32 %v958, 16
      %v1021 = vrot.slane %v1019, 5
      %v1022 = vsel %vm498, %v1017, %v1021
      %v1024 = vshrl.u32 %v959, 16
      %v1026 = vrot.slane %v1024, 4
      %v1027 = vshll.u32 %v959, 16
      %v1029 = vrot.slane %v1027, 5
      %v1030 = vor.u32 %v1026, %v1029
      %v1031 = vrot.slane %v1030, 4
      %v1033 = vshll.u32 %v960, 16
      %v1035 = vrot.slane %v1033, 5
      %v1036 = vsel %vm498, %v1031, %v1035
      %v1038 = vshrl.u32 %v961, 16
      %v1040 = vrot.slane %v1038, 4
      %v1041 = vshll.u32 %v961, 16
      %v1043 = vrot.slane %v1041, 5
      %v1044 = vor.u32 %v1040, %v1043
      %v1045 = vrot.slane %v1044, 4
      %v1047 = vshll.u32 %v962, 16
      %v1049 = vrot.slane %v1047, 5
      %v1050 = vsel %vm498, %v1045, %v1049
      %v1052 = vshrl.u32 %v963, 16
      %v1054 = vrot.slane %v1052, 4
      %v1055 = vshll.u32 %v963, 16
      %v1057 = vrot.slane %v1055, 5
      %v1058 = vor.u32 %v1054, %v1057
      %v1059 = vrot.slane %v1058, 4
      %v1061 = vshll.u32 %v964, 16
      %v1063 = vrot.slane %v1061, 5
      %v1064 = vsel %vm498, %v1059, %v1063
      %v1066 = vshrl.u32 %v965, 16
      %v1068 = vrot.slane %v1066, 4
      %v1069 = vshll.u32 %v965, 16
      %v1071 = vrot.slane %v1069, 5
      %v1072 = vor.u32 %v1068, %v1071
      %v1073 = vrot.slane %v1072, 4
      %v1075 = vshll.u32 %v966, 16
      %v1077 = vrot.slane %v1075, 5
      %v1078 = vsel %vm498, %v1073, %v1077
      %s1079 = scalar_lea.vmem %s1, 10
      %v1080 = vld [vmem:[%s1079] sm:$0x3]
      %v1081 = vunpack.c.l.b16 %v980
      %v1082 = vunpack.c.l.b16 %v994
      %v1083 = vunpack.c.l.b16 %v1008
      %v1084 = vunpack.c.l.b16 %v1022
      %v1085 = vunpack.c.l.b16 %v1036
      %v1086 = vunpack.c.l.b16 %v1050
      %v1087 = vunpack.c.l.b16 %v1064
      %v1088 = vunpack.c.l.b16 %v1078
      %v1089 = vpack.c.b16 %v1082, %v1081
      %v1090 = vpack.c.b16 %v1084, %v1083
      %v1091 = vpack.c.b16 %v1086, %v1085
      %v1092 = vpack.c.b16 %v1088, %v1087
      %v1094 = vsel %vm298, %v1089, 0
      %v1097 = vsel %vm298, %v1090, 0
      %v1100 = vsel %vm298, %v1091, 0
      %v1103 = vsel %vm298, %v1092, 0
      %v1106 = vsel %vm311, %v1080, 0
      %1108 = vmatprep.subr.bf16.mxu0 0
      %1109 = vmatpush1.bf16.msra.mxu0 %v1106
      %1110 = vmatprep.subr.bf16.mxu0 0
      %1111 = vmatpush1.bf16.msra.mxu0 0
      %1112 = vmatprep.subr.bf16.mxu0 0
      %1113 = vmatpush1.bf16.msra.mxu0 0
      %1114 = vmatprep.subr.bf16.mxu0 0
      %1115 = vmatpush1.bf16.msra.mxu0 0
      %1116 = vmatprep.subr.bf16.mxu0 0
      %1117 = vmatpush1.bf16.msra.mxu0 0
      %1118 = vmatprep.subr.bf16.mxu0 0
      %1119 = vmatpush1.bf16.msra.mxu0 0
      %1120 = vmatprep.subr.bf16.mxu0 0
      %1121 = vmatpush1.bf16.msra.mxu0 0
      %1122 = vmatprep.subr.bf16.mxu0 0
      %1123 = vmatpush1.bf16.msra.mxu0 0
      %1124 = vmatprep.subr.bf16.mxu0 0
      %1125 = vmatpush1.bf16.msra.mxu0 0
      %1126 = vmatprep.subr.bf16.mxu0 0
      %1127 = vmatpush1.bf16.msra.mxu0 0
      %1128 = vmatprep.subr.bf16.mxu0 0
      %1129 = vmatpush1.bf16.msra.mxu0 0
      %1130 = vmatprep.subr.bf16.mxu0 0
      %1131 = vmatpush1.bf16.msra.mxu0 0
      %1132 = vmatprep.subr.bf16.mxu0 0
      %1133 = vmatpush1.bf16.msra.mxu0 0
      %1134 = vmatprep.subr.bf16.mxu0 0
      %1135 = vmatpush1.bf16.msra.mxu0 0
      %1136 = vmatprep.subr.bf16.mxu0 0
      %1137 = vmatpush1.bf16.msra.mxu0 0
      %1138 = vmatprep.subr.bf16.mxu0 0
      %1139 = vmatpush1.bf16.msra.mxu0 0
      %1140 = vmatprep.mubr.bf16.mxu0 0
      %1141 = vmatmul.mubr.bf16.gmra.mrb[0].mxu0 %v1094
      %v1142 = vpop.f32.mrb[0].mxu0
      %v1143 = vadd.f32 0.0, %v1142
      %v1144 = vpop.f32.mrb[0].mxu0
      %v1145 = vpop.f32.mrb[0].mxu0
      %v1146 = vadd.f32 0.0, %v1145
      %v1147 = vpop.f32.mrb[0].mxu0
      %1148 = vmatprep.mubr.bf16.mxu0 0
      %1149 = vmatmul.mubr.bf16.gmra.mrb[0].mxu0 %v1097
      %v1150 = vpop.f32.mrb[0].mxu0
      %v1151 = vadd.f32 0.0, %v1150
      %v1152 = vpop.f32.mrb[0].mxu0
      %v1153 = vpop.f32.mrb[0].mxu0
      %v1154 = vadd.f32 0.0, %v1153
      %v1155 = vpop.f32.mrb[0].mxu0
      %1156 = vmatprep.mubr.bf16.mxu0 0
      %1157 = vmatmul.mubr.bf16.gmra.mrb[0].mxu0 %v1100
      %v1158 = vpop.f32.mrb[0].mxu0
      %v1159 = vadd.f32 0.0, %v1158
      %v1160 = vpop.f32.mrb[0].mxu0
      %v1161 = vpop.f32.mrb[0].mxu0
      %v1162 = vadd.f32 0.0, %v1161
      %v1163 = vpop.f32.mrb[0].mxu0
      %1164 = vmatprep.mubr.bf16.mxu0 0
      %1165 = vmatmul.mubr.bf16.gmra.mrb[0].mxu0 %v1103
      %v1166 = vpop.f32.mrb[0].mxu0
      %v1167 = vadd.f32 0.0, %v1166
      %v1168 = vpop.f32.mrb[0].mxu0
      %v1169 = vpop.f32.mrb[0].mxu0
      %v1170 = vadd.f32 0.0, %v1169
      %v1171 = vpop.f32.mrb[0].mxu0
      %1172 = vdwg.mxu0
      %v1173 = vadd.f32 %v943, %v1143
      %v1174 = vadd.f32 %v944, %v1146
      %v1175 = vadd.f32 %v945, %v1151
      %v1176 = vadd.f32 %v946, %v1154
      %v1177 = vadd.f32 %v947, %v1159
      %v1178 = vadd.f32 %v948, %v1162
      %v1179 = vadd.f32 %v949, %v1167
      %v1180 = vadd.f32 %v950, %v1170
      %s1181 = scalar_lea.vmem %s250, 8
      %v1182 = vld [vmem:[%s1181] sm:$0xf]
      %v1183 = vld [vmem:[%s1181 + $0x8] sm:$0xf]
      %v1184 = vld [vmem:[%s1181 + $0x10] sm:$0xf]
      %v1185 = vld [vmem:[%s1181 + $0x18] sm:$0xf]
      %v1186 = vld [vmem:[%s1181 + $0x20] sm:$0xf]
      %v1187 = vld [vmem:[%s1181 + $0x28] sm:$0xf]
      %v1188 = vld [vmem:[%s1181 + $0x30] sm:$0xf]
      %v1189 = vld [vmem:[%s1181 + $0x38] sm:$0xf]
      %s1190 = scalar_lea.vmem %s1, 12
      %v1191 = vld [vmem:[%s1190] sm:$0x3]
      %v1200 = vunpack.c.l.b16 %v1182
      %v1201 = vunpack.c.l.b16 %v1183
      %v1202 = vunpack.c.l.b16 %v1184
      %v1203 = vunpack.c.l.b16 %v1185
      %v1204 = vunpack.c.l.b16 %v1186
      %v1205 = vunpack.c.l.b16 %v1187
      %v1206 = vunpack.c.l.b16 %v1188
      %v1207 = vunpack.c.l.b16 %v1189
      %v1208 = vpack.c.b16 %v1201, %v1200
      %v1209 = vpack.c.b16 %v1203, %v1202
      %v1210 = vpack.c.b16 %v1205, %v1204
      %v1211 = vpack.c.b16 %v1207, %v1206
      %v1213 = vsel %vm298, %v1208, 0
      %v1216 = vsel %vm298, %v1209, 0
      %v1219 = vsel %vm298, %v1210, 0
      %v1222 = vsel %vm298, %v1211, 0
      %v1225 = vsel %vm311, %v1191, 0
      %1227 = vmatprep.subr.bf16.mxu0 0
      %1228 = vmatpush1.bf16.msra.mxu0 %v1225
      %1229 = vmatprep.subr.bf16.mxu0 0
      %1230 = vmatpush1.bf16.msra.mxu0 0
      %1231 = vmatprep.subr.bf16.mxu0 0
      %1232 = vmatpush1.bf16.msra.mxu0 0
      %1233 = vmatprep.subr.bf16.mxu0 0
      %1234 = vmatpush1.bf16.msra.mxu0 0
      %1235 = vmatprep.subr.bf16.mxu0 0
      %1236 = vmatpush1.bf16.msra.mxu0 0
      %1237 = vmatprep.subr.bf16.mxu0 0
      %1238 = vmatpush1.bf16.msra.mxu0 0
      %1239 = vmatprep.subr.bf16.mxu0 0
      %1240 = vmatpush1.bf16.msra.mxu0 0
      %1241 = vmatprep.subr.bf16.mxu0 0
      %1242 = vmatpush1.bf16.msra.mxu0 0
      %1243 = vmatprep.subr.bf16.mxu0 0
      %1244 = vmatpush1.bf16.msra.mxu0 0
      %1245 = vmatprep.subr.bf16.mxu0 0
      %1246 = vmatpush1.bf16.msra.mxu0 0
      %1247 = vmatprep.subr.bf16.mxu0 0
      %1248 = vmatpush1.bf16.msra.mxu0 0
      %1249 = vmatprep.subr.bf16.mxu0 0
      %1250 = vmatpush1.bf16.msra.mxu0 0
      %1251 = vmatprep.subr.bf16.mxu0 0
      %1252 = vmatpush1.bf16.msra.mxu0 0
      %1253 = vmatprep.subr.bf16.mxu0 0
      %1254 = vmatpush1.bf16.msra.mxu0 0
      %1255 = vmatprep.subr.bf16.mxu0 0
      %1256 = vmatpush1.bf16.msra.mxu0 0
      %1257 = vmatprep.subr.bf16.mxu0 0
      %1258 = vmatpush1.bf16.msra.mxu0 0
      %1259 = vmatprep.mubr.bf16.mxu0 0
      %1260 = vmatmul.mubr.bf16.gmra.mrb[0].mxu0 %v1213
      %v1261 = vpop.f32.mrb[0].mxu0
      %v1262 = vadd.f32 0.0, %v1261
      %v1263 = vpop.f32.mrb[0].mxu0
      %v1264 = vpop.f32.mrb[0].mxu0
      %v1265 = vadd.f32 0.0, %v1264
      %v1266 = vpop.f32.mrb[0].mxu0
      %1267 = vmatprep.mubr.bf16.mxu0 0
      %1268 = vmatmul.mubr.bf16.gmra.mrb[0].mxu0 %v1216
      %v1269 = vpop.f32.mrb[0].mxu0
      %v1270 = vadd.f32 0.0, %v1269
      %v1271 = vpop.f32.mrb[0].mxu0
      %v1272 = vpop.f32.mrb[0].mxu0
      %v1273 = vadd.f32 0.0, %v1272
      %v1274 = vpop.f32.mrb[0].mxu0
      %1275 = vmatprep.mubr.bf16.mxu0 0
      %1276 = vmatmul.mubr.bf16.gmra.mrb[0].mxu0 %v1219
      %v1277 = vpop.f32.mrb[0].mxu0
      %v1278 = vadd.f32 0.0, %v1277
      %v1279 = vpop.f32.mrb[0].mxu0
      %v1280 = vpop.f32.mrb[0].mxu0
      %v1281 = vadd.f32 0.0, %v1280
      %v1282 = vpop.f32.mrb[0].mxu0
      %1283 = vmatprep.mubr.bf16.mxu0 0
      %1284 = vmatmul.mubr.bf16.gmra.mrb[0].mxu0 %v1222
      %v1285 = vpop.f32.mrb[0].mxu0
      %v1286 = vadd.f32 0.0, %v1285
      %v1287 = vpop.f32.mrb[0].mxu0
      %v1288 = vpop.f32.mrb[0].mxu0
      %v1289 = vadd.f32 0.0, %v1288
      %v1290 = vpop.f32.mrb[0].mxu0
      %1291 = vdwg.mxu0
      %v1292 = vadd.f32 %v1173, %v1262
      %v1293 = vadd.f32 %v1174, %v1265
      %v1294 = vadd.f32 %v1175, %v1270
      %v1295 = vadd.f32 %v1176, %v1273
      %v1296 = vadd.f32 %v1177, %v1278
      %v1297 = vadd.f32 %v1178, %v1281
      %v1298 = vadd.f32 %v1179, %v1286
      %v1299 = vadd.f32 %v1180, %v1289
      %s1300 = scalar_lea.vmem %s250, 80
      %v1301 = vld [vmem:[%s1300] sm:$0xf]
      %v1302 = vld [vmem:[%s1300 + $0x8] sm:$0xf]
      %v1303 = vld [vmem:[%s1300 + $0x10] sm:$0xf]
      %v1304 = vld [vmem:[%s1300 + $0x18] sm:$0xf]
      %v1305 = vld [vmem:[%s1300 + $0x20] sm:$0xf]
      %v1306 = vld [vmem:[%s1300 + $0x28] sm:$0xf]
      %v1307 = vld [vmem:[%s1300 + $0x30] sm:$0xf]
      %v1308 = vld [vmem:[%s1300 + $0x38] sm:$0xf]
      %s1309 = scalar_lea.vmem %s1, 14
      %v1310 = vld [vmem:[%s1309] sm:$0x3]
      %v1319 = vunpack.c.l.b16 %v1301
      %v1320 = vunpack.c.l.b16 %v1302
      %v1321 = vunpack.c.l.b16 %v1303
      %v1322 = vunpack.c.l.b16 %v1304
      %v1323 = vunpack.c.l.b16 %v1305
      %v1324 = vunpack.c.l.b16 %v1306
      %v1325 = vunpack.c.l.b16 %v1307
      %v1326 = vunpack.c.l.b16 %v1308
      %v1327 = vpack.c.b16 %v1320, %v1319
      %v1328 = vpack.c.b16 %v1322, %v1321
      %v1329 = vpack.c.b16 %v1324, %v1323
      %v1330 = vpack.c.b16 %v1326, %v1325
      %v1332 = vsel %vm298, %v1327, 0
      %v1335 = vsel %vm298, %v1328, 0
      %v1338 = vsel %vm298, %v1329, 0
      %v1341 = vsel %vm298, %v1330, 0
      %v1344 = vsel %vm311, %v1310, 0
      %1346 = vmatprep.subr.bf16.mxu0 0
      %1347 = vmatpush1.bf16.msra.mxu0 %v1344
      %1348 = vmatprep.subr.bf16.mxu0 0
      %1349 = vmatpush1.bf16.msra.mxu0 0
      %1350 = vmatprep.subr.bf16.mxu0 0
      %1351 = vmatpush1.bf16.msra.mxu0 0
      %1352 = vmatprep.subr.bf16.mxu0 0
      %1353 = vmatpush1.bf16.msra.mxu0 0
      %1354 = vmatprep.subr.bf16.mxu0 0
      %1355 = vmatpush1.bf16.msra.mxu0 0
      %1356 = vmatprep.subr.bf16.mxu0 0
      %1357 = vmatpush1.bf16.msra.mxu0 0
      %1358 = vmatprep.subr.bf16.mxu0 0
      %1359 = vmatpush1.bf16.msra.mxu0 0
      %1360 = vmatprep.subr.bf16.mxu0 0
      %1361 = vmatpush1.bf16.msra.mxu0 0
      %1362 = vmatprep.subr.bf16.mxu0 0
      %1363 = vmatpush1.bf16.msra.mxu0 0
      %1364 = vmatprep.subr.bf16.mxu0 0
      %1365 = vmatpush1.bf16.msra.mxu0 0
      %1366 = vmatprep.subr.bf16.mxu0 0
      %1367 = vmatpush1.bf16.msra.mxu0 0
      %1368 = vmatprep.subr.bf16.mxu0 0
      %1369 = vmatpush1.bf16.msra.mxu0 0
      %1370 = vmatprep.subr.bf16.mxu0 0
      %1371 = vmatpush1.bf16.msra.mxu0 0
      %1372 = vmatprep.subr.bf16.mxu0 0
      %1373 = vmatpush1.bf16.msra.mxu0 0
      %1374 = vmatprep.subr.bf16.mxu0 0
      %1375 = vmatpush1.bf16.msra.mxu0 0
      %1376 = vmatprep.subr.bf16.mxu0 0
      %1377 = vmatpush1.bf16.msra.mxu0 0
      %1378 = vmatprep.mubr.bf16.mxu0 0
      %1379 = vmatmul.mubr.bf16.gmra.mrb[0].mxu0 %v1332
      %v1380 = vpop.f32.mrb[0].mxu0
      %v1381 = vadd.f32 0.0, %v1380
      %v1382 = vpop.f32.mrb[0].mxu0
      %v1383 = vpop.f32.mrb[0].mxu0
      %v1384 = vadd.f32 0.0, %v1383
      %v1385 = vpop.f32.mrb[0].mxu0
      %1386 = vmatprep.mubr.bf16.mxu0 0
      %1387 = vmatmul.mubr.bf16.gmra.mrb[0].mxu0 %v1335
      %v1388 = vpop.f32.mrb[0].mxu0
      %v1389 = vadd.f32 0.0, %v1388
      %v1390 = vpop.f32.mrb[0].mxu0
      %v1391 = vpop.f32.mrb[0].mxu0
      %v1392 = vadd.f32 0.0, %v1391
      %v1393 = vpop.f32.mrb[0].mxu0
      %1394 = vmatprep.mubr.bf16.mxu0 0
      %1395 = vmatmul.mubr.bf16.gmra.mrb[0].mxu0 %v1338
      %v1396 = vpop.f32.mrb[0].mxu0
      %v1397 = vadd.f32 0.0, %v1396
      %v1398 = vpop.f32.mrb[0].mxu0
      %v1399 = vpop.f32.mrb[0].mxu0
      %v1400 = vadd.f32 0.0, %v1399
      %v1401 = vpop.f32.mrb[0].mxu0
      %1402 = vmatprep.mubr.bf16.mxu0 0
      %1403 = vmatmul.mubr.bf16.gmra.mrb[0].mxu0 %v1341
      %v1404 = vpop.f32.mrb[0].mxu0
      %v1405 = vadd.f32 0.0, %v1404
      %v1406 = vpop.f32.mrb[0].mxu0
      %v1407 = vpop.f32.mrb[0].mxu0
      %v1408 = vadd.f32 0.0, %v1407
      %v1409 = vpop.f32.mrb[0].mxu0
      %1410 = vdwg.mxu0
      %v1411 = vadd.f32 %v1292, %v1381
      %v1412 = vadd.f32 %v1293, %v1384
      %v1413 = vadd.f32 %v1294, %v1389
      %v1414 = vadd.f32 %v1295, %v1392
      %v1415 = vadd.f32 %v1296, %v1397
      %v1416 = vadd.f32 %v1297, %v1400
      %v1417 = vadd.f32 %v1298, %v1405
      %v1418 = vadd.f32 %v1299, %v1408
      %v1419 = vld [vmem:[%s1181] sm:$0xf]
      %v1420 = vld [vmem:[%s1181 + $0x4] sm:$0x1]
      %v1421 = vld [vmem:[%s1181 + $0x8] sm:$0xf]
      %v1422 = vld [vmem:[%s1181 + $0xc] sm:$0x1]
      %v1423 = vld [vmem:[%s1181 + $0x10] sm:$0xf]
      %v1424 = vld [vmem:[%s1181 + $0x14] sm:$0x1]
      %v1425 = vld [vmem:[%s1181 + $0x18] sm:$0xf]
      %v1426 = vld [vmem:[%s1181 + $0x1c] sm:$0x1]
      %v1427 = vld [vmem:[%s1181 + $0x20] sm:$0xf]
      %v1428 = vld [vmem:[%s1181 + $0x24] sm:$0x1]
      %v1429 = vld [vmem:[%s1181 + $0x28] sm:$0xf]
      %v1430 = vld [vmem:[%s1181 + $0x2c] sm:$0x1]
      %v1431 = vld [vmem:[%s1181 + $0x30] sm:$0xf]
      %v1432 = vld [vmem:[%s1181 + $0x34] sm:$0x1]
      %v1433 = vld [vmem:[%s1181 + $0x38] sm:$0xf]
      %v1434 = vld [vmem:[%s1181 + $0x3c] sm:$0x1]
      %v1436 = vshrl.u32 %v1419, 16
      %v1438 = vrot.slane %v1436, 4
      %v1439 = vshll.u32 %v1419, 16
      %v1441 = vrot.slane %v1439, 5
      %v1442 = vor.u32 %v1438, %v1441
      %v1443 = vrot.slane %v1442, 4
      %v1445 = vshll.u32 %v1420, 16
      %v1447 = vrot.slane %v1445, 5
      %v1448 = vsel %vm498, %v1443, %v1447
      %v1450 = vshrl.u32 %v1421, 16
      %v1452 = vrot.slane %v1450, 4
      %v1453 = vshll.u32 %v1421, 16
      %v1455 = vrot.slane %v1453, 5
      %v1456 = vor.u32 %v1452, %v1455
      %v1457 = vrot.slane %v1456, 4
      %v1459 = vshll.u32 %v1422, 16
      %v1461 = vrot.slane %v1459, 5
      %v1462 = vsel %vm498, %v1457, %v1461
      %v1464 = vshrl.u32 %v1423, 16
      %v1466 = vrot.slane %v1464, 4
      %v1467 = vshll.u32 %v1423, 16
      %v1469 = vrot.slane %v1467, 5
      %v1470 = vor.u32 %v1466, %v1469
      %v1471 = vrot.slane %v1470, 4
      %v1473 = vshll.u32 %v1424, 16
      %v1475 = vrot.slane %v1473, 5
      %v1476 = vsel %vm498, %v1471, %v1475
      %v1478 = vshrl.u32 %v1425, 16
      %v1480 = vrot.slane %v1478, 4
      %v1481 = vshll.u32 %v1425, 16
      %v1483 = vrot.slane %v1481, 5
      %v1484 = vor.u32 %v1480, %v1483
      %v1485 = vrot.slane %v1484, 4
      %v1487 = vshll.u32 %v1426, 16
      %v1489 = vrot.slane %v1487, 5
      %v1490 = vsel %vm498, %v1485, %v1489
      %v1492 = vshrl.u32 %v1427, 16
      %v1494 = vrot.slane %v1492, 4
      %v1495 = vshll.u32 %v1427, 16
      %v1497 = vrot.slane %v1495, 5
      %v1498 = vor.u32 %v1494, %v1497
      %v1499 = vrot.slane %v1498, 4
      %v1501 = vshll.u32 %v1428, 16
      %v1503 = vrot.slane %v1501, 5
      %v1504 = vsel %vm498, %v1499, %v1503
      %v1506 = vshrl.u32 %v1429, 16
      %v1508 = vrot.slane %v1506, 4
      %v1509 = vshll.u32 %v1429, 16
      %v1511 = vrot.slane %v1509, 5
      %v1512 = vor.u32 %v1508, %v1511
      %v1513 = vrot.slane %v1512, 4
      %v1515 = vshll.u32 %v1430, 16
      %v1517 = vrot.slane %v1515, 5
      %v1518 = vsel %vm498, %v1513, %v1517
      %v1520 = vshrl.u32 %v1431, 16
      %v1522 = vrot.slane %v1520, 4
      %v1523 = vshll.u32 %v1431, 16
      %v1525 = vrot.slane %v1523, 5
      %v1526 = vor.u32 %v1522, %v1525
      %v1527 = vrot.slane %v1526, 4
      %v1529 = vshll.u32 %v1432, 16
      %v1531 = vrot.slane %v1529, 5
      %v1532 = vsel %vm498, %v1527, %v1531
      %v1534 = vshrl.u32 %v1433, 16
      %v1536 = vrot.slane %v1534, 4
      %v1537 = vshll.u32 %v1433, 16
      %v1539 = vrot.slane %v1537, 5
      %v1540 = vor.u32 %v1536, %v1539
      %v1541 = vrot.slane %v1540, 4
      %v1543 = vshll.u32 %v1434, 16
      %v1545 = vrot.slane %v1543, 5
      %v1546 = vsel %vm498, %v1541, %v1545
      %s1547 = scalar_lea.vmem %s1, 16
      %v1548 = vld [vmem:[%s1547] sm:$0x3]
      %v1549 = vunpack.c.l.b16 %v1448
      %v1550 = vunpack.c.l.b16 %v1462
      %v1551 = vunpack.c.l.b16 %v1476
      %v1552 = vunpack.c.l.b16 %v1490
      %v1553 = vunpack.c.l.b16 %v1504
      %v1554 = vunpack.c.l.b16 %v1518
      %v1555 = vunpack.c.l.b16 %v1532
      %v1556 = vunpack.c.l.b16 %v1546
      %v1557 = vpack.c.b16 %v1550, %v1549
      %v1558 = vpack.c.b16 %v1552, %v1551
      %v1559 = vpack.c.b16 %v1554, %v1553
      %v1560 = vpack.c.b16 %v1556, %v1555
      %v1562 = vsel %vm298, %v1557, 0
      %v1565 = vsel %vm298, %v1558, 0
      %v1568 = vsel %vm298, %v1559, 0
      %v1571 = vsel %vm298, %v1560, 0
      %v1574 = vsel %vm311, %v1548, 0
      %1576 = vmatprep.subr.bf16.mxu0 0
      %1577 = vmatpush1.bf16.msra.mxu0 %v1574
      %1578 = vmatprep.subr.bf16.mxu0 0
      %1579 = vmatpush1.bf16.msra.mxu0 0
      %1580 = vmatprep.subr.bf16.mxu0 0
      %1581 = vmatpush1.bf16.msra.mxu0 0
      %1582 = vmatprep.subr.bf16.mxu0 0
      %1583 = vmatpush1.bf16.msra.mxu0 0
      %1584 = vmatprep.subr.bf16.mxu0 0
      %1585 = vmatpush1.bf16.msra.mxu0 0
      %1586 = vmatprep.subr.bf16.mxu0 0
      %1587 = vmatpush1.bf16.msra.mxu0 0
      %1588 = vmatprep.subr.bf16.mxu0 0
      %1589 = vmatpush1.bf16.msra.mxu0 0
      %1590 = vmatprep.subr.bf16.mxu0 0
      %1591 = vmatpush1.bf16.msra.mxu0 0
      %1592 = vmatprep.subr.bf16.mxu0 0
      %1593 = vmatpush1.bf16.msra.mxu0 0
      %1594 = vmatprep.subr.bf16.mxu0 0
      %1595 = vmatpush1.bf16.msra.mxu0 0
      %1596 = vmatprep.subr.bf16.mxu0 0
      %1597 = vmatpush1.bf16.msra.mxu0 0
      %1598 = vmatprep.subr.bf16.mxu0 0
      %1599 = vmatpush1.bf16.msra.mxu0 0
      %1600 = vmatprep.subr.bf16.mxu0 0
      %1601 = vmatpush1.bf16.msra.mxu0 0
      %1602 = vmatprep.subr.bf16.mxu0 0
      %1603 = vmatpush1.bf16.msra.mxu0 0
      %1604 = vmatprep.subr.bf16.mxu0 0
      %1605 = vmatpush1.bf16.msra.mxu0 0
      %1606 = vmatprep.subr.bf16.mxu0 0
      %1607 = vmatpush1.bf16.msra.mxu0 0
      %1608 = vmatprep.mubr.bf16.mxu0 0
      %1609 = vmatmul.mubr.bf16.gmra.mrb[0].mxu0 %v1562
      %v1610 = vpop.f32.mrb[0].mxu0
      %v1611 = vadd.f32 0.0, %v1610
      %v1612 = vpop.f32.mrb[0].mxu0
      %v1613 = vpop.f32.mrb[0].mxu0
      %v1614 = vadd.f32 0.0, %v1613
      %v1615 = vpop.f32.mrb[0].mxu0
      %1616 = vmatprep.mubr.bf16.mxu0 0
      %1617 = vmatmul.mubr.bf16.gmra.mrb[0].mxu0 %v1565
      %v1618 = vpop.f32.mrb[0].mxu0
      %v1619 = vadd.f32 0.0, %v1618
      %v1620 = vpop.f32.mrb[0].mxu0
      %v1621 = vpop.f32.mrb[0].mxu0
      %v1622 = vadd.f32 0.0, %v1621
      %v1623 = vpop.f32.mrb[0].mxu0
      %1624 = vmatprep.mubr.bf16.mxu0 0
      %1625 = vmatmul.mubr.bf16.gmra.mrb[0].mxu0 %v1568
      %v1626 = vpop.f32.mrb[0].mxu0
      %v1627 = vadd.f32 0.0, %v1626
      %v1628 = vpop.f32.mrb[0].mxu0
      %v1629 = vpop.f32.mrb[0].mxu0
      %v1630 = vadd.f32 0.0, %v1629
      %v1631 = vpop.f32.mrb[0].mxu0
      %1632 = vmatprep.mubr.bf16.mxu0 0
      %1633 = vmatmul.mubr.bf16.gmra.mrb[0].mxu0 %v1571
      %v1634 = vpop.f32.mrb[0].mxu0
      %v1635 = vadd.f32 0.0, %v1634
      %v1636 = vpop.f32.mrb[0].mxu0
      %v1637 = vpop.f32.mrb[0].mxu0
      %v1638 = vadd.f32 0.0, %v1637
      %v1639 = vpop.f32.mrb[0].mxu0
      %1640 = vdwg.mxu0
      %v1641 = vadd.f32 %v1411, %v1611
      %v1642 = vadd.f32 %v1412, %v1614
      %v1643 = vadd.f32 %v1413, %v1619
      %v1644 = vadd.f32 %v1414, %v1622
      %v1645 = vadd.f32 %v1415, %v1627
      %v1646 = vadd.f32 %v1416, %v1630
      %v1647 = vadd.f32 %v1417, %v1635
      %v1648 = vadd.f32 %v1418, %v1638
      %v1649 = vld [vmem:[%s2] sm:$0x1]
      %v1651 = vlaneseq
      %v1652 = vshrl.u32 %v1651, 7
      %v1653 = vsub.s32 0, %v1652
      %v1654 = vrot.slane %v1649, %v1653
      %v1656 = vadd.f32 %v1641, %v1654
      %v1657 = vadd.f32 %v1642, %v1654
      %v1658 = vadd.f32 %v1643, %v1654
      %v1659 = vadd.f32 %v1644, %v1654
      %v1660 = vadd.f32 %v1645, %v1654
      %v1661 = vadd.f32 %v1646, %v1654
      %v1662 = vadd.f32 %v1647, %v1654
      %v1663 = vadd.f32 %v1648, %v1654
      %v1664 = vmax.f32 %v1656, 0.0
      %v1665 = vmax.f32 %v1657, 0.0
      %v1666 = vmax.f32 %v1658, 0.0
      %v1667 = vmax.f32 %v1659, 0.0
      %v1668 = vmax.f32 %v1660, 0.0
      %v1669 = vmax.f32 %v1661, 0.0
      %v1670 = vmax.f32 %v1662, 0.0
      %v1671 = vmax.f32 %v1663, 0.0
      %v1672 = vpack.c.bf16 %v1665, %v1664
      %v1673 = vpack.c.bf16 %v1667, %v1666
      %v1674 = vpack.c.bf16 %v1669, %v1668
      %v1675 = vpack.c.bf16 %v1671, %v1670
      %vm1676 = vcmask 60416
      %1677 = vst.msk [vmem:[#allocation2] sm:$0xf] %vm1676, 0
      %vm1678 = vcmask 57344
      %1679 = vst.msk [vmem:[#allocation2 + $0x4] sm:$0x1] %vm1678, 0
      %1680 = vst.msk [vmem:[#allocation2 + $0x8] sm:$0xf] %vm1676, 0
      %1681 = vst.msk [vmem:[#allocation2 + $0xc] sm:$0x1] %vm1678, 0
      %1682 = vst.msk [vmem:[#allocation2 + $0x10] sm:$0xf] %vm1676, 0
      %1683 = vst.msk [vmem:[#allocation2 + $0x14] sm:$0x1] %vm1678, 0
      %1684 = vst.msk [vmem:[#allocation2 + $0x18] sm:$0xf] %vm1676, 0
      %1685 = vst.msk [vmem:[#allocation2 + $0x1c] sm:$0x1] %vm1678, 0
      %1686 = vst.msk [vmem:[#allocation2 + $0x20] sm:$0xf] %vm1676, 0
      %1687 = vst.msk [vmem:[#allocation2 + $0x24] sm:$0x1] %vm1678, 0
      %1688 = vst.msk [vmem:[#allocation2 + $0x28] sm:$0xf] %vm1676, 0
      %1689 = vst.msk [vmem:[#allocation2 + $0x2c] sm:$0x1] %vm1678, 0
      %1690 = vst.msk [vmem:[#allocation2 + $0x30] sm:$0xf] %vm1676, 0
      %1691 = vst.msk [vmem:[#allocation2 + $0x34] sm:$0x1] %vm1678, 0
      %1692 = vst.msk [vmem:[#allocation2 + $0x38] sm:$0xf] %vm1676, 0
      %1693 = vst.msk [vmem:[#allocation2 + $0x3c] sm:$0x1] %vm1678, 0
      %1694 = vst.msk [vmem:[#allocation2 + $0x40] sm:$0xf] %vm1676, 0
      %1695 = vst.msk [vmem:[#allocation2 + $0x44] sm:$0x1] %vm1678, 0
      %1696 = vst.msk [vmem:[#allocation2 + $0x48] sm:$0xf] %vm1676, 0
      %1697 = vst.msk [vmem:[#allocation2 + $0x4c] sm:$0x1] %vm1678, 0
      %v1702 = vunpack.c.l.b16 %v1672
      %v1703 = vunpack.c.h.b16 %v1672
      %v1704 = vunpack.c.l.b16 %v1673
      %v1705 = vunpack.c.h.b16 %v1673
      %v1706 = vunpack.c.l.b16 %v1674
      %v1707 = vunpack.c.h.b16 %v1674
      %v1708 = vunpack.c.l.b16 %v1675
      %v1709 = vunpack.c.h.b16 %v1675
      %v1710 = vpack.c.b16 %v1702, %v1702
      %v1711 = vpack.c.b16 %v1703, %v1703
      %v1712 = vpack.c.b16 %v1704, %v1704
      %v1713 = vpack.c.b16 %v1705, %v1705
      %v1714 = vpack.c.b16 %v1706, %v1706
      %v1715 = vpack.c.b16 %v1707, %v1707
      %v1716 = vpack.c.b16 %v1708, %v1708
      %v1717 = vpack.c.b16 %v1709, %v1709
      %v1719 = vshrl.u32 %v1710, 16
      %v1721 = vrot.slane %v1719, 7
      %v1722 = vshll.u32 %v1710, 16
      %v1724 = vor.u32 %v1721, %v1722
      %v1725 = vrot.slane %v1721, 4
      %v1727 = vshrl.u32 %v1711, 16
      %v1729 = vrot.slane %v1727, 7
      %v1730 = vshll.u32 %v1711, 16
      %v1732 = vor.u32 %v1729, %v1730
      %v1733 = vrot.slane %v1729, 4
      %v1735 = vshrl.u32 %v1712, 16
      %v1737 = vrot.slane %v1735, 7
      %v1738 = vshll.u32 %v1712, 16
      %v1740 = vor.u32 %v1737, %v1738
      %v1741 = vrot.slane %v1737, 4
      %v1743 = vshrl.u32 %v1713, 16
      %v1745 = vrot.slane %v1743, 7
      %v1746 = vshll.u32 %v1713, 16
      %v1748 = vor.u32 %v1745, %v1746
      %v1749 = vrot.slane %v1745, 4
      %v1751 = vshrl.u32 %v1714, 16
      %v1753 = vrot.slane %v1751, 7
      %v1754 = vshll.u32 %v1714, 16
      %v1756 = vor.u32 %v1753, %v1754
      %v1757 = vrot.slane %v1753, 4
      %v1759 = vshrl.u32 %v1715, 16
      %v1761 = vrot.slane %v1759, 7
      %v1762 = vshll.u32 %v1715, 16
      %v1764 = vor.u32 %v1761, %v1762
      %v1765 = vrot.slane %v1761, 4
      %v1767 = vshrl.u32 %v1716, 16
      %v1769 = vrot.slane %v1767, 7
      %v1770 = vshll.u32 %v1716, 16
      %v1772 = vor.u32 %v1769, %v1770
      %v1773 = vrot.slane %v1769, 4
      %v1775 = vshrl.u32 %v1717, 16
      %v1777 = vrot.slane %v1775, 7
      %v1778 = vshll.u32 %v1717, 16
      %v1780 = vor.u32 %v1777, %v1778
      %v1781 = vrot.slane %v1777, 4
      %s1798 = scalar_lea.vmem [#allocation2], 8
      %vm1799 = vcmask 60416
      %vm1800 = vsmask.f32 7938
      %vm1801 = vmand %vm1799, %vm1800
      %v1802 = vld [vmem:[%s1798] sm:$0xf]
      %v1803 = vsel %vm1801, %v1724, %v1802
      %1804 = vst [vmem:[%s1798] sm:$0xf] %v1803
      %vm1805 = vcmask 57344
      %vm1806 = vsmask.f32 256
      %vm1807 = vmand %vm1805, %vm1806
      %v1808 = vld [vmem:[%s1798 + $0x4] sm:$0x1]
      %v1809 = vsel %vm1807, %v1725, %v1808
      %1810 = vst [vmem:[%s1798 + $0x4] sm:$0x1] %v1809
      %v1811 = vld [vmem:[%s1798 + $0x8] sm:$0xf]
      %v1812 = vsel %vm1801, %v1732, %v1811
      %1813 = vst [vmem:[%s1798 + $0x8] sm:$0xf] %v1812
      %v1814 = vld [vmem:[%s1798 + $0xc] sm:$0x1]
      %v1815 = vsel %vm1807, %v1733, %v1814
      %1816 = vst [vmem:[%s1798 + $0xc] sm:$0x1] %v1815
      %v1817 = vld [vmem:[%s1798 + $0x10] sm:$0xf]
      %v1818 = vsel %vm1801, %v1740, %v1817
      %1819 = vst [vmem:[%s1798 + $0x10] sm:$0xf] %v1818
      %v1820 = vld [vmem:[%s1798 + $0x14] sm:$0x1]
      %v1821 = vsel %vm1807, %v1741, %v1820
      %1822 = vst [vmem:[%s1798 + $0x14] sm:$0x1] %v1821
      %v1823 = vld [vmem:[%s1798 + $0x18] sm:$0xf]
      %v1824 = vsel %vm1801, %v1748, %v1823
      %1825 = vst [vmem:[%s1798 + $0x18] sm:$0xf] %v1824
      %v1826 = vld [vmem:[%s1798 + $0x1c] sm:$0x1]
      %v1827 = vsel %vm1807, %v1749, %v1826
      %1828 = vst [vmem:[%s1798 + $0x1c] sm:$0x1] %v1827
      %v1829 = vld [vmem:[%s1798 + $0x20] sm:$0xf]
      %v1830 = vsel %vm1801, %v1756, %v1829
      %1831 = vst [vmem:[%s1798 + $0x20] sm:$0xf] %v1830
      %v1832 = vld [vmem:[%s1798 + $0x24] sm:$0x1]
      %v1833 = vsel %vm1807, %v1757, %v1832
      %1834 = vst [vmem:[%s1798 + $0x24] sm:$0x1] %v1833
      %v1835 = vld [vmem:[%s1798 + $0x28] sm:$0xf]
      %v1836 = vsel %vm1801, %v1764, %v1835
      %1837 = vst [vmem:[%s1798 + $0x28] sm:$0xf] %v1836
      %v1838 = vld [vmem:[%s1798 + $0x2c] sm:$0x1]
      %v1839 = vsel %vm1807, %v1765, %v1838
      %1840 = vst [vmem:[%s1798 + $0x2c] sm:$0x1] %v1839
      %v1841 = vld [vmem:[%s1798 + $0x30] sm:$0xf]
      %v1842 = vsel %vm1801, %v1772, %v1841
      %1843 = vst [vmem:[%s1798 + $0x30] sm:$0xf] %v1842
      %v1844 = vld [vmem:[%s1798 + $0x34] sm:$0x1]
      %v1845 = vsel %vm1807, %v1773, %v1844
      %1846 = vst [vmem:[%s1798 + $0x34] sm:$0x1] %v1845
      %v1847 = vld [vmem:[%s1798 + $0x38] sm:$0xf]
      %v1848 = vsel %vm1801, %v1780, %v1847
      %1849 = vst [vmem:[%s1798 + $0x38] sm:$0xf] %v1848
      %v1850 = vld [vmem:[%s1798 + $0x3c] sm:$0x1]
      %v1851 = vsel %vm1807, %v1781, %v1850
      %1852 = vst [vmem:[%s1798 + $0x3c] sm:$0x1] %v1851
      %v1853 = vld [vmem:[#allocation2] sm:$0xf]
      %v1854 = vld [vmem:[#allocation2 + $0x8] sm:$0xf]
      %v1855 = vld [vmem:[#allocation2 + $0x10] sm:$0xf]
      %v1856 = vld [vmem:[#allocation2 + $0x18] sm:$0xf]
      %v1857 = vld [vmem:[#allocation2 + $0x20] sm:$0xf]
      %v1858 = vld [vmem:[#allocation2 + $0x28] sm:$0xf]
      %v1859 = vld [vmem:[#allocation2 + $0x30] sm:$0xf]
      %v1860 = vld [vmem:[#allocation2 + $0x38] sm:$0xf]
      %v1861 = vld [vmem:[%s3] sm:$0xf]
      %v1862 = vld [vmem:[#allocation2 + $0x4] sm:$0x1]
      %v1863 = vld [vmem:[#allocation2 + $0xc] sm:$0x1]
      %v1864 = vld [vmem:[#allocation2 + $0x14] sm:$0x1]
      %v1865 = vld [vmem:[#allocation2 + $0x1c] sm:$0x1]
      %v1866 = vld [vmem:[#allocation2 + $0x24] sm:$0x1]
      %v1867 = vld [vmem:[#allocation2 + $0x2c] sm:$0x1]
      %v1868 = vld [vmem:[#allocation2 + $0x34] sm:$0x1]
      %v1869 = vld [vmem:[#allocation2 + $0x3c] sm:$0x1]
      %v1871 = vshrl.u32 %v1853, 16
      %v1873 = vrot.slane %v1871, 4
      %v1874 = vshll.u32 %v1853, 16
      %v1876 = vrot.slane %v1874, 5
      %v1877 = vor.u32 %v1873, %v1876
      %v1878 = vrot.slane %v1877, 4
      %v1880 = vshll.u32 %v1862, 16
      %v1882 = vrot.slane %v1880, 5
      %v1883 = vsel %vm498, %v1878, %v1882
      %v1885 = vshrl.u32 %v1854, 16
      %v1887 = vrot.slane %v1885, 4
      %v1888 = vshll.u32 %v1854, 16
      %v1890 = vrot.slane %v1888, 5
      %v1891 = vor.u32 %v1887, %v1890
      %v1892 = vrot.slane %v1891, 4
      %v1894 = vshll.u32 %v1863, 16
      %v1896 = vrot.slane %v1894, 5
      %v1897 = vsel %vm498, %v1892, %v1896
      %v1899 = vshrl.u32 %v1855, 16
      %v1901 = vrot.slane %v1899, 4
      %v1902 = vshll.u32 %v1855, 16
      %v1904 = vrot.slane %v1902, 5
      %v1905 = vor.u32 %v1901, %v1904
      %v1906 = vrot.slane %v1905, 4
      %v1908 = vshll.u32 %v1864, 16
      %v1910 = vrot.slane %v1908, 5
      %v1911 = vsel %vm498, %v1906, %v1910
      %v1913 = vshrl.u32 %v1856, 16
      %v1915 = vrot.slane %v1913, 4
      %v1916 = vshll.u32 %v1856, 16
      %v1918 = vrot.slane %v1916, 5
      %v1919 = vor.u32 %v1915, %v1918
      %v1920 = vrot.slane %v1919, 4
      %v1922 = vshll.u32 %v1865, 16
      %v1924 = vrot.slane %v1922, 5
      %v1925 = vsel %vm498, %v1920, %v1924
      %v1927 = vshrl.u32 %v1857, 16
      %v1929 = vrot.slane %v1927, 4
      %v1930 = vshll.u32 %v1857, 16
      %v1932 = vrot.slane %v1930, 5
      %v1933 = vor.u32 %v1929, %v1932
      %v1934 = vrot.slane %v1933, 4
      %v1936 = vshll.u32 %v1866, 16
      %v1938 = vrot.slane %v1936, 5
      %v1939 = vsel %vm498, %v1934, %v1938
      %v1941 = vshrl.u32 %v1858, 16
      %v1943 = vrot.slane %v1941, 4
      %v1944 = vshll.u32 %v1858, 16
      %v1946 = vrot.slane %v1944, 5
      %v1947 = vor.u32 %v1943, %v1946
      %v1948 = vrot.slane %v1947, 4
      %v1950 = vshll.u32 %v1867, 16
      %v1952 = vrot.slane %v1950, 5
      %v1953 = vsel %vm498, %v1948, %v1952
      %v1955 = vshrl.u32 %v1859, 16
      %v1957 = vrot.slane %v1955, 4
      %v1958 = vshll.u32 %v1859, 16
      %v1960 = vrot.slane %v1958, 5
      %v1961 = vor.u32 %v1957, %v1960
      %v1962 = vrot.slane %v1961, 4
      %v1964 = vshll.u32 %v1868, 16
      %v1966 = vrot.slane %v1964, 5
      %v1967 = vsel %vm498, %v1962, %v1966
      %v1969 = vshrl.u32 %v1860, 16
      %v1971 = vrot.slane %v1969, 4
      %v1972 = vshll.u32 %v1860, 16
      %v1974 = vrot.slane %v1972, 5
      %v1975 = vor.u32 %v1971, %v1974
      %v1976 = vrot.slane %v1975, 4
      %v1978 = vshll.u32 %v1869, 16
      %v1980 = vrot.slane %v1978, 5
      %v1981 = vsel %vm498, %v1976, %v1980
      %s1982 = scalar_lea.vmem %s3, 4
      %v1983 = vld [vmem:[%s1982] sm:$0xf]
      %v1984 = vunpack.c.l.b16 %v1883
      %v1985 = vunpack.c.l.b16 %v1897
      %v1986 = vunpack.c.l.b16 %v1911
      %v1987 = vunpack.c.l.b16 %v1925
      %v1988 = vunpack.c.l.b16 %v1939
      %v1989 = vunpack.c.l.b16 %v1953
      %v1990 = vunpack.c.l.b16 %v1967
      %v1991 = vunpack.c.l.b16 %v1981
      %v1992 = vpack.c.b16 %v1985, %v1984
      %v1993 = vpack.c.b16 %v1987, %v1986
      %v1994 = vpack.c.b16 %v1989, %v1988
      %v1995 = vpack.c.b16 %v1991, %v1990
      %vm1996 = vcmask 64512
      %v1998 = vsel %vm1996, %v1992, 0
      %v2001 = vsel %vm1996, %v1993, 0
      %v2004 = vsel %vm1996, %v1994, 0
      %v2007 = vsel %vm1996, %v1995, 0
      %vm2009 = vcmask 1043456
      %v2011 = vsel %vm2009, %v1983, 0
      %2013 = vmatprep.subr.bf16.mxu0 0
      %2014 = vmatpush1.bf16.msra.mxu0 %v2011
      %2015 = vmatprep.subr.bf16.mxu0 0
      %2016 = vmatpush1.bf16.msra.mxu0 0
      %2017 = vmatprep.subr.bf16.mxu0 0
      %2018 = vmatpush1.bf16.msra.mxu0 0
      %2019 = vmatprep.subr.bf16.mxu0 0
      %2020 = vmatpush1.bf16.msra.mxu0 0
      %2021 = vmatprep.subr.bf16.mxu0 0
      %2022 = vmatpush1.bf16.msra.mxu0 0
      %2023 = vmatprep.subr.bf16.mxu0 0
      %2024 = vmatpush1.bf16.msra.mxu0 0
      %2025 = vmatprep.subr.bf16.mxu0 0
      %2026 = vmatpush1.bf16.msra.mxu0 0
      %2027 = vmatprep.subr.bf16.mxu0 0
      %2028 = vmatpush1.bf16.msra.mxu0 0
      %2029 = vmatprep.subr.bf16.mxu0 0
      %2030 = vmatpush1.bf16.msra.mxu0 0
      %2031 = vmatprep.subr.bf16.mxu0 0
      %2032 = vmatpush1.bf16.msra.mxu0 0
      %2033 = vmatprep.subr.bf16.mxu0 0
      %2034 = vmatpush1.bf16.msra.mxu0 0
      %2035 = vmatprep.subr.bf16.mxu0 0
      %2036 = vmatpush1.bf16.msra.mxu0 0
      %2037 = vmatprep.subr.bf16.mxu0 0
      %2038 = vmatpush1.bf16.msra.mxu0 0
      %2039 = vmatprep.subr.bf16.mxu0 0
      %2040 = vmatpush1.bf16.msra.mxu0 0
      %2041 = vmatprep.subr.bf16.mxu0 0
      %2042 = vmatpush1.bf16.msra.mxu0 0
      %2043 = vmatprep.subr.bf16.mxu0 0
      %2044 = vmatpush1.bf16.msra.mxu0 0
      %2045 = vmatprep.mubr.bf16.mxu0 0
      %2046 = vmatmul.mubr.bf16.gmra.mrb[0].mxu0 %v1998
      %v2047 = vpop.f32.mrb[0].mxu0
      %v2048 = vadd.f32 0.0, %v2047
      %v2049 = vpop.f32.mrb[0].mxu0
      %v2050 = vpop.f32.mrb[0].mxu0
      %v2051 = vadd.f32 0.0, %v2050
      %v2052 = vpop.f32.mrb[0].mxu0
      %2053 = vmatprep.mubr.bf16.mxu0 0
      %2054 = vmatmul.mubr.bf16.gmra.mrb[0].mxu0 %v2001
      %v2055 = vpop.f32.mrb[0].mxu0
      %v2056 = vadd.f32 0.0, %v2055
      %v2057 = vpop.f32.mrb[0].mxu0
      %v2058 = vpop.f32.mrb[0].mxu0
      %v2059 = vadd.f32 0.0, %v2058
      %v2060 = vpop.f32.mrb[0].mxu0
      %2061 = vmatprep.mubr.bf16.mxu0 0
      %2062 = vmatmul.mubr.bf16.gmra.mrb[0].mxu0 %v2004
      %v2063 = vpop.f32.mrb[0].mxu0
      %v2064 = vadd.f32 0.0, %v2063
      %v2065 = vpop.f32.mrb[0].mxu0
      %v2066 = vpop.f32.mrb[0].mxu0
      %v2067 = vadd.f32 0.0, %v2066
      %v2068 = vpop.f32.mrb[0].mxu0
      %2069 = vmatprep.mubr.bf16.mxu0 0
      %2070 = vmatmul.mubr.bf16.gmra.mrb[0].mxu0 %v2007
      %v2071 = vpop.f32.mrb[0].mxu0
      %v2072 = vadd.f32 0.0, %v2071
      %v2073 = vpop.f32.mrb[0].mxu0
      %v2074 = vpop.f32.mrb[0].mxu0
      %v2075 = vadd.f32 0.0, %v2074
      %v2076 = vpop.f32.mrb[0].mxu0
      %2077 = vdwg.mxu0
      %v2086 = vunpack.c.l.b16 %v1853
      %v2087 = vunpack.c.l.b16 %v1854
      %v2088 = vunpack.c.l.b16 %v1855
      %v2089 = vunpack.c.l.b16 %v1856
      %v2090 = vunpack.c.l.b16 %v1857
      %v2091 = vunpack.c.l.b16 %v1858
      %v2092 = vunpack.c.l.b16 %v1859
      %v2093 = vunpack.c.l.b16 %v1860
      %v2094 = vpack.c.b16 %v2087, %v2086
      %v2095 = vpack.c.b16 %v2089, %v2088
      %v2096 = vpack.c.b16 %v2091, %v2090
      %v2097 = vpack.c.b16 %v2093, %v2092
      %v2099 = vsel %vm1996, %v2094, 0
      %v2102 = vsel %vm1996, %v2095, 0
      %v2105 = vsel %vm1996, %v2096, 0
      %v2108 = vsel %vm1996, %v2097, 0
      %v2111 = vsel %vm2009, %v1861, 0
      %2113 = vmatprep.subr.bf16.mxu0 0
      %2114 = vmatpush1.bf16.msra.mxu0 %v2111
      %2115 = vmatprep.subr.bf16.mxu0 0
      %2116 = vmatpush1.bf16.msra.mxu0 0
      %2117 = vmatprep.subr.bf16.mxu0 0
      %2118 = vmatpush1.bf16.msra.mxu0 0
      %2119 = vmatprep.subr.bf16.mxu0 0
      %2120 = vmatpush1.bf16.msra.mxu0 0
      %2121 = vmatprep.subr.bf16.mxu0 0
      %2122 = vmatpush1.bf16.msra.mxu0 0
      %2123 = vmatprep.subr.bf16.mxu0 0
      %2124 = vmatpush1.bf16.msra.mxu0 0
      %2125 = vmatprep.subr.bf16.mxu0 0
      %2126 = vmatpush1.bf16.msra.mxu0 0
      %2127 = vmatprep.subr.bf16.mxu0 0
      %2128 = vmatpush1.bf16.msra.mxu0 0
      %2129 = vmatprep.subr.bf16.mxu0 0
      %2130 = vmatpush1.bf16.msra.mxu0 0
      %2131 = vmatprep.subr.bf16.mxu0 0
      %2132 = vmatpush1.bf16.msra.mxu0 0
      %2133 = vmatprep.subr.bf16.mxu0 0
      %2134 = vmatpush1.bf16.msra.mxu0 0
      %2135 = vmatprep.subr.bf16.mxu0 0
      %2136 = vmatpush1.bf16.msra.mxu0 0
      %2137 = vmatprep.subr.bf16.mxu0 0
      %2138 = vmatpush1.bf16.msra.mxu0 0
      %2139 = vmatprep.subr.bf16.mxu0 0
      %2140 = vmatpush1.bf16.msra.mxu0 0
      %2141 = vmatprep.subr.bf16.mxu0 0
      %2142 = vmatpush1.bf16.msra.mxu0 0
      %2143 = vmatprep.subr.bf16.mxu0 0
      %2144 = vmatpush1.bf16.msra.mxu0 0
      %2145 = vmatprep.mubr.bf16.mxu0 0
      %2146 = vmatmul.mubr.bf16.gmra.mrb[0].mxu0 %v2099
      %v2147 = vpop.f32.mrb[0].mxu0
      %v2148 = vadd.f32 %v2048, %v2147
      %v2149 = vpop.f32.mrb[0].mxu0
      %v2150 = vpop.f32.mrb[0].mxu0
      %v2151 = vadd.f32 %v2051, %v2150
      %v2152 = vpop.f32.mrb[0].mxu0
      %2153 = vmatprep.mubr.bf16.mxu0 0
      %2154 = vmatmul.mubr.bf16.gmra.mrb[0].mxu0 %v2102
      %v2155 = vpop.f32.mrb[0].mxu0
      %v2156 = vadd.f32 %v2056, %v2155
      %v2157 = vpop.f32.mrb[0].mxu0
      %v2158 = vpop.f32.mrb[0].mxu0
      %v2159 = vadd.f32 %v2059, %v2158
      %v2160 = vpop.f32.mrb[0].mxu0
      %2161 = vmatprep.mubr.bf16.mxu0 0
      %2162 = vmatmul.mubr.bf16.gmra.mrb[0].mxu0 %v2105
      %v2163 = vpop.f32.mrb[0].mxu0
      %v2164 = vadd.f32 %v2064, %v2163
      %v2165 = vpop.f32.mrb[0].mxu0
      %v2166 = vpop.f32.mrb[0].mxu0
      %v2167 = vadd.f32 %v2067, %v2166
      %v2168 = vpop.f32.mrb[0].mxu0
      %2169 = vmatprep.mubr.bf16.mxu0 0
      %2170 = vmatmul.mubr.bf16.gmra.mrb[0].mxu0 %v2108
      %v2171 = vpop.f32.mrb[0].mxu0
      %v2172 = vadd.f32 %v2072, %v2171
      %v2173 = vpop.f32.mrb[0].mxu0
      %v2174 = vpop.f32.mrb[0].mxu0
      %v2175 = vadd.f32 %v2075, %v2174
      %v2176 = vpop.f32.mrb[0].mxu0
      %2177 = vdwg.mxu0
      %v2178 = vld [vmem:[#allocation2] sm:$0xe]
      %v2179 = vld [vmem:[#allocation2 + $0x8] sm:$0xe]
      %v2180 = vld [vmem:[#allocation2 + $0x10] sm:$0xe]
      %v2181 = vld [vmem:[#allocation2 + $0x18] sm:$0xe]
      %v2182 = vld [vmem:[#allocation2 + $0x20] sm:$0xe]
      %v2183 = vld [vmem:[#allocation2 + $0x28] sm:$0xe]
      %v2184 = vld [vmem:[#allocation2 + $0x30] sm:$0xe]
      %v2185 = vld [vmem:[#allocation2 + $0x38] sm:$0xe]
      %vm2202 = vcmask 1042432
      %vm2203 = vcmask 1046532
      %vm2204 = vmor %vm2202, %vm2203
      %v2205 = vrot.slane %v2178, 5
      %v2206 = vrot.slane %v2205, 4
      %v2207 = vrot.slane %v1862, 5
      %v2208 = vsel %vm2204, %v2206, %v2207
      %v2209 = vrot.slane %v2179, 5
      %v2210 = vrot.slane %v2209, 4
      %v2211 = vrot.slane %v1863, 5
      %v2212 = vsel %vm2204, %v2210, %v2211
      %v2213 = vrot.slane %v2180, 5
      %v2214 = vrot.slane %v2213, 4
      %v2215 = vrot.slane %v1864, 5
      %v2216 = vsel %vm2204, %v2214, %v2215
      %v2217 = vrot.slane %v2181, 5
      %v2218 = vrot.slane %v2217, 4
      %v2219 = vrot.slane %v1865, 5
      %v2220 = vsel %vm2204, %v2218, %v2219
      %v2221 = vrot.slane %v2182, 5
      %v2222 = vrot.slane %v2221, 4
      %v2223 = vrot.slane %v1866, 5
      %v2224 = vsel %vm2204, %v2222, %v2223
      %v2225 = vrot.slane %v2183, 5
      %v2226 = vrot.slane %v2225, 4
      %v2227 = vrot.slane %v1867, 5
      %v2228 = vsel %vm2204, %v2226, %v2227
      %v2229 = vrot.slane %v2184, 5
      %v2230 = vrot.slane %v2229, 4
      %v2231 = vrot.slane %v1868, 5
      %v2232 = vsel %vm2204, %v2230, %v2231
      %v2233 = vrot.slane %v2185, 5
      %v2234 = vrot.slane %v2233, 4
      %v2235 = vrot.slane %v1869, 5
      %v2236 = vsel %vm2204, %v2234, %v2235
      %s2237 = scalar_lea.vmem %s3, 8
      %v2238 = vld [vmem:[%s2237] sm:$0xf]
      %v2239 = vunpack.c.l.b16 %v2208
      %v2240 = vunpack.c.l.b16 %v2212
      %v2241 = vunpack.c.l.b16 %v2216
      %v2242 = vunpack.c.l.b16 %v2220
      %v2243 = vunpack.c.l.b16 %v2224
      %v2244 = vunpack.c.l.b16 %v2228
      %v2245 = vunpack.c.l.b16 %v2232
      %v2246 = vunpack.c.l.b16 %v2236
      %v2247 = vpack.c.b16 %v2240, %v2239
      %v2248 = vpack.c.b16 %v2242, %v2241
      %v2249 = vpack.c.b16 %v2244, %v2243
      %v2250 = vpack.c.b16 %v2246, %v2245
      %v2252 = vsel %vm1996, %v2247, 0
      %v2255 = vsel %vm1996, %v2248, 0
      %v2258 = vsel %vm1996, %v2249, 0
      %v2261 = vsel %vm1996, %v2250, 0
      %v2264 = vsel %vm2009, %v2238, 0
      %2266 = vmatprep.subr.bf16.mxu0 0
      %2267 = vmatpush1.bf16.msra.mxu0 %v2264
      %2268 = vmatprep.subr.bf16.mxu0 0
      %2269 = vmatpush1.bf16.msra.mxu0 0
      %2270 = vmatprep.subr.bf16.mxu0 0
      %2271 = vmatpush1.bf16.msra.mxu0 0
      %2272 = vmatprep.subr.bf16.mxu0 0
      %2273 = vmatpush1.bf16.msra.mxu0 0
      %2274 = vmatprep.subr.bf16.mxu0 0
      %2275 = vmatpush1.bf16.msra.mxu0 0
      %2276 = vmatprep.subr.bf16.mxu0 0
      %2277 = vmatpush1.bf16.msra.mxu0 0
      %2278 = vmatprep.subr.bf16.mxu0 0
      %2279 = vmatpush1.bf16.msra.mxu0 0
      %2280 = vmatprep.subr.bf16.mxu0 0
      %2281 = vmatpush1.bf16.msra.mxu0 0
      %2282 = vmatprep.subr.bf16.mxu0 0
      %2283 = vmatpush1.bf16.msra.mxu0 0
      %2284 = vmatprep.subr.bf16.mxu0 0
      %2285 = vmatpush1.bf16.msra.mxu0 0
      %2286 = vmatprep.subr.bf16.mxu0 0
      %2287 = vmatpush1.bf16.msra.mxu0 0
      %2288 = vmatprep.subr.bf16.mxu0 0
      %2289 = vmatpush1.bf16.msra.mxu0 0
      %2290 = vmatprep.subr.bf16.mxu0 0
      %2291 = vmatpush1.bf16.msra.mxu0 0
      %2292 = vmatprep.subr.bf16.mxu0 0
      %2293 = vmatpush1.bf16.msra.mxu0 0
      %2294 = vmatprep.subr.bf16.mxu0 0
      %2295 = vmatpush1.bf16.msra.mxu0 0
      %2296 = vmatprep.subr.bf16.mxu0 0
      %2297 = vmatpush1.bf16.msra.mxu0 0
      %2298 = vmatprep.mubr.bf16.mxu0 0
      %2299 = vmatmul.mubr.bf16.gmra.mrb[0].mxu0 %v2252
      %v2300 = vpop.f32.mrb[0].mxu0
      %v2301 = vadd.f32 0.0, %v2300
      %v2302 = vpop.f32.mrb[0].mxu0
      %v2303 = vpop.f32.mrb[0].mxu0
      %v2304 = vadd.f32 0.0, %v2303
      %v2305 = vpop.f32.mrb[0].mxu0
      %2306 = vmatprep.mubr.bf16.mxu0 0
      %2307 = vmatmul.mubr.bf16.gmra.mrb[0].mxu0 %v2255
      %v2308 = vpop.f32.mrb[0].mxu0
      %v2309 = vadd.f32 0.0, %v2308
      %v2310 = vpop.f32.mrb[0].mxu0
      %v2311 = vpop.f32.mrb[0].mxu0
      %v2312 = vadd.f32 0.0, %v2311
      %v2313 = vpop.f32.mrb[0].mxu0
      %2314 = vmatprep.mubr.bf16.mxu0 0
      %2315 = vmatmul.mubr.bf16.gmra.mrb[0].mxu0 %v2258
      %v2316 = vpop.f32.mrb[0].mxu0
      %v2317 = vadd.f32 0.0, %v2316
      %v2318 = vpop.f32.mrb[0].mxu0
      %v2319 = vpop.f32.mrb[0].mxu0
      %v2320 = vadd.f32 0.0, %v2319
      %v2321 = vpop.f32.mrb[0].mxu0
      %2322 = vmatprep.mubr.bf16.mxu0 0
      %2323 = vmatmul.mubr.bf16.gmra.mrb[0].mxu0 %v2261
      %v2324 = vpop.f32.mrb[0].mxu0
      %v2325 = vadd.f32 0.0, %v2324
      %v2326 = vpop.f32.mrb[0].mxu0
      %v2327 = vpop.f32.mrb[0].mxu0
      %v2328 = vadd.f32 0.0, %v2327
      %v2329 = vpop.f32.mrb[0].mxu0
      %2330 = vdwg.mxu0
      %v2331 = vadd.f32 %v2148, %v2301
      %v2332 = vadd.f32 %v2151, %v2304
      %v2333 = vadd.f32 %v2156, %v2309
      %v2334 = vadd.f32 %v2159, %v2312
      %v2335 = vadd.f32 %v2164, %v2317
      %v2336 = vadd.f32 %v2167, %v2320
      %v2337 = vadd.f32 %v2172, %v2325
      %v2338 = vadd.f32 %v2175, %v2328
      %v2339 = vld [vmem:[%s1798] sm:$0xf]
      %v2340 = vld [vmem:[%s1798 + $0x8] sm:$0xf]
      %v2341 = vld [vmem:[%s1798 + $0x10] sm:$0xf]
      %v2342 = vld [vmem:[%s1798 + $0x18] sm:$0xf]
      %v2343 = vld [vmem:[%s1798 + $0x20] sm:$0xf]
      %v2344 = vld [vmem:[%s1798 + $0x28] sm:$0xf]
      %v2345 = vld [vmem:[%s1798 + $0x30] sm:$0xf]
      %v2346 = vld [vmem:[%s1798 + $0x38] sm:$0xf]
      %s2347 = scalar_lea.vmem %s3, 12
      %v2348 = vld [vmem:[%s2347] sm:$0xf]
      %v2357 = vunpack.c.l.b16 %v2339
      %v2358 = vunpack.c.l.b16 %v2340
      %v2359 = vunpack.c.l.b16 %v2341
      %v2360 = vunpack.c.l.b16 %v2342
      %v2361 = vunpack.c.l.b16 %v2343
      %v2362 = vunpack.c.l.b16 %v2344
      %v2363 = vunpack.c.l.b16 %v2345
      %v2364 = vunpack.c.l.b16 %v2346
      %v2365 = vpack.c.b16 %v2358, %v2357
      %v2366 = vpack.c.b16 %v2360, %v2359
      %v2367 = vpack.c.b16 %v2362, %v2361
      %v2368 = vpack.c.b16 %v2364, %v2363
      %v2370 = vsel %vm1996, %v2365, 0
      %v2373 = vsel %vm1996, %v2366, 0
      %v2376 = vsel %vm1996, %v2367, 0
      %v2379 = vsel %vm1996, %v2368, 0
      %v2382 = vsel %vm2009, %v2348, 0
      %2384 = vmatprep.subr.bf16.mxu0 0
      %2385 = vmatpush1.bf16.msra.mxu0 %v2382
      %2386 = vmatprep.subr.bf16.mxu0 0
      %2387 = vmatpush1.bf16.msra.mxu0 0
      %2388 = vmatprep.subr.bf16.mxu0 0
      %2389 = vmatpush1.bf16.msra.mxu0 0
      %2390 = vmatprep.subr.bf16.mxu0 0
      %2391 = vmatpush1.bf16.msra.mxu0 0
      %2392 = vmatprep.subr.bf16.mxu0 0
      %2393 = vmatpush1.bf16.msra.mxu0 0
      %2394 = vmatprep.subr.bf16.mxu0 0
      %2395 = vmatpush1.bf16.msra.mxu0 0
      %2396 = vmatprep.subr.bf16.mxu0 0
      %2397 = vmatpush1.bf16.msra.mxu0 0
      %2398 = vmatprep.subr.bf16.mxu0 0
      %2399 = vmatpush1.bf16.msra.mxu0 0
      %2400 = vmatprep.subr.bf16.mxu0 0
      %2401 = vmatpush1.bf16.msra.mxu0 0
      %2402 = vmatprep.subr.bf16.mxu0 0
      %2403 = vmatpush1.bf16.msra.mxu0 0
      %2404 = vmatprep.subr.bf16.mxu0 0
      %2405 = vmatpush1.bf16.msra.mxu0 0
      %2406 = vmatprep.subr.bf16.mxu0 0
      %2407 = vmatpush1.bf16.msra.mxu0 0
      %2408 = vmatprep.subr.bf16.mxu0 0
      %2409 = vmatpush1.bf16.msra.mxu0 0
      %2410 = vmatprep.subr.bf16.mxu0 0
      %2411 = vmatpush1.bf16.msra.mxu0 0
      %2412 = vmatprep.subr.bf16.mxu0 0
      %2413 = vmatpush1.bf16.msra.mxu0 0
      %2414 = vmatprep.subr.bf16.mxu0 0
      %2415 = vmatpush1.bf16.msra.mxu0 0
      %2416 = vmatprep.mubr.bf16.mxu0 0
      %2417 = vmatmul.mubr.bf16.gmra.mrb[0].mxu0 %v2370
      %v2418 = vpop.f32.mrb[0].mxu0
      %v2419 = vadd.f32 0.0, %v2418
      %v2420 = vpop.f32.mrb[0].mxu0
      %v2421 = vpop.f32.mrb[0].mxu0
      %v2422 = vadd.f32 0.0, %v2421
      %v2423 = vpop.f32.mrb[0].mxu0
      %2424 = vmatprep.mubr.bf16.mxu0 0
      %2425 = vmatmul.mubr.bf16.gmra.mrb[0].mxu0 %v2373
      %v2426 = vpop.f32.mrb[0].mxu0
      %v2427 = vadd.f32 0.0, %v2426
      %v2428 = vpop.f32.mrb[0].mxu0
      %v2429 = vpop.f32.mrb[0].mxu0
      %v2430 = vadd.f32 0.0, %v2429
      %v2431 = vpop.f32.mrb[0].mxu0
      %2432 = vmatprep.mubr.bf16.mxu0 0
      %2433 = vmatmul.mubr.bf16.gmra.mrb[0].mxu0 %v2376
      %v2434 = vpop.f32.mrb[0].mxu0
      %v2435 = vadd.f32 0.0, %v2434
      %v2436 = vpop.f32.mrb[0].mxu0
      %v2437 = vpop.f32.mrb[0].mxu0
      %v2438 = vadd.f32 0.0, %v2437
      %v2439 = vpop.f32.mrb[0].mxu0
      %2440 = vmatprep.mubr.bf16.mxu0 0
      %2441 = vmatmul.mubr.bf16.gmra.mrb[0].mxu0 %v2379
      %v2442 = vpop.f32.mrb[0].mxu0
      %v2443 = vadd.f32 0.0, %v2442
      %v2444 = vpop.f32.mrb[0].mxu0
      %v2445 = vpop.f32.mrb[0].mxu0
      %v2446 = vadd.f32 0.0, %v2445
      %v2447 = vpop.f32.mrb[0].mxu0
      %2448 = vdwg.mxu0
      %v2449 = vadd.f32 %v2331, %v2419
      %v2450 = vadd.f32 %v2332, %v2422
      %v2451 = vadd.f32 %v2333, %v2427
      %v2452 = vadd.f32 %v2334, %v2430
      %v2453 = vadd.f32 %v2335, %v2435
      %v2454 = vadd.f32 %v2336, %v2438
      %v2455 = vadd.f32 %v2337, %v2443
      %v2456 = vadd.f32 %v2338, %v2446
      %v2457 = vld [vmem:[%s1798] sm:$0xf]
      %v2458 = vld [vmem:[%s1798 + $0x4] sm:$0x1]
      %v2459 = vld [vmem:[%s1798 + $0x8] sm:$0xf]
      %v2460 = vld [vmem:[%s1798 + $0xc] sm:$0x1]
      %v2461 = vld [vmem:[%s1798 + $0x10] sm:$0xf]
      %v2462 = vld [vmem:[%s1798 + $0x14] sm:$0x1]
      %v2463 = vld [vmem:[%s1798 + $0x18] sm:$0xf]
      %v2464 = vld [vmem:[%s1798 + $0x1c] sm:$0x1]
      %v2465 = vld [vmem:[%s1798 + $0x20] sm:$0xf]
      %v2466 = vld [vmem:[%s1798 + $0x24] sm:$0x1]
      %v2467 = vld [vmem:[%s1798 + $0x28] sm:$0xf]
      %v2468 = vld [vmem:[%s1798 + $0x2c] sm:$0x1]
      %v2469 = vld [vmem:[%s1798 + $0x30] sm:$0xf]
      %v2470 = vld [vmem:[%s1798 + $0x34] sm:$0x1]
      %v2471 = vld [vmem:[%s1798 + $0x38] sm:$0xf]
      %v2472 = vld [vmem:[%s1798 + $0x3c] sm:$0x1]
      %v2474 = vshrl.u32 %v2457, 16
      %v2476 = vrot.slane %v2474, 4
      %v2477 = vshll.u32 %v2457, 16
      %v2479 = vrot.slane %v2477, 5
      %v2480 = vor.u32 %v2476, %v2479
      %v2481 = vrot.slane %v2480, 4
      %v2483 = vshll.u32 %v2458, 16
      %v2485 = vrot.slane %v2483, 5
      %v2486 = vsel %vm498, %v2481, %v2485
      %v2488 = vshrl.u32 %v2459, 16
      %v2490 = vrot.slane %v2488, 4
      %v2491 = vshll.u32 %v2459, 16
      %v2493 = vrot.slane %v2491, 5
      %v2494 = vor.u32 %v2490, %v2493
      %v2495 = vrot.slane %v2494, 4
      %v2497 = vshll.u32 %v2460, 16
      %v2499 = vrot.slane %v2497, 5
      %v2500 = vsel %vm498, %v2495, %v2499
      %v2502 = vshrl.u32 %v2461, 16
      %v2504 = vrot.slane %v2502, 4
      %v2505 = vshll.u32 %v2461, 16
      %v2507 = vrot.slane %v2505, 5
      %v2508 = vor.u32 %v2504, %v2507
      %v2509 = vrot.slane %v2508, 4
      %v2511 = vshll.u32 %v2462, 16
      %v2513 = vrot.slane %v2511, 5
      %v2514 = vsel %vm498, %v2509, %v2513
      %v2516 = vshrl.u32 %v2463, 16
      %v2518 = vrot.slane %v2516, 4
      %v2519 = vshll.u32 %v2463, 16
      %v2521 = vrot.slane %v2519, 5
      %v2522 = vor.u32 %v2518, %v2521
      %v2523 = vrot.slane %v2522, 4
      %v2525 = vshll.u32 %v2464, 16
      %v2527 = vrot.slane %v2525, 5
      %v2528 = vsel %vm498, %v2523, %v2527
      %v2530 = vshrl.u32 %v2465, 16
      %v2532 = vrot.slane %v2530, 4
      %v2533 = vshll.u32 %v2465, 16
      %v2535 = vrot.slane %v2533, 5
      %v2536 = vor.u32 %v2532, %v2535
      %v2537 = vrot.slane %v2536, 4
      %v2539 = vshll.u32 %v2466, 16
      %v2541 = vrot.slane %v2539, 5
      %v2542 = vsel %vm498, %v2537, %v2541
      %v2544 = vshrl.u32 %v2467, 16
      %v2546 = vrot.slane %v2544, 4
      %v2547 = vshll.u32 %v2467, 16
      %v2549 = vrot.slane %v2547, 5
      %v2550 = vor.u32 %v2546, %v2549
      %v2551 = vrot.slane %v2550, 4
      %v2553 = vshll.u32 %v2468, 16
      %v2555 = vrot.slane %v2553, 5
      %v2556 = vsel %vm498, %v2551, %v2555
      %v2558 = vshrl.u32 %v2469, 16
      %v2560 = vrot.slane %v2558, 4
      %v2561 = vshll.u32 %v2469, 16
      %v2563 = vrot.slane %v2561, 5
      %v2564 = vor.u32 %v2560, %v2563
      %v2565 = vrot.slane %v2564, 4
      %v2567 = vshll.u32 %v2470, 16
      %v2569 = vrot.slane %v2567, 5
      %v2570 = vsel %vm498, %v2565, %v2569
      %v2572 = vshrl.u32 %v2471, 16
      %v2574 = vrot.slane %v2572, 4
      %v2575 = vshll.u32 %v2471, 16
      %v2577 = vrot.slane %v2575, 5
      %v2578 = vor.u32 %v2574, %v2577
      %v2579 = vrot.slane %v2578, 4
      %v2581 = vshll.u32 %v2472, 16
      %v2583 = vrot.slane %v2581, 5
      %v2584 = vsel %vm498, %v2579, %v2583
      %s2585 = scalar_lea.vmem %s3, 16
      %v2586 = vld [vmem:[%s2585] sm:$0xf]
      %v2587 = vunpack.c.l.b16 %v2486
      %v2588 = vunpack.c.l.b16 %v2500
      %v2589 = vunpack.c.l.b16 %v2514
      %v2590 = vunpack.c.l.b16 %v2528
      %v2591 = vunpack.c.l.b16 %v2542
      %v2592 = vunpack.c.l.b16 %v2556
      %v2593 = vunpack.c.l.b16 %v2570
      %v2594 = vunpack.c.l.b16 %v2584
      %v2595 = vpack.c.b16 %v2588, %v2587
      %v2596 = vpack.c.b16 %v2590, %v2589
      %v2597 = vpack.c.b16 %v2592, %v2591
      %v2598 = vpack.c.b16 %v2594, %v2593
      %v2600 = vsel %vm1996, %v2595, 0
      %v2603 = vsel %vm1996, %v2596, 0
      %v2606 = vsel %vm1996, %v2597, 0
      %v2609 = vsel %vm1996, %v2598, 0
      %v2612 = vsel %vm2009, %v2586, 0
      %2614 = vmatprep.subr.bf16.mxu0 0
      %2615 = vmatpush1.bf16.msra.mxu0 %v2612
      %2616 = vmatprep.subr.bf16.mxu0 0
      %2617 = vmatpush1.bf16.msra.mxu0 0
      %2618 = vmatprep.subr.bf16.mxu0 0
      %2619 = vmatpush1.bf16.msra.mxu0 0
      %2620 = vmatprep.subr.bf16.mxu0 0
      %2621 = vmatpush1.bf16.msra.mxu0 0
      %2622 = vmatprep.subr.bf16.mxu0 0
      %2623 = vmatpush1.bf16.msra.mxu0 0
      %2624 = vmatprep.subr.bf16.mxu0 0
      %2625 = vmatpush1.bf16.msra.mxu0 0
      %2626 = vmatprep.subr.bf16.mxu0 0
      %2627 = vmatpush1.bf16.msra.mxu0 0
      %2628 = vmatprep.subr.bf16.mxu0 0
      %2629 = vmatpush1.bf16.msra.mxu0 0
      %2630 = vmatprep.subr.bf16.mxu0 0
      %2631 = vmatpush1.bf16.msra.mxu0 0
      %2632 = vmatprep.subr.bf16.mxu0 0
      %2633 = vmatpush1.bf16.msra.mxu0 0
      %2634 = vmatprep.subr.bf16.mxu0 0
      %2635 = vmatpush1.bf16.msra.mxu0 0
      %2636 = vmatprep.subr.bf16.mxu0 0
      %2637 = vmatpush1.bf16.msra.mxu0 0
      %2638 = vmatprep.subr.bf16.mxu0 0
      %2639 = vmatpush1.bf16.msra.mxu0 0
      %2640 = vmatprep.subr.bf16.mxu0 0
      %2641 = vmatpush1.bf16.msra.mxu0 0
      %2642 = vmatprep.subr.bf16.mxu0 0
      %2643 = vmatpush1.bf16.msra.mxu0 0
      %2644 = vmatprep.subr.bf16.mxu0 0
      %2645 = vmatpush1.bf16.msra.mxu0 0
      %2646 = vmatprep.mubr.bf16.mxu0 0
      %2647 = vmatmul.mubr.bf16.gmra.mrb[0].mxu0 %v2600
      %v2648 = vpop.f32.mrb[0].mxu0
      %v2649 = vadd.f32 0.0, %v2648
      %v2650 = vpop.f32.mrb[0].mxu0
      %v2651 = vpop.f32.mrb[0].mxu0
      %v2652 = vadd.f32 0.0, %v2651
      %v2653 = vpop.f32.mrb[0].mxu0
      %2654 = vmatprep.mubr.bf16.mxu0 0
      %2655 = vmatmul.mubr.bf16.gmra.mrb[0].mxu0 %v2603
      %v2656 = vpop.f32.mrb[0].mxu0
      %v2657 = vadd.f32 0.0, %v2656
      %v2658 = vpop.f32.mrb[0].mxu0
      %v2659 = vpop.f32.mrb[0].mxu0
      %v2660 = vadd.f32 0.0, %v2659
      %v2661 = vpop.f32.mrb[0].mxu0
      %2662 = vmatprep.mubr.bf16.mxu0 0
      %2663 = vmatmul.mubr.bf16.gmra.mrb[0].mxu0 %v2606
      %v2664 = vpop.f32.mrb[0].mxu0
      %v2665 = vadd.f32 0.0, %v2664
      %v2666 = vpop.f32.mrb[0].mxu0
      %v2667 = vpop.f32.mrb[0].mxu0
      %v2668 = vadd.f32 0.0, %v2667
      %v2669 = vpop.f32.mrb[0].mxu0
      %2670 = vmatprep.mubr.bf16.mxu0 0
      %2671 = vmatmul.mubr.bf16.gmra.mrb[0].mxu0 %v2609
      %v2672 = vpop.f32.mrb[0].mxu0
      %v2673 = vadd.f32 0.0, %v2672
      %v2674 = vpop.f32.mrb[0].mxu0
      %v2675 = vpop.f32.mrb[0].mxu0
      %v2676 = vadd.f32 0.0, %v2675
      %v2677 = vpop.f32.mrb[0].mxu0
      %2678 = vdwg.mxu0
      %v2679 = vadd.f32 %v2449, %v2649
      %v2680 = vadd.f32 %v2450, %v2652
      %v2681 = vadd.f32 %v2451, %v2657
      %v2682 = vadd.f32 %v2452, %v2660
      %v2683 = vadd.f32 %v2453, %v2665
      %v2684 = vadd.f32 %v2454, %v2668
      %v2685 = vadd.f32 %v2455, %v2673
      %v2686 = vadd.f32 %v2456, %v2676
      %v2687 = vld [vmem:[%s1798] sm:$0xe]
      %v2688 = vld [vmem:[%s1798 + $0x8] sm:$0xe]
      %v2689 = vld [vmem:[%s1798 + $0x10] sm:$0xe]
      %v2690 = vld [vmem:[%s1798 + $0x18] sm:$0xe]
      %v2691 = vld [vmem:[%s1798 + $0x20] sm:$0xe]
      %v2692 = vld [vmem:[%s1798 + $0x28] sm:$0xe]
      %v2693 = vld [vmem:[%s1798 + $0x30] sm:$0xe]
      %v2694 = vld [vmem:[%s1798 + $0x38] sm:$0xe]
      %v2711 = vrot.slane %v2687, 5
      %v2712 = vrot.slane %v2711, 4
      %v2713 = vrot.slane %v2458, 5
      %v2714 = vsel %vm2204, %v2712, %v2713
      %v2715 = vrot.slane %v2688, 5
      %v2716 = vrot.slane %v2715, 4
      %v2717 = vrot.slane %v2460, 5
      %v2718 = vsel %vm2204, %v2716, %v2717
      %v2719 = vrot.slane %v2689, 5
      %v2720 = vrot.slane %v2719, 4
      %v2721 = vrot.slane %v2462, 5
      %v2722 = vsel %vm2204, %v2720, %v2721
      %v2723 = vrot.slane %v2690, 5
      %v2724 = vrot.slane %v2723, 4
      %v2725 = vrot.slane %v2464, 5
      %v2726 = vsel %vm2204, %v2724, %v2725
      %v2727 = vrot.slane %v2691, 5
      %v2728 = vrot.slane %v2727, 4
      %v2729 = vrot.slane %v2466, 5
      %v2730 = vsel %vm2204, %v2728, %v2729
      %v2731 = vrot.slane %v2692, 5
      %v2732 = vrot.slane %v2731, 4
      %v2733 = vrot.slane %v2468, 5
      %v2734 = vsel %vm2204, %v2732, %v2733
      %v2735 = vrot.slane %v2693, 5
      %v2736 = vrot.slane %v2735, 4
      %v2737 = vrot.slane %v2470, 5
      %v2738 = vsel %vm2204, %v2736, %v2737
      %v2739 = vrot.slane %v2694, 5
      %v2740 = vrot.slane %v2739, 4
      %v2741 = vrot.slane %v2472, 5
      %v2742 = vsel %vm2204, %v2740, %v2741
      %s2743 = scalar_lea.vmem %s3, 20
      %v2744 = vld [vmem:[%s2743] sm:$0xf]
      %v2745 = vunpack.c.l.b16 %v2714
      %v2746 = vunpack.c.l.b16 %v2718
      %v2747 = vunpack.c.l.b16 %v2722
      %v2748 = vunpack.c.l.b16 %v2726
      %v2749 = vunpack.c.l.b16 %v2730
      %v2750 = vunpack.c.l.b16 %v2734
      %v2751 = vunpack.c.l.b16 %v2738
      %v2752 = vunpack.c.l.b16 %v2742
      %v2753 = vpack.c.b16 %v2746, %v2745
      %v2754 = vpack.c.b16 %v2748, %v2747
      %v2755 = vpack.c.b16 %v2750, %v2749
      %v2756 = vpack.c.b16 %v2752, %v2751
      %v2758 = vsel %vm1996, %v2753, 0
      %v2761 = vsel %vm1996, %v2754, 0
      %v2764 = vsel %vm1996, %v2755, 0
      %v2767 = vsel %vm1996, %v2756, 0
      %v2770 = vsel %vm2009, %v2744, 0
      %2772 = vmatprep.subr.bf16.mxu0 0
      %2773 = vmatpush1.bf16.msra.mxu0 %v2770
      %2774 = vmatprep.subr.bf16.mxu0 0
      %2775 = vmatpush1.bf16.msra.mxu0 0
      %2776 = vmatprep.subr.bf16.mxu0 0
      %2777 = vmatpush1.bf16.msra.mxu0 0
      %2778 = vmatprep.subr.bf16.mxu0 0
      %2779 = vmatpush1.bf16.msra.mxu0 0
      %2780 = vmatprep.subr.bf16.mxu0 0
      %2781 = vmatpush1.bf16.msra.mxu0 0
      %2782 = vmatprep.subr.bf16.mxu0 0
      %2783 = vmatpush1.bf16.msra.mxu0 0
      %2784 = vmatprep.subr.bf16.mxu0 0
      %2785 = vmatpush1.bf16.msra.mxu0 0
      %2786 = vmatprep.subr.bf16.mxu0 0
      %2787 = vmatpush1.bf16.msra.mxu0 0
      %2788 = vmatprep.subr.bf16.mxu0 0
      %2789 = vmatpush1.bf16.msra.mxu0 0
      %2790 = vmatprep.subr.bf16.mxu0 0
      %2791 = vmatpush1.bf16.msra.mxu0 0
      %2792 = vmatprep.subr.bf16.mxu0 0
      %2793 = vmatpush1.bf16.msra.mxu0 0
      %2794 = vmatprep.subr.bf16.mxu0 0
      %2795 = vmatpush1.bf16.msra.mxu0 0
      %2796 = vmatprep.subr.bf16.mxu0 0
      %2797 = vmatpush1.bf16.msra.mxu0 0
      %2798 = vmatprep.subr.bf16.mxu0 0
      %2799 = vmatpush1.bf16.msra.mxu0 0
      %2800 = vmatprep.subr.bf16.mxu0 0
      %2801 = vmatpush1.bf16.msra.mxu0 0
      %2802 = vmatprep.subr.bf16.mxu0 0
      %2803 = vmatpush1.bf16.msra.mxu0 0
      %2804 = vmatprep.mubr.bf16.mxu0 0
      %2805 = vmatmul.mubr.bf16.gmra.mrb[0].mxu0 %v2758
      %v2806 = vpop.f32.mrb[0].mxu0
      %v2807 = vadd.f32 0.0, %v2806
      %v2808 = vpop.f32.mrb[0].mxu0
      %v2809 = vpop.f32.mrb[0].mxu0
      %v2810 = vadd.f32 0.0, %v2809
      %v2811 = vpop.f32.mrb[0].mxu0
      %2812 = vmatprep.mubr.bf16.mxu0 0
      %2813 = vmatmul.mubr.bf16.gmra.mrb[0].mxu0 %v2761
      %v2814 = vpop.f32.mrb[0].mxu0
      %v2815 = vadd.f32 0.0, %v2814
      %v2816 = vpop.f32.mrb[0].mxu0
      %v2817 = vpop.f32.mrb[0].mxu0
      %v2818 = vadd.f32 0.0, %v2817
      %v2819 = vpop.f32.mrb[0].mxu0
      %2820 = vmatprep.mubr.bf16.mxu0 0
      %2821 = vmatmul.mubr.bf16.gmra.mrb[0].mxu0 %v2764
      %v2822 = vpop.f32.mrb[0].mxu0
      %v2823 = vadd.f32 0.0, %v2822
      %v2824 = vpop.f32.mrb[0].mxu0
      %v2825 = vpop.f32.mrb[0].mxu0
      %v2826 = vadd.f32 0.0, %v2825
      %v2827 = vpop.f32.mrb[0].mxu0
      %2828 = vmatprep.mubr.bf16.mxu0 0
      %2829 = vmatmul.mubr.bf16.gmra.mrb[0].mxu0 %v2767
      %v2830 = vpop.f32.mrb[0].mxu0
      %v2831 = vadd.f32 0.0, %v2830
      %v2832 = vpop.f32.mrb[0].mxu0
      %v2833 = vpop.f32.mrb[0].mxu0
      %v2834 = vadd.f32 0.0, %v2833
      %v2835 = vpop.f32.mrb[0].mxu0
      %2836 = vdwg.mxu0
      %v2837 = vadd.f32 %v2679, %v2807
      %v2838 = vadd.f32 %v2680, %v2810
      %v2839 = vadd.f32 %v2681, %v2815
      %v2840 = vadd.f32 %v2682, %v2818
      %v2841 = vadd.f32 %v2683, %v2823
      %v2842 = vadd.f32 %v2684, %v2826
      %v2843 = vadd.f32 %v2685, %v2831
      %v2844 = vadd.f32 %v2686, %v2834
      %s2845 = scalar_lea.vmem [#allocation2], 16
      %v2846 = vld [vmem:[%s2845] sm:$0xf]
      %v2847 = vld [vmem:[%s2845 + $0x8] sm:$0xf]
      %v2848 = vld [vmem:[%s2845 + $0x10] sm:$0xf]
      %v2849 = vld [vmem:[%s2845 + $0x18] sm:$0xf]
      %v2850 = vld [vmem:[%s2845 + $0x20] sm:$0xf]
      %v2851 = vld [vmem:[%s2845 + $0x28] sm:$0xf]
      %v2852 = vld [vmem:[%s2845 + $0x30] sm:$0xf]
      %v2853 = vld [vmem:[%s2845 + $0x38] sm:$0xf]
      %s2854 = scalar_lea.vmem %s3, 24
      %v2855 = vld [vmem:[%s2854] sm:$0xf]
      %v2864 = vunpack.c.l.b16 %v2846
      %v2865 = vunpack.c.l.b16 %v2847
      %v2866 = vunpack.c.l.b16 %v2848
      %v2867 = vunpack.c.l.b16 %v2849
      %v2868 = vunpack.c.l.b16 %v2850
      %v2869 = vunpack.c.l.b16 %v2851
      %v2870 = vunpack.c.l.b16 %v2852
      %v2871 = vunpack.c.l.b16 %v2853
      %v2872 = vpack.c.b16 %v2865, %v2864
      %v2873 = vpack.c.b16 %v2867, %v2866
      %v2874 = vpack.c.b16 %v2869, %v2868
      %v2875 = vpack.c.b16 %v2871, %v2870
      %v2877 = vsel %vm1996, %v2872, 0
      %v2880 = vsel %vm1996, %v2873, 0
      %v2883 = vsel %vm1996, %v2874, 0
      %v2886 = vsel %vm1996, %v2875, 0
      %v2889 = vsel %vm2009, %v2855, 0
      %2891 = vmatprep.subr.bf16.mxu0 0
      %2892 = vmatpush1.bf16.msra.mxu0 %v2889
      %2893 = vmatprep.subr.bf16.mxu0 0
      %2894 = vmatpush1.bf16.msra.mxu0 0
      %2895 = vmatprep.subr.bf16.mxu0 0
      %2896 = vmatpush1.bf16.msra.mxu0 0
      %2897 = vmatprep.subr.bf16.mxu0 0
      %2898 = vmatpush1.bf16.msra.mxu0 0
      %2899 = vmatprep.subr.bf16.mxu0 0
      %2900 = vmatpush1.bf16.msra.mxu0 0
      %2901 = vmatprep.subr.bf16.mxu0 0
      %2902 = vmatpush1.bf16.msra.mxu0 0
      %2903 = vmatprep.subr.bf16.mxu0 0
      %2904 = vmatpush1.bf16.msra.mxu0 0
      %2905 = vmatprep.subr.bf16.mxu0 0
      %2906 = vmatpush1.bf16.msra.mxu0 0
      %2907 = vmatprep.subr.bf16.mxu0 0
      %2908 = vmatpush1.bf16.msra.mxu0 0
      %2909 = vmatprep.subr.bf16.mxu0 0
      %2910 = vmatpush1.bf16.msra.mxu0 0
      %2911 = vmatprep.subr.bf16.mxu0 0
      %2912 = vmatpush1.bf16.msra.mxu0 0
      %2913 = vmatprep.subr.bf16.mxu0 0
      %2914 = vmatpush1.bf16.msra.mxu0 0
      %2915 = vmatprep.subr.bf16.mxu0 0
      %2916 = vmatpush1.bf16.msra.mxu0 0
      %2917 = vmatprep.subr.bf16.mxu0 0
      %2918 = vmatpush1.bf16.msra.mxu0 0
      %2919 = vmatprep.subr.bf16.mxu0 0
      %2920 = vmatpush1.bf16.msra.mxu0 0
      %2921 = vmatprep.subr.bf16.mxu0 0
      %2922 = vmatpush1.bf16.msra.mxu0 0
      %2923 = vmatprep.mubr.bf16.mxu0 0
      %2924 = vmatmul.mubr.bf16.gmra.mrb[0].mxu0 %v2877
      %v2925 = vpop.f32.mrb[0].mxu0
      %v2926 = vadd.f32 0.0, %v2925
      %v2927 = vpop.f32.mrb[0].mxu0
      %v2928 = vpop.f32.mrb[0].mxu0
      %v2929 = vadd.f32 0.0, %v2928
      %v2930 = vpop.f32.mrb[0].mxu0
      %2931 = vmatprep.mubr.bf16.mxu0 0
      %2932 = vmatmul.mubr.bf16.gmra.mrb[0].mxu0 %v2880
      %v2933 = vpop.f32.mrb[0].mxu0
      %v2934 = vadd.f32 0.0, %v2933
      %v2935 = vpop.f32.mrb[0].mxu0
      %v2936 = vpop.f32.mrb[0].mxu0
      %v2937 = vadd.f32 0.0, %v2936
      %v2938 = vpop.f32.mrb[0].mxu0
      %2939 = vmatprep.mubr.bf16.mxu0 0
      %2940 = vmatmul.mubr.bf16.gmra.mrb[0].mxu0 %v2883
      %v2941 = vpop.f32.mrb[0].mxu0
      %v2942 = vadd.f32 0.0, %v2941
      %v2943 = vpop.f32.mrb[0].mxu0
      %v2944 = vpop.f32.mrb[0].mxu0
      %v2945 = vadd.f32 0.0, %v2944
      %v2946 = vpop.f32.mrb[0].mxu0
      %2947 = vmatprep.mubr.bf16.mxu0 0
      %2948 = vmatmul.mubr.bf16.gmra.mrb[0].mxu0 %v2886
      %v2949 = vpop.f32.mrb[0].mxu0
      %v2950 = vadd.f32 0.0, %v2949
      %v2951 = vpop.f32.mrb[0].mxu0
      %v2952 = vpop.f32.mrb[0].mxu0
      %v2953 = vadd.f32 0.0, %v2952
      %v2954 = vpop.f32.mrb[0].mxu0
      %2955 = vdwg.mxu0
      %v2956 = vadd.f32 %v2837, %v2926
      %v2957 = vadd.f32 %v2838, %v2929
      %v2958 = vadd.f32 %v2839, %v2934
      %v2959 = vadd.f32 %v2840, %v2937
      %v2960 = vadd.f32 %v2841, %v2942
      %v2961 = vadd.f32 %v2842, %v2945
      %v2962 = vadd.f32 %v2843, %v2950
      %v2963 = vadd.f32 %v2844, %v2953
      %v2964 = vld [vmem:[%s2845] sm:$0xf]
      %v2965 = vld [vmem:[%s2845 + $0x4] sm:$0x1]
      %v2966 = vld [vmem:[%s2845 + $0x8] sm:$0xf]
      %v2967 = vld [vmem:[%s2845 + $0xc] sm:$0x1]
      %v2968 = vld [vmem:[%s2845 + $0x10] sm:$0xf]
      %v2969 = vld [vmem:[%s2845 + $0x14] sm:$0x1]
      %v2970 = vld [vmem:[%s2845 + $0x18] sm:$0xf]
      %v2971 = vld [vmem:[%s2845 + $0x1c] sm:$0x1]
      %v2972 = vld [vmem:[%s2845 + $0x20] sm:$0xf]
      %v2973 = vld [vmem:[%s2845 + $0x24] sm:$0x1]
      %v2974 = vld [vmem:[%s2845 + $0x28] sm:$0xf]
      %v2975 = vld [vmem:[%s2845 + $0x2c] sm:$0x1]
      %v2976 = vld [vmem:[%s2845 + $0x30] sm:$0xf]
      %v2977 = vld [vmem:[%s2845 + $0x34] sm:$0x1]
      %v2978 = vld [vmem:[%s2845 + $0x38] sm:$0xf]
      %v2979 = vld [vmem:[%s2845 + $0x3c] sm:$0x1]
      %v2981 = vshrl.u32 %v2964, 16
      %v2983 = vrot.slane %v2981, 4
      %v2984 = vshll.u32 %v2964, 16
      %v2986 = vrot.slane %v2984, 5
      %v2987 = vor.u32 %v2983, %v2986
      %v2988 = vrot.slane %v2987, 4
      %v2990 = vshll.u32 %v2965, 16
      %v2992 = vrot.slane %v2990, 5
      %v2993 = vsel %vm498, %v2988, %v2992
      %v2995 = vshrl.u32 %v2966, 16
      %v2997 = vrot.slane %v2995, 4
      %v2998 = vshll.u32 %v2966, 16
      %v3000 = vrot.slane %v2998, 5
      %v3001 = vor.u32 %v2997, %v3000
      %v3002 = vrot.slane %v3001, 4
      %v3004 = vshll.u32 %v2967, 16
      %v3006 = vrot.slane %v3004, 5
      %v3007 = vsel %vm498, %v3002, %v3006
      %v3009 = vshrl.u32 %v2968, 16
      %v3011 = vrot.slane %v3009, 4
      %v3012 = vshll.u32 %v2968, 16
      %v3014 = vrot.slane %v3012, 5
      %v3015 = vor.u32 %v3011, %v3014
      %v3016 = vrot.slane %v3015, 4
      %v3018 = vshll.u32 %v2969, 16
      %v3020 = vrot.slane %v3018, 5
      %v3021 = vsel %vm498, %v3016, %v3020
      %v3023 = vshrl.u32 %v2970, 16
      %v3025 = vrot.slane %v3023, 4
      %v3026 = vshll.u32 %v2970, 16
      %v3028 = vrot.slane %v3026, 5
      %v3029 = vor.u32 %v3025, %v3028
      %v3030 = vrot.slane %v3029, 4
      %v3032 = vshll.u32 %v2971, 16
      %v3034 = vrot.slane %v3032, 5
      %v3035 = vsel %vm498, %v3030, %v3034
      %v3037 = vshrl.u32 %v2972, 16
      %v3039 = vrot.slane %v3037, 4
      %v3040 = vshll.u32 %v2972, 16
      %v3042 = vrot.slane %v3040, 5
      %v3043 = vor.u32 %v3039, %v3042
      %v3044 = vrot.slane %v3043, 4
      %v3046 = vshll.u32 %v2973, 16
      %v3048 = vrot.slane %v3046, 5
      %v3049 = vsel %vm498, %v3044, %v3048
      %v3051 = vshrl.u32 %v2974, 16
      %v3053 = vrot.slane %v3051, 4
      %v3054 = vshll.u32 %v2974, 16
      %v3056 = vrot.slane %v3054, 5
      %v3057 = vor.u32 %v3053, %v3056
      %v3058 = vrot.slane %v3057, 4
      %v3060 = vshll.u32 %v2975, 16
      %v3062 = vrot.slane %v3060, 5
      %v3063 = vsel %vm498, %v3058, %v3062
      %v3065 = vshrl.u32 %v2976, 16
      %v3067 = vrot.slane %v3065, 4
      %v3068 = vshll.u32 %v2976, 16
      %v3070 = vrot.slane %v3068, 5
      %v3071 = vor.u32 %v3067, %v3070
      %v3072 = vrot.slane %v3071, 4
      %v3074 = vshll.u32 %v2977, 16
      %v3076 = vrot.slane %v3074, 5
      %v3077 = vsel %vm498, %v3072, %v3076
      %v3079 = vshrl.u32 %v2978, 16
      %v3081 = vrot.slane %v3079, 4
      %v3082 = vshll.u32 %v2978, 16
      %v3084 = vrot.slane %v3082, 5
      %v3085 = vor.u32 %v3081, %v3084
      %v3086 = vrot.slane %v3085, 4
      %v3088 = vshll.u32 %v2979, 16
      %v3090 = vrot.slane %v3088, 5
      %v3091 = vsel %vm498, %v3086, %v3090
      %s3092 = scalar_lea.vmem %s3, 28
      %v3093 = vld [vmem:[%s3092] sm:$0xf]
      %v3094 = vunpack.c.l.b16 %v2993
      %v3095 = vunpack.c.l.b16 %v3007
      %v3096 = vunpack.c.l.b16 %v3021
      %v3097 = vunpack.c.l.b16 %v3035
      %v3098 = vunpack.c.l.b16 %v3049
      %v3099 = vunpack.c.l.b16 %v3063
      %v3100 = vunpack.c.l.b16 %v3077
      %v3101 = vunpack.c.l.b16 %v3091
      %v3102 = vpack.c.b16 %v3095, %v3094
      %v3103 = vpack.c.b16 %v3097, %v3096
      %v3104 = vpack.c.b16 %v3099, %v3098
      %v3105 = vpack.c.b16 %v3101, %v3100
      %v3107 = vsel %vm1996, %v3102, 0
      %v3110 = vsel %vm1996, %v3103, 0
      %v3113 = vsel %vm1996, %v3104, 0
      %v3116 = vsel %vm1996, %v3105, 0
      %v3119 = vsel %vm2009, %v3093, 0
      %3121 = vmatprep.subr.bf16.mxu0 0
      %3122 = vmatpush1.bf16.msra.mxu0 %v3119
      %3123 = vmatprep.subr.bf16.mxu0 0
      %3124 = vmatpush1.bf16.msra.mxu0 0
      %3125 = vmatprep.subr.bf16.mxu0 0
      %3126 = vmatpush1.bf16.msra.mxu0 0
      %3127 = vmatprep.subr.bf16.mxu0 0
      %3128 = vmatpush1.bf16.msra.mxu0 0
      %3129 = vmatprep.subr.bf16.mxu0 0
      %3130 = vmatpush1.bf16.msra.mxu0 0
      %3131 = vmatprep.subr.bf16.mxu0 0
      %3132 = vmatpush1.bf16.msra.mxu0 0
      %3133 = vmatprep.subr.bf16.mxu0 0
      %3134 = vmatpush1.bf16.msra.mxu0 0
      %3135 = vmatprep.subr.bf16.mxu0 0
      %3136 = vmatpush1.bf16.msra.mxu0 0
      %3137 = vmatprep.subr.bf16.mxu0 0
      %3138 = vmatpush1.bf16.msra.mxu0 0
      %3139 = vmatprep.subr.bf16.mxu0 0
      %3140 = vmatpush1.bf16.msra.mxu0 0
      %3141 = vmatprep.subr.bf16.mxu0 0
      %3142 = vmatpush1.bf16.msra.mxu0 0
      %3143 = vmatprep.subr.bf16.mxu0 0
      %3144 = vmatpush1.bf16.msra.mxu0 0
      %3145 = vmatprep.subr.bf16.mxu0 0
      %3146 = vmatpush1.bf16.msra.mxu0 0
      %3147 = vmatprep.subr.bf16.mxu0 0
      %3148 = vmatpush1.bf16.msra.mxu0 0
      %3149 = vmatprep.subr.bf16.mxu0 0
      %3150 = vmatpush1.bf16.msra.mxu0 0
      %3151 = vmatprep.subr.bf16.mxu0 0
      %3152 = vmatpush1.bf16.msra.mxu0 0
      %3153 = vmatprep.mubr.bf16.mxu0 0
      %3154 = vmatmul.mubr.bf16.gmra.mrb[0].mxu0 %v3107
      %v3155 = vpop.f32.mrb[0].mxu0
      %v3156 = vadd.f32 0.0, %v3155
      %v3157 = vpop.f32.mrb[0].mxu0
      %v3158 = vpop.f32.mrb[0].mxu0
      %v3159 = vadd.f32 0.0, %v3158
      %v3160 = vpop.f32.mrb[0].mxu0
      %3161 = vmatprep.mubr.bf16.mxu0 0
      %3162 = vmatmul.mubr.bf16.gmra.mrb[0].mxu0 %v3110
      %v3163 = vpop.f32.mrb[0].mxu0
      %v3164 = vadd.f32 0.0, %v3163
      %v3165 = vpop.f32.mrb[0].mxu0
      %v3166 = vpop.f32.mrb[0].mxu0
      %v3167 = vadd.f32 0.0, %v3166
      %v3168 = vpop.f32.mrb[0].mxu0
      %3169 = vmatprep.mubr.bf16.mxu0 0
      %3170 = vmatmul.mubr.bf16.gmra.mrb[0].mxu0 %v3113
      %v3171 = vpop.f32.mrb[0].mxu0
      %v3172 = vadd.f32 0.0, %v3171
      %v3173 = vpop.f32.mrb[0].mxu0
      %v3174 = vpop.f32.mrb[0].mxu0
      %v3175 = vadd.f32 0.0, %v3174
      %v3176 = vpop.f32.mrb[0].mxu0
      %3177 = vmatprep.mubr.bf16.mxu0 0
      %3178 = vmatmul.mubr.bf16.gmra.mrb[0].mxu0 %v3116
      %v3179 = vpop.f32.mrb[0].mxu0
      %v3180 = vadd.f32 0.0, %v3179
      %v3181 = vpop.f32.mrb[0].mxu0
      %v3182 = vpop.f32.mrb[0].mxu0
      %v3183 = vadd.f32 0.0, %v3182
      %v3184 = vpop.f32.mrb[0].mxu0
      %3185 = vdwg.mxu0
      %v3186 = vadd.f32 %v2956, %v3156
      %v3187 = vadd.f32 %v2957, %v3159
      %v3188 = vadd.f32 %v2958, %v3164
      %v3189 = vadd.f32 %v2959, %v3167
      %v3190 = vadd.f32 %v2960, %v3172
      %v3191 = vadd.f32 %v2961, %v3175
      %v3192 = vadd.f32 %v2962, %v3180
      %v3193 = vadd.f32 %v2963, %v3183
      %v3194 = vld [vmem:[%s2845] sm:$0xe]
      %v3195 = vld [vmem:[%s2845 + $0x8] sm:$0xe]
      %v3196 = vld [vmem:[%s2845 + $0x10] sm:$0xe]
      %v3197 = vld [vmem:[%s2845 + $0x18] sm:$0xe]
      %v3198 = vld [vmem:[%s2845 + $0x20] sm:$0xe]
      %v3199 = vld [vmem:[%s2845 + $0x28] sm:$0xe]
      %v3200 = vld [vmem:[%s2845 + $0x30] sm:$0xe]
      %v3201 = vld [vmem:[%s2845 + $0x38] sm:$0xe]
      %v3218 = vrot.slane %v3194, 5
      %v3219 = vrot.slane %v3218, 4
      %v3220 = vrot.slane %v2965, 5
      %v3221 = vsel %vm2204, %v3219, %v3220
      %v3222 = vrot.slane %v3195, 5
      %v3223 = vrot.slane %v3222, 4
      %v3224 = vrot.slane %v2967, 5
      %v3225 = vsel %vm2204, %v3223, %v3224
      %v3226 = vrot.slane %v3196, 5
      %v3227 = vrot.slane %v3226, 4
      %v3228 = vrot.slane %v2969, 5
      %v3229 = vsel %vm2204, %v3227, %v3228
      %v3230 = vrot.slane %v3197, 5
      %v3231 = vrot.slane %v3230, 4
      %v3232 = vrot.slane %v2971, 5
      %v3233 = vsel %vm2204, %v3231, %v3232
      %v3234 = vrot.slane %v3198, 5
      %v3235 = vrot.slane %v3234, 4
      %v3236 = vrot.slane %v2973, 5
      %v3237 = vsel %vm2204, %v3235, %v3236
      %v3238 = vrot.slane %v3199, 5
      %v3239 = vrot.slane %v3238, 4
      %v3240 = vrot.slane %v2975, 5
      %v3241 = vsel %vm2204, %v3239, %v3240
      %v3242 = vrot.slane %v3200, 5
      %v3243 = vrot.slane %v3242, 4
      %v3244 = vrot.slane %v2977, 5
      %v3245 = vsel %vm2204, %v3243, %v3244
      %v3246 = vrot.slane %v3201, 5
      %v3247 = vrot.slane %v3246, 4
      %v3248 = vrot.slane %v2979, 5
      %v3249 = vsel %vm2204, %v3247, %v3248
      %s3250 = scalar_lea.vmem %s3, 32
      %v3251 = vld [vmem:[%s3250] sm:$0xf]
      %v3252 = vunpack.c.l.b16 %v3221
      %v3253 = vunpack.c.l.b16 %v3225
      %v3254 = vunpack.c.l.b16 %v3229
      %v3255 = vunpack.c.l.b16 %v3233
      %v3256 = vunpack.c.l.b16 %v3237
      %v3257 = vunpack.c.l.b16 %v3241
      %v3258 = vunpack.c.l.b16 %v3245
      %v3259 = vunpack.c.l.b16 %v3249
      %v3260 = vpack.c.b16 %v3253, %v3252
      %v3261 = vpack.c.b16 %v3255, %v3254
      %v3262 = vpack.c.b16 %v3257, %v3256
      %v3263 = vpack.c.b16 %v3259, %v3258
      %v3265 = vsel %vm1996, %v3260, 0
      %v3268 = vsel %vm1996, %v3261, 0
      %v3271 = vsel %vm1996, %v3262, 0
      %v3274 = vsel %vm1996, %v3263, 0
      %v3277 = vsel %vm2009, %v3251, 0
      %3279 = vmatprep.subr.bf16.mxu0 0
      %3280 = vmatpush1.bf16.msra.mxu0 %v3277
      %3281 = vmatprep.subr.bf16.mxu0 0
      %3282 = vmatpush1.bf16.msra.mxu0 0
      %3283 = vmatprep.subr.bf16.mxu0 0
      %3284 = vmatpush1.bf16.msra.mxu0 0
      %3285 = vmatprep.subr.bf16.mxu0 0
      %3286 = vmatpush1.bf16.msra.mxu0 0
      %3287 = vmatprep.subr.bf16.mxu0 0
      %3288 = vmatpush1.bf16.msra.mxu0 0
      %3289 = vmatprep.subr.bf16.mxu0 0
      %3290 = vmatpush1.bf16.msra.mxu0 0
      %3291 = vmatprep.subr.bf16.mxu0 0
      %3292 = vmatpush1.bf16.msra.mxu0 0
      %3293 = vmatprep.subr.bf16.mxu0 0
      %3294 = vmatpush1.bf16.msra.mxu0 0
      %3295 = vmatprep.subr.bf16.mxu0 0
      %3296 = vmatpush1.bf16.msra.mxu0 0
      %3297 = vmatprep.subr.bf16.mxu0 0
      %3298 = vmatpush1.bf16.msra.mxu0 0
      %3299 = vmatprep.subr.bf16.mxu0 0
      %3300 = vmatpush1.bf16.msra.mxu0 0
      %3301 = vmatprep.subr.bf16.mxu0 0
      %3302 = vmatpush1.bf16.msra.mxu0 0
      %3303 = vmatprep.subr.bf16.mxu0 0
      %3304 = vmatpush1.bf16.msra.mxu0 0
      %3305 = vmatprep.subr.bf16.mxu0 0
      %3306 = vmatpush1.bf16.msra.mxu0 0
      %3307 = vmatprep.subr.bf16.mxu0 0
      %3308 = vmatpush1.bf16.msra.mxu0 0
      %3309 = vmatprep.subr.bf16.mxu0 0
      %3310 = vmatpush1.bf16.msra.mxu0 0
      %3311 = vmatprep.mubr.bf16.mxu0 0
      %3312 = vmatmul.mubr.bf16.gmra.mrb[0].mxu0 %v3265
      %v3313 = vpop.f32.mrb[0].mxu0
      %v3314 = vadd.f32 0.0, %v3313
      %v3315 = vpop.f32.mrb[0].mxu0
      %v3316 = vpop.f32.mrb[0].mxu0
      %v3317 = vadd.f32 0.0, %v3316
      %v3318 = vpop.f32.mrb[0].mxu0
      %3319 = vmatprep.mubr.bf16.mxu0 0
      %3320 = vmatmul.mubr.bf16.gmra.mrb[0].mxu0 %v3268
      %v3321 = vpop.f32.mrb[0].mxu0
      %v3322 = vadd.f32 0.0, %v3321
      %v3323 = vpop.f32.mrb[0].mxu0
      %v3324 = vpop.f32.mrb[0].mxu0
      %v3325 = vadd.f32 0.0, %v3324
      %v3326 = vpop.f32.mrb[0].mxu0
      %3327 = vmatprep.mubr.bf16.mxu0 0
      %3328 = vmatmul.mubr.bf16.gmra.mrb[0].mxu0 %v3271
      %v3329 = vpop.f32.mrb[0].mxu0
      %v3330 = vadd.f32 0.0, %v3329
      %v3331 = vpop.f32.mrb[0].mxu0
      %v3332 = vpop.f32.mrb[0].mxu0
      %v3333 = vadd.f32 0.0, %v3332
      %v3334 = vpop.f32.mrb[0].mxu0
      %3335 = vmatprep.mubr.bf16.mxu0 0
      %3336 = vmatmul.mubr.bf16.gmra.mrb[0].mxu0 %v3274
      %v3337 = vpop.f32.mrb[0].mxu0
      %v3338 = vadd.f32 0.0, %v3337
      %v3339 = vpop.f32.mrb[0].mxu0
      %v3340 = vpop.f32.mrb[0].mxu0
      %v3341 = vadd.f32 0.0, %v3340
      %v3342 = vpop.f32.mrb[0].mxu0
      %3343 = vdwg.mxu0
      %v3344 = vadd.f32 %v3186, %v3314
      %v3345 = vadd.f32 %v3187, %v3317
      %v3346 = vadd.f32 %v3188, %v3322
      %v3347 = vadd.f32 %v3189, %v3325
      %v3348 = vadd.f32 %v3190, %v3330
      %v3349 = vadd.f32 %v3191, %v3333
      %v3350 = vadd.f32 %v3192, %v3338
      %v3351 = vadd.f32 %v3193, %v3341
      %v3352 = vld [vmem:[%s832] sm:$0xf]
      %v3353 = vld [vmem:[%s832 + $0x8] sm:$0xf]
      %v3354 = vld [vmem:[%s832 + $0x10] sm:$0xf]
      %v3355 = vld [vmem:[%s832 + $0x18] sm:$0xf]
      %v3356 = vld [vmem:[%s832 + $0x20] sm:$0xf]
      %v3357 = vld [vmem:[%s832 + $0x28] sm:$0xf]
      %v3358 = vld [vmem:[%s832 + $0x30] sm:$0xf]
      %v3359 = vld [vmem:[%s832 + $0x38] sm:$0xf]
      %v3360 = vld [vmem:[%s5] sm:$0x3]
      %v3369 = vunpack.c.l.b16 %v3352
      %v3370 = vunpack.c.l.b16 %v3353
      %v3371 = vunpack.c.l.b16 %v3354
      %v3372 = vunpack.c.l.b16 %v3355
      %v3373 = vunpack.c.l.b16 %v3356
      %v3374 = vunpack.c.l.b16 %v3357
      %v3375 = vunpack.c.l.b16 %v3358
      %v3376 = vunpack.c.l.b16 %v3359
      %v3377 = vpack.c.b16 %v3370, %v3369
      %v3378 = vpack.c.b16 %v3372, %v3371
      %v3379 = vpack.c.b16 %v3374, %v3373
      %v3380 = vpack.c.b16 %v3376, %v3375
      %v3382 = vsel %vm298, %v3377, 0
      %v3385 = vsel %vm298, %v3378, 0
      %v3388 = vsel %vm298, %v3379, 0
      %v3391 = vsel %vm298, %v3380, 0
      %v3394 = vsel %vm311, %v3360, 0
      %3396 = vmatprep.subr.bf16.mxu0 0
      %3397 = vmatpush1.bf16.msra.mxu0 %v3394
      %3398 = vmatprep.subr.bf16.mxu0 0
      %3399 = vmatpush1.bf16.msra.mxu0 0
      %3400 = vmatprep.subr.bf16.mxu0 0
      %3401 = vmatpush1.bf16.msra.mxu0 0
      %3402 = vmatprep.subr.bf16.mxu0 0
      %3403 = vmatpush1.bf16.msra.mxu0 0
      %3404 = vmatprep.subr.bf16.mxu0 0
      %3405 = vmatpush1.bf16.msra.mxu0 0
      %3406 = vmatprep.subr.bf16.mxu0 0
      %3407 = vmatpush1.bf16.msra.mxu0 0
      %3408 = vmatprep.subr.bf16.mxu0 0
      %3409 = vmatpush1.bf16.msra.mxu0 0
      %3410 = vmatprep.subr.bf16.mxu0 0
      %3411 = vmatpush1.bf16.msra.mxu0 0
      %3412 = vmatprep.subr.bf16.mxu0 0
      %3413 = vmatpush1.bf16.msra.mxu0 0
      %3414 = vmatprep.subr.bf16.mxu0 0
      %3415 = vmatpush1.bf16.msra.mxu0 0
      %3416 = vmatprep.subr.bf16.mxu0 0
      %3417 = vmatpush1.bf16.msra.mxu0 0
      %3418 = vmatprep.subr.bf16.mxu0 0
      %3419 = vmatpush1.bf16.msra.mxu0 0
      %3420 = vmatprep.subr.bf16.mxu0 0
      %3421 = vmatpush1.bf16.msra.mxu0 0
      %3422 = vmatprep.subr.bf16.mxu0 0
      %3423 = vmatpush1.bf16.msra.mxu0 0
      %3424 = vmatprep.subr.bf16.mxu0 0
      %3425 = vmatpush1.bf16.msra.mxu0 0
      %3426 = vmatprep.subr.bf16.mxu0 0
      %3427 = vmatpush1.bf16.msra.mxu0 0
      %3428 = vmatprep.mubr.bf16.mxu0 0
      %3429 = vmatmul.mubr.bf16.gmra.mrb[0].mxu0 %v3382
      %v3430 = vpop.f32.mrb[0].mxu0
      %v3431 = vadd.f32 0.0, %v3430
      %v3432 = vpop.f32.mrb[0].mxu0
      %v3433 = vpop.f32.mrb[0].mxu0
      %v3434 = vadd.f32 0.0, %v3433
      %v3435 = vpop.f32.mrb[0].mxu0
      %3436 = vmatprep.mubr.bf16.mxu0 0
      %3437 = vmatmul.mubr.bf16.gmra.mrb[0].mxu0 %v3385
      %v3438 = vpop.f32.mrb[0].mxu0
      %v3439 = vadd.f32 0.0, %v3438
      %v3440 = vpop.f32.mrb[0].mxu0
      %v3441 = vpop.f32.mrb[0].mxu0
      %v3442 = vadd.f32 0.0, %v3441
      %v3443 = vpop.f32.mrb[0].mxu0
      %3444 = vmatprep.mubr.bf16.mxu0 0
      %3445 = vmatmul.mubr.bf16.gmra.mrb[0].mxu0 %v3388
      %v3446 = vpop.f32.mrb[0].mxu0
      %v3447 = vadd.f32 0.0, %v3446
      %v3448 = vpop.f32.mrb[0].mxu0
      %v3449 = vpop.f32.mrb[0].mxu0
      %v3450 = vadd.f32 0.0, %v3449
      %v3451 = vpop.f32.mrb[0].mxu0
      %3452 = vmatprep.mubr.bf16.mxu0 0
      %3453 = vmatmul.mubr.bf16.gmra.mrb[0].mxu0 %v3391
      %v3454 = vpop.f32.mrb[0].mxu0
      %v3455 = vadd.f32 0.0, %v3454
      %v3456 = vpop.f32.mrb[0].mxu0
      %v3457 = vpop.f32.mrb[0].mxu0
      %v3458 = vadd.f32 0.0, %v3457
      %v3459 = vpop.f32.mrb[0].mxu0
      %3460 = vdwg.mxu0
      %v3461 = vadd.f32 %v3344, %v3431
      %v3462 = vadd.f32 %v3345, %v3434
      %v3463 = vadd.f32 %v3346, %v3439
      %v3464 = vadd.f32 %v3347, %v3442
      %v3465 = vadd.f32 %v3348, %v3447
      %v3466 = vadd.f32 %v3349, %v3450
      %v3467 = vadd.f32 %v3350, %v3455
      %v3468 = vadd.f32 %v3351, %v3458
      %v3469 = vld [vmem:[%s4] sm:$0x1]
      %v3471 = vlaneseq
      %v3472 = vshrl.u32 %v3471, 7
      %v3473 = vsub.s32 0, %v3472
      %v3474 = vrot.slane %v3469, %v3473
      %v3476 = vadd.f32 %v3461, %v3474
      %v3477 = vadd.f32 %v3462, %v3474
      %v3478 = vadd.f32 %v3463, %v3474
      %v3479 = vadd.f32 %v3464, %v3474
      %v3480 = vadd.f32 %v3465, %v3474
      %v3481 = vadd.f32 %v3466, %v3474
      %v3482 = vadd.f32 %v3467, %v3474
      %v3483 = vadd.f32 %v3468, %v3474
      %v3484 = vmax.f32 %v3476, 0.0
      %v3485 = vmax.f32 %v3477, 0.0
      %v3486 = vmax.f32 %v3478, 0.0
      %v3487 = vmax.f32 %v3479, 0.0
      %v3488 = vmax.f32 %v3480, 0.0
      %v3489 = vmax.f32 %v3481, 0.0
      %v3490 = vmax.f32 %v3482, 0.0
      %v3491 = vmax.f32 %v3483, 0.0
      %3492 = vst.msk [vmem:[%s256] sm:$0xff] %vm1996, %v3484
      %3493 = vst.msk [vmem:[%s256 + $0x8] sm:$0xff] %vm1996, %v3485
      %3494 = vst.msk [vmem:[%s256 + $0x10] sm:$0xff] %vm1996, %v3486
      %3495 = vst.msk [vmem:[%s256 + $0x18] sm:$0xff] %vm1996, %v3487
      %3496 = vst.msk [vmem:[%s256 + $0x20] sm:$0xff] %vm1996, %v3488
      %3497 = vst.msk [vmem:[%s256 + $0x28] sm:$0xff] %vm1996, %v3489
      %3498 = vst.msk [vmem:[%s256 + $0x30] sm:$0xff] %vm1996, %v3490
      %3499 = vst.msk [vmem:[%s256 + $0x38] sm:$0xff] %vm1996, %v3491
      %p3500 = scmp.lt.s32.totalorder %s17, 1
      %s3501 = scalar_select %p3500, %s17, 1
      %s3502 = smul.addr %s3501, 8
      %s3503 = smul.addr %s3502, 8
      %s3504 = scalar_lea.vmem %s6, %s3503
      // Predicated region
      $region45: #{basic_block_forward.1} parent=43 // pred_check
        %p3505 = pneg %p166
      $region46: #{basic_block_forward.1} parent=43 // pred_check_branch
        %3507 = sbr.rel (%p3505) target = $region48
      $region47: #{basic_block_forward.1} parent=43 // pred_region
        _
      $region48: #{basic_block_forward.1} parent=43 // pred_fallthru
        _
    $region44: #{basic_block_forward.1} parent=5 // pred_fallthru
      _
    %p3508 = scmp.le.s32.totalorder 2, %s12
    // Predicated region
    $region49: #{basic_block_forward.1} parent=5 // pred_check
      %p3509 = pneg %p3508
    $region50: #{basic_block_forward.1} parent=5 // pred_check_branch
      %3511 = sbr.rel (%p3509) target = $region52
    $region51: #{basic_block_forward.1} parent=5 // pred_region
      %s3512 = ssub.s32 %s12, 2
      // Predicated region
      $region53: #{basic_block_forward.1} parent=51 // pred_check
        %p3513 = pneg %p172
      $region54: #{basic_block_forward.1} parent=51 // pred_check_branch
        %3515 = sbr.rel (%p3513) target = $region56
      $region55: #{basic_block_forward.1} parent=51 // pred_region
        %p3516 = scmp.lt.s32.totalorder %s18, 1
        %s3517 = scalar_select %p3516, %s18, 1
        %s3518 = smul.addr %s3517, 8
        %s3519 = smul.addr %s3518, 8
        %s3520 = scalar_lea.vmem %s6, %s3519
      $region56: #{basic_block_forward.1} parent=51 // pred_fallthru
        _
    $region52: #{basic_block_forward.1} parent=5 // pred_fallthru
      _
  $region6: #{basic_block_forward.1} parent=0 // loop_footer
    %s16 = sadd.s32 1, %s12
  $region7: #{basic_block_forward.1} parent=0 // loop_footer_branch
    %11 = sbr.rel target = $region3
  $region8: #{basic_block_forward.1} parent=0 // loop_exit
    _

</llo_original>
